<compile_context>
chip_gen: v7x
topology: tpu7x:2x2x1
jax: 0.10.0
libtpu: 0.0.40
codegen_flags: <defaults>
</compile_context>

<pallas_src>
import functools

import numpy as np
import jax
import jax.numpy as jnp
from jax.experimental import pallas as pl
from jax.experimental.pallas import tpu as pltpu


# ----------------------------- Pallas kernels --------------------------------
def _upsample_conv_kernel(xm_ref, xh_ref, w_ref, b_ref, o_ref, xt_ref):
    """One (n, row-tile) step of conv3x3(nearest_upsample_2x(x)).

    xm_ref: (TH,   Wq+2, Ci)   main rows of the zero-padded input tile
    xh_ref: (2,    Wq+2, Ci)   2-row bottom halo (next rows of the same image)
    w_ref : (2, 2, 4*Ci, Co)   packed tap weights per output sub-grid (dy, dx)
    b_ref : (1, Co)            bias (f32)
    o_ref : (2, 2, TH, Wq, Co) output sub-grids: out[2y+dy, 2x+dx]
    xt_ref: (TH+2, Wq+2, Ci)   VMEM scratch: assembled (main + halo) tile
    """
    TH, Wp2, Ci = xm_ref.shape
    Wq = Wp2 - 2
    Co = o_ref.shape[-1]

    # Assemble the haloed tile once (cheap VMEM copy, hidden under the MXU work).
    xt_ref[pl.ds(0, TH), :, :] = xm_ref[...]
    xt_ref[pl.ds(TH, 2), :, :] = xh_ref[...]

    bias = b_ref[...]                                  # (1, Co) f32

    for dy in range(2):                                # static loops -> static slices
        for dx in range(2):
            # im2col over the 2x2 tap set of this sub-grid: K = 4*Ci.
            patch = jnp.concatenate(
                [xt_ref[pl.ds(dy + a, TH), pl.ds(dx + b, Wq), :]
                 for a in range(2) for b in range(2)],
                axis=-1,
            ).reshape(TH * Wq, 4 * Ci)                 # layout-preserving (Wq % 8 == 0)
            acc = jnp.dot(patch, w_ref[dy, dx],
                          preferred_element_type=jnp.float32)
            out = acc + bias
            o_ref[dy, dx] = out.reshape(TH, Wq, Co).astype(o_ref.dtype)


def _upsample_copy_kernel(x_ref, o_ref):
    """with_conv=False: nearest upsample = copy the row tile into all 4 sub-grids."""
    v = x_ref[...]
    for dy in range(2):
        for dx in range(2):
            o_ref[dy, dx] = v


# ----------------------------- tiling heuristics -------------------------------
def _vmem_estimate(TH, Wq, C, in_item, out_item, with_conv):
    """Generous per-step VMEM estimate (bytes) for the chosen row tile."""
    wp2 = Wq + 2
    e = 2 * TH * wp2 * C * in_item            # main input tile (double buffered)
    e += 2 * 2 * wp2 * C * in_item            # halo rows
    e += 2 * 4 * TH * Wq * C * out_item       # output slab (double buffered)
    if with_conv:
        e += (TH + 2) * wp2 * C * in_item     # assembled-tile scratch
        e += 2 * 16 * C * C * in_item         # resident packed weights
        e += 4 * TH * Wq * 4 * C * in_item    # im2col patch + shifted-window temps
        e += 2 * TH * Wq * C * 4              # f32 accumulator / output value
    return e


def _pick_tile_h(H, Wq, C, in_item, out_item, with_conv, budget, tile_h):
    if tile_h is not None:
        th = int(tile_h)
        assert th % 2 == 0 and th >= 2, "tile_h must be even"
        return th
    th = min(H + (H % 2), 64)                 # even, capped
    while th > 8 and _vmem_estimate(th, Wq, C, in_item, out_item, with_conv) > budget:
        th = max(8, th // 2)
        th += th % 2
    return th


# ----------------------------- wrapper ----------------------------------------
@functools.partial(jax.jit, static_argnames=("with_conv", "mxu_dtype", "tile_h"))
def upsample(x, weight=None, bias=None, *, with_conv=True,
             mxu_dtype=jnp.float32, tile_h=None):
    """Pallas TPU forward of the PyTorch Upsample module.

    x:      (N, C, H, W) float32 (NCHW, like PyTorch)
    weight: (C, C, 3, 3) torch OIHW conv weight (required if with_conv)
    bias:   (C,)
    mxu_dtype: MXU operand dtype (jnp.float32 exact; jnp.bfloat16 for v6e/v7x speed,
               f32 accumulation is kept either way).
    returns (N, C, 2H, 2W)
    """
    N, C, H, W = x.shape
    out_dtype = x.dtype
    Wq = ((W + 7) // 8) * 8                       # sublane-friendly row width
    x_nhwc = jnp.transpose(x, (0, 2, 3, 1))       # channels last -> lanes

    in_item = np.dtype(mxu_dtype).itemsize if with_conv else np.dtype(x.dtype).itemsize
    out_item = np.dtype(out_dtype).itemsize
    budget = 28 * 1024 * 1024
    TH = _pick_tile_h(H, Wq, C, in_item, out_item, with_conv, budget, tile_h)
    Hp = ((H + TH - 1) // TH) * TH                # pad H up to a multiple of TH
    nT = Hp // TH
    grid = (N, nT)                                # both axes independent -> parallel

    est = _vmem_estimate(TH, Wq, C, in_item, out_item, with_conv)
    vmem_limit = int(min(64 * 1024 * 1024, max(32 * 1024 * 1024, est * 1.25)))
    cparams = pltpu.CompilerParams(
        dimension_semantics=("parallel", "parallel"),
        vmem_limit_bytes=vmem_limit,
    )

    out_shape = jax.ShapeDtypeStruct((N, 2, 2, Hp, Wq, C), out_dtype)
    out_spec = pl.BlockSpec((None, 2, 2, TH, Wq, C),
                            lambda n, t: (n, 0, 0, t, 0, 0))

    if with_conv:
        assert weight is not None and bias is not None
        # zero pad: 1-row/col conv halo on top/left, bottom/right halo + alignment.
        xp = jnp.pad(x_nhwc, ((0, 0), (1, Hp + 1 - H), (1, Wq + 1 - W), (0, 0)))
        xp = xp.astype(mxu_dtype)

        # torch OIHW -> (kh, kw, Ci, Co); combine taps per output sub-grid:
        # S(0,a)={0},{1,2}; S(1,a)={0,1},{2} (and same for columns).
        w_khwc = jnp.transpose(weight, (2, 3, 1, 0)).astype(jnp.float32)
        sel = jnp.array([[[1, 0, 0], [0, 1, 1]],
                         [[1, 1, 0], [0, 0, 1]]], dtype=jnp.float32)
        w_eff = jnp.einsum("pak,qbl,klio->pqabio", sel, sel, w_khwc)
        # Pack the 4 (a,b) taps into the MXU contraction dim: (dy, dx, 4*Ci, Co),
        # K ordered as (a, b, ci) to match the kernel's concat order.
        w_pack = w_eff.reshape(2, 2, 4 * C, C).astype(mxu_dtype)
        b_vec = bias.reshape(1, C).astype(jnp.float32)

        out6 = pl.pallas_call(
            _upsample_conv_kernel,
            out_shape=out_shape,
            grid_spec=pltpu.PrefetchScalarGridSpec(
                num_scalar_prefetch=0,
                grid=grid,
                in_specs=[
                    # main TH rows of the padded image for this tile
                    pl.BlockSpec((None, TH, Wq + 2, C),
                                 lambda n, t: (n, t, 0, 0)),
                    # 2-row bottom halo (same array, 2-row blocks)
                    pl.BlockSpec((None, 2, Wq + 2, C),
                                 lambda n, t: (n, t * (TH // 2) + TH // 2, 0, 0)),
                    # resident packed weights / bias (constant index maps)
                    pl.BlockSpec((2, 2, 4 * C, C), lambda n, t: (0, 0, 0, 0)),
                    pl.BlockSpec((1, C), lambda n, t: (0, 0)),
                ],
                out_specs=out_spec,
                scratch_shapes=[pltpu.VMEM((TH + 2, Wq + 2, C), mxu_dtype)],
            ),
            compiler_params=cparams,
        )(xp, xp, w_pack, b_vec)
    else:
        xq = jnp.pad(x_nhwc, ((0, 0), (0, Hp - H), (0, Wq - W), (0, 0)))
        out6 = pl.pallas_call(
            _upsample_copy_kernel,
            out_shape=out_shape,
            grid_spec=pltpu.PrefetchScalarGridSpec(
                num_scalar_prefetch=0,
                grid=grid,
                in_specs=[pl.BlockSpec((None, TH, Wq, C),
                                       lambda n, t: (n, t, 0, 0))],
                out_specs=out_spec,
            ),
            compiler_params=cparams,
        )(xq)

    # (n, dy, dx, y, x, c) -> (n, c, y, dy, x, dx) -> NCHW, one fused pass.
    out6 = out6[:, :, :, :H, :W, :]
    out = jnp.transpose(out6, (0, 5, 3, 1, 4, 2)).reshape(N, C, 2 * H, 2 * W)
    return out


# ----------------------------- reference (pure JAX) ---------------------------
def upsample_ref(x, weight=None, bias=None, *, with_conv=True):
    N, C, H, W = x.shape
    up = jnp.repeat(jnp.repeat(x, 2, axis=2), 2, axis=3)
    if not with_conv:
        return up
    out = jax.lax.conv_general_dilated(
        up, weight, window_strides=(1, 1), padding=((1, 1), (1, 1)),
        dimension_numbers=("NCHW", "OIHW", "NCHW"),
        precision=jax.lax.Precision.HIGHEST,
        preferred_element_type=jnp.float32,
    )
    return out + bias.reshape(1, C, 1, 1)


if __name__ == "__main__":
    key = jax.random.PRNGKey(0)
    k1, k2, k3 = jax.random.split(key, 3)

    # --- test 1: conv path, f32, single row tile -------------------------------
    N, C, H, W = 2, 4, 16, 16
    x = jax.random.normal(k1, (N, C, H, W), dtype=jnp.float32)
    weight = 0.1 * jax.random.normal(k2, (C, C, 3, 3), dtype=jnp.float32)
    bias = 0.1 * jax.random.normal(k3, (C,), dtype=jnp.float32)

    out = jax.block_until_ready(upsample(x, weight, bias, with_conv=True))
    ref = upsample_ref(x, weight, bias, with_conv=True)
    assert out.shape == (N, C, 2 * H, 2 * W)
    assert jnp.allclose(out, ref, atol=1e-4, rtol=1e-4), "conv path (f32) mismatch"

    # --- test 2: conv path, multiple row tiles (halo logic), ragged W ----------
    N2, C2, H2, W2 = 1, 8, 24, 20
    x2 = jax.random.normal(k1, (N2, C2, H2, W2), dtype=jnp.float32)
    w2 = 0.1 * jax.random.normal(k2, (C2, C2, 3, 3), dtype=jnp.float32)
    b2 = 0.1 * jax.random.normal(k3, (C2,), dtype=jnp.float32)
    out_t = jax.block_until_ready(upsample(x2, w2, b2, with_conv=True, tile_h=8))
    ref_t = upsample_ref(x2, w2, b2, with_conv=True)
    assert jnp.allclose(out_t, ref_t, atol=1e-4, rtol=1e-4), "tiled conv path mismatch"

    # --- test 3: bf16 MXU operands (v6e/v7x optimization), f32 accumulation ----
    out_bf = jax.block_until_ready(
        upsample(x, weight, bias, with_conv=True, mxu_dtype=jnp.bfloat16))
    assert jnp.allclose(out_bf, ref, atol=5e-2, rtol=5e-2), "conv path (bf16) mismatch"

    # --- test 4: pure nearest-neighbour 2x upsample (no conv), tiled + untiled -
    out2 = jax.block_until_ready(upsample(x, with_conv=False))
    ref2 = upsample_ref(x, with_conv=False)
    assert out2.shape == (N, C, 2 * H, 2 * W)
    assert jnp.allclose(out2, ref2), "nearest path mismatch"

    out3 = jax.block_until_ready(upsample(x2, with_conv=False, tile_h=8))
    ref3 = upsample_ref(x2, with_conv=False)
    assert jnp.allclose(out3, ref3), "tiled nearest path mismatch"

    print("KERNEL_OK")
</pallas_src>

<mosaic_0001>
module attributes {stable_mosaic.version = 11 : i64} {
  func.func @_upsample_conv_kernel(%arg0: i32, %arg1: i32, %arg2: memref<1x16x18x4xf32, #tpu.memory_space<vmem>>, %arg3: memref<1x2x18x4xf32, #tpu.memory_space<vmem>>, %arg4: memref<2x2x16x4xf32, #tpu.memory_space<vmem>>, %arg5: memref<1x4xf32, #tpu.memory_space<vmem>>, %arg6: memref<1x2x2x16x16x4xf32, #tpu.memory_space<vmem>>, %arg7: memref<18x18x4xf32, #tpu.memory_space<vmem>>) attributes {dimension_semantics = [#tpu.dimension_semantics<parallel>, #tpu.dimension_semantics<parallel>], iteration_bounds = array<i64: 2, 1>, scalar_prefetch = 0 : i64, scratch_operands = 1 : i64, tpu.core_type = #tpu.core_type<tc>, window_params = [{transform_indices = @transform_0, window_bounds = array<i64: 1, 16, 18, 4>}, {transform_indices = @transform_1, window_bounds = array<i64: 1, 2, 18, 4>}, {pipeline_mode = #tpu.pipeline_mode<synchronous>, transform_indices = @transform_2, window_bounds = array<i64: 2, 2, 16, 4>}, {pipeline_mode = #tpu.pipeline_mode<synchronous>, transform_indices = @transform_3, window_bounds = array<i64: 1, 4>}, {transform_indices = @transform_4, window_bounds = array<i64: 1, 2, 2, 16, 16, 4>}]} {
    %c0 = arith.constant 0 : index
    %c0_0 = arith.constant 0 : index
    %c0_1 = arith.constant 0 : index
    %c0_2 = arith.constant 0 : index
    %0 = vector.load %arg2[%c0, %c0_0, %c0_1, %c0_2] : memref<1x16x18x4xf32, #tpu.memory_space<vmem>>, vector<1x16x18x4xf32>
    %1 = vector.shape_cast %0 : vector<1x16x18x4xf32> to vector<16x18x4xf32>
    %c0_3 = arith.constant 0 : index
    %c0_4 = arith.constant 0 : index
    %c0_5 = arith.constant 0 : index
    %2 = vector.load %arg7[%c0_3, %c0_4, %c0_5] : memref<18x18x4xf32, #tpu.memory_space<vmem>>, vector<16x18x4xf32>
    tpu.vector_store %arg7[%c0_3, %c0_4, %c0_5], %1 {strides = array<i32>} : memref<18x18x4xf32, #tpu.memory_space<vmem>>, vector<16x18x4xf32>,
    %c0_6 = arith.constant 0 : index
    %c0_7 = arith.constant 0 : index
    %c0_8 = arith.constant 0 : index
    %c0_9 = arith.constant 0 : index
    %3 = vector.load %arg3[%c0_6, %c0_7, %c0_8, %c0_9] : memref<1x2x18x4xf32, #tpu.memory_space<vmem>>, vector<1x2x18x4xf32>
    %4 = vector.shape_cast %3 : vector<1x2x18x4xf32> to vector<2x18x4xf32>
    %c16 = arith.constant 16 : index
    %c0_10 = arith.constant 0 : index
    %c0_11 = arith.constant 0 : index
    %5 = vector.load %arg7[%c16, %c0_10, %c0_11] : memref<18x18x4xf32, #tpu.memory_space<vmem>>, vector<2x18x4xf32>
    tpu.vector_store %arg7[%c16, %c0_10, %c0_11], %4 {strides = array<i32>} : memref<18x18x4xf32, #tpu.memory_space<vmem>>, vector<2x18x4xf32>,
    %c0_12 = arith.constant 0 : index
    %c0_13 = arith.constant 0 : index
    %6 = vector.load %arg5[%c0_12, %c0_13] : memref<1x4xf32, #tpu.memory_space<vmem>>, vector<1x4xf32>
    %c0_14 = arith.constant 0 : index
    %c0_15 = arith.constant 0 : index
    %c0_16 = arith.constant 0 : index
    %7 = vector.load %arg7[%c0_14, %c0_15, %c0_16] : memref<18x18x4xf32, #tpu.memory_space<vmem>>, vector<16x16x4xf32>
    %c0_17 = arith.constant 0 : index
    %c1 = arith.constant 1 : index
    %c0_18 = arith.constant 0 : index
    %8 = vector.load %arg7[%c0_17, %c1, %c0_18] : memref<18x18x4xf32, #tpu.memory_space<vmem>>, vector<16x16x4xf32>
    %c1_19 = arith.constant 1 : index
    %c0_20 = arith.constant 0 : index
    %c0_21 = arith.constant 0 : index
    %9 = vector.load %arg7[%c1_19, %c0_20, %c0_21] : memref<18x18x4xf32, #tpu.memory_space<vmem>>, vector<16x16x4xf32>
    %c1_22 = arith.constant 1 : index
    %c1_23 = arith.constant 1 : index
    %c0_24 = arith.constant 0 : index
    %10 = vector.load %arg7[%c1_22, %c1_23, %c0_24] : memref<18x18x4xf32, #tpu.memory_space<vmem>>, vector<16x16x4xf32>
    %11 = tpu.concatenate %7, %8, %9, %10 in 2 : vector<16x16x4xf32>, vector<16x16x4xf32>, vector<16x16x4xf32>, vector<16x16x4xf32> -> vector<16x16x16xf32>
    %12 = vector.shape_cast %11 : vector<16x16x16xf32> to vector<256x16xf32>
    %c0_25 = arith.constant 0 : index
    %c0_26 = arith.constant 0 : index
    %c0_27 = arith.constant 0 : index
    %c0_28 = arith.constant 0 : index
    %13 = vector.load %arg4[%c0_25, %c0_26, %c0_27, %c0_28] : memref<2x2x16x4xf32, #tpu.memory_space<vmem>>, vector<1x1x16x4xf32>
    %14 = vector.shape_cast %13 : vector<1x1x16x4xf32> to vector<16x4xf32>
    %cst = arith.constant dense<0.000000e+00> : vector<256x4xf32>
    %15 = tpu.matmul %12, %14, %cst {dimension_numbers = #tpu.dot_dimension_numbers<[1], [0], [0], [1], [0, 0, 1, 1], [], []>} : vector<256x16xf32>, vector<16x4xf32>, vector<256x4xf32> -> vector<256x4xf32>
    %16 = vector.broadcast %6 : vector<1x4xf32> to vector<256x4xf32>
    %17 = arith.addf %15, %16 : vector<256x4xf32>
    %18 = vector.shape_cast %17 : vector<256x4xf32> to vector<16x16x4xf32>
    %c0_29 = arith.constant 0 : index
    %c0_30 = arith.constant 0 : index
    %c0_31 = arith.constant 0 : index
    %c0_32 = arith.constant 0 : index
    %c0_33 = arith.constant 0 : index
    %c0_34 = arith.constant 0 : index
    %19 = vector.load %arg6[%c0_29, %c0_30, %c0_31, %c0_32, %c0_33, %c0_34] : memref<1x2x2x16x16x4xf32, #tpu.memory_space<vmem>>, vector<1x1x1x16x16x4xf32>
    %20 = vector.shape_cast %19 : vector<1x1x1x16x16x4xf32> to vector<16x16x4xf32>
    %21 = vector.shape_cast %18 : vector<16x16x4xf32> to vector<1x1x1x16x16x4xf32>
    tpu.vector_store %arg6[%c0_29, %c0_30, %c0_31, %c0_32, %c0_33, %c0_34], %21 {strides = array<i32>} : memref<1x2x2x16x16x4xf32, #tpu.memory_space<vmem>>, vector<1x1x1x16x16x4xf32>,
    %c0_35 = arith.constant 0 : index
    %c1_36 = arith.constant 1 : index
    %c0_37 = arith.constant 0 : index
    %22 = vector.load %arg7[%c0_35, %c1_36, %c0_37] : memref<18x18x4xf32, #tpu.memory_space<vmem>>, vector<16x16x4xf32>
    %c0_38 = arith.constant 0 : index
    %c2 = arith.constant 2 : index
    %c0_39 = arith.constant 0 : index
    %23 = vector.load %arg7[%c0_38, %c2, %c0_39] : memref<18x18x4xf32, #tpu.memory_space<vmem>>, vector<16x16x4xf32>
    %c1_40 = arith.constant 1 : index
    %c1_41 = arith.constant 1 : index
    %c0_42 = arith.constant 0 : index
    %24 = vector.load %arg7[%c1_40, %c1_41, %c0_42] : memref<18x18x4xf32, #tpu.memory_space<vmem>>, vector<16x16x4xf32>
    %c1_43 = arith.constant 1 : index
    %c2_44 = arith.constant 2 : index
    %c0_45 = arith.constant 0 : index
    %25 = vector.load %arg7[%c1_43, %c2_44, %c0_45] : memref<18x18x4xf32, #tpu.memory_space<vmem>>, vector<16x16x4xf32>
    %26 = tpu.concatenate %22, %23, %24, %25 in 2 : vector<16x16x4xf32>, vector<16x16x4xf32>, vector<16x16x4xf32>, vector<16x16x4xf32> -> vector<16x16x16xf32>
    %27 = vector.shape_cast %26 : vector<16x16x16xf32> to vector<256x16xf32>
    %c0_46 = arith.constant 0 : index
    %c1_47 = arith.constant 1 : index
    %c0_48 = arith.constant 0 : index
    %c0_49 = arith.constant 0 : index
    %28 = vector.load %arg4[%c0_46, %c1_47, %c0_48, %c0_49] : memref<2x2x16x4xf32, #tpu.memory_space<vmem>>, vector<1x1x16x4xf32>
    %29 = vector.shape_cast %28 : vector<1x1x16x4xf32> to vector<16x4xf32>
    %cst_50 = arith.constant dense<0.000000e+00> : vector<256x4xf32>
    %30 = tpu.matmul %27, %29, %cst_50 {dimension_numbers = #tpu.dot_dimension_numbers<[1], [0], [0], [1], [0, 0, 1, 1], [], []>} : vector<256x16xf32>, vector<16x4xf32>, vector<256x4xf32> -> vector<256x4xf32>
    %31 = vector.broadcast %6 : vector<1x4xf32> to vector<256x4xf32>
    %32 = arith.addf %30, %31 : vector<256x4xf32>
    %33 = vector.shape_cast %32 : vector<256x4xf32> to vector<16x16x4xf32>
    %c0_51 = arith.constant 0 : index
    %c0_52 = arith.constant 0 : index
    %c1_53 = arith.constant 1 : index
    %c0_54 = arith.constant 0 : index
    %c0_55 = arith.constant 0 : index
    %c0_56 = arith.constant 0 : index
    %34 = vector.load %arg6[%c0_51, %c0_52, %c1_53, %c0_54, %c0_55, %c0_56] : memref<1x2x2x16x16x4xf32, #tpu.memory_space<vmem>>, vector<1x1x1x16x16x4xf32>
    %35 = vector.shape_cast %34 : vector<1x1x1x16x16x4xf32> to vector<16x16x4xf32>
    %36 = vector.shape_cast %33 : vector<16x16x4xf32> to vector<1x1x1x16x16x4xf32>
    tpu.vector_store %arg6[%c0_51, %c0_52, %c1_53, %c0_54, %c0_55, %c0_56], %36 {strides = array<i32>} : memref<1x2x2x16x16x4xf32, #tpu.memory_space<vmem>>, vector<1x1x1x16x16x4xf32>,
    %c1_57 = arith.constant 1 : index
    %c0_58 = arith.constant 0 : index
    %c0_59 = arith.constant 0 : index
    %37 = vector.load %arg7[%c1_57, %c0_58, %c0_59] : memref<18x18x4xf32, #tpu.memory_space<vmem>>, vector<16x16x4xf32>
    %c1_60 = arith.constant 1 : index
    %c1_61 = arith.constant 1 : index
    %c0_62 = arith.constant 0 : index
    %38 = vector.load %arg7[%c1_60, %c1_61, %c0_62] : memref<18x18x4xf32, #tpu.memory_space<vmem>>, vector<16x16x4xf32>
    %c2_63 = arith.constant 2 : index
    %c0_64 = arith.constant 0 : index
    %c0_65 = arith.constant 0 : index
    %39 = vector.load %arg7[%c2_63, %c0_64, %c0_65] : memref<18x18x4xf32, #tpu.memory_space<vmem>>, vector<16x16x4xf32>
    %c2_66 = arith.constant 2 : index
    %c1_67 = arith.constant 1 : index
    %c0_68 = arith.constant 0 : index
    %40 = vector.load %arg7[%c2_66, %c1_67, %c0_68] : memref<18x18x4xf32, #tpu.memory_space<vmem>>, vector<16x16x4xf32>
    %41 = tpu.concatenate %37, %38, %39, %40 in 2 : vector<16x16x4xf32>, vector<16x16x4xf32>, vector<16x16x4xf32>, vector<16x16x4xf32> -> vector<16x16x16xf32>
    %42 = vector.shape_cast %41 : vector<16x16x16xf32> to vector<256x16xf32>
    %c1_69 = arith.constant 1 : index
    %c0_70 = arith.constant 0 : index
    %c0_71 = arith.constant 0 : index
    %c0_72 = arith.constant 0 : index
    %43 = vector.load %arg4[%c1_69, %c0_70, %c0_71, %c0_72] : memref<2x2x16x4xf32, #tpu.memory_space<vmem>>, vector<1x1x16x4xf32>
    %44 = vector.shape_cast %43 : vector<1x1x16x4xf32> to vector<16x4xf32>
    %cst_73 = arith.constant dense<0.000000e+00> : vector<256x4xf32>
    %45 = tpu.matmul %42, %44, %cst_73 {dimension_numbers = #tpu.dot_dimension_numbers<[1], [0], [0], [1], [0, 0, 1, 1], [], []>} : vector<256x16xf32>, vector<16x4xf32>, vector<256x4xf32> -> vector<256x4xf32>
    %46 = vector.broadcast %6 : vector<1x4xf32> to vector<256x4xf32>
    %47 = arith.addf %45, %46 : vector<256x4xf32>
    %48 = vector.shape_cast %47 : vector<256x4xf32> to vector<16x16x4xf32>
    %c0_74 = arith.constant 0 : index
    %c1_75 = arith.constant 1 : index
    %c0_76 = arith.constant 0 : index
    %c0_77 = arith.constant 0 : index
    %c0_78 = arith.constant 0 : index
    %c0_79 = arith.constant 0 : index
    %49 = vector.load %arg6[%c0_74, %c1_75, %c0_76, %c0_77, %c0_78, %c0_79] : memref<1x2x2x16x16x4xf32, #tpu.memory_space<vmem>>, vector<1x1x1x16x16x4xf32>
    %50 = vector.shape_cast %49 : vector<1x1x1x16x16x4xf32> to vector<16x16x4xf32>
    %51 = vector.shape_cast %48 : vector<16x16x4xf32> to vector<1x1x1x16x16x4xf32>
    tpu.vector_store %arg6[%c0_74, %c1_75, %c0_76, %c0_77, %c0_78, %c0_79], %51 {strides = array<i32>} : memref<1x2x2x16x16x4xf32, #tpu.memory_space<vmem>>, vector<1x1x1x16x16x4xf32>,
    %c1_80 = arith.constant 1 : index
    %c1_81 = arith.constant 1 : index
    %c0_82 = arith.constant 0 : index
    %52 = vector.load %arg7[%c1_80, %c1_81, %c0_82] : memref<18x18x4xf32, #tpu.memory_space<vmem>>, vector<16x16x4xf32>
    %c1_83 = arith.constant 1 : index
    %c2_84 = arith.constant 2 : index
    %c0_85 = arith.constant 0 : index
    %53 = vector.load %arg7[%c1_83, %c2_84, %c0_85] : memref<18x18x4xf32, #tpu.memory_space<vmem>>, vector<16x16x4xf32>
    %c2_86 = arith.constant 2 : index
    %c1_87 = arith.constant 1 : index
    %c0_88 = arith.constant 0 : index
    %54 = vector.load %arg7[%c2_86, %c1_87, %c0_88] : memref<18x18x4xf32, #tpu.memory_space<vmem>>, vector<16x16x4xf32>
    %c2_89 = arith.constant 2 : index
    %c2_90 = arith.constant 2 : index
    %c0_91 = arith.constant 0 : index
    %55 = vector.load %arg7[%c2_89, %c2_90, %c0_91] : memref<18x18x4xf32, #tpu.memory_space<vmem>>, vector<16x16x4xf32>
    %56 = tpu.concatenate %52, %53, %54, %55 in 2 : vector<16x16x4xf32>, vector<16x16x4xf32>, vector<16x16x4xf32>, vector<16x16x4xf32> -> vector<16x16x16xf32>
    %57 = vector.shape_cast %56 : vector<16x16x16xf32> to vector<256x16xf32>
    %c1_92 = arith.constant 1 : index
    %c1_93 = arith.constant 1 : index
    %c0_94 = arith.constant 0 : index
    %c0_95 = arith.constant 0 : index
    %58 = vector.load %arg4[%c1_92, %c1_93, %c0_94, %c0_95] : memref<2x2x16x4xf32, #tpu.memory_space<vmem>>, vector<1x1x16x4xf32>
    %59 = vector.shape_cast %58 : vector<1x1x16x4xf32> to vector<16x4xf32>
    %cst_96 = arith.constant dense<0.000000e+00> : vector<256x4xf32>
    %60 = tpu.matmul %57, %59, %cst_96 {dimension_numbers = #tpu.dot_dimension_numbers<[1], [0], [0], [1], [0, 0, 1, 1], [], []>} : vector<256x16xf32>, vector<16x4xf32>, vector<256x4xf32> -> vector<256x4xf32>
    %61 = vector.broadcast %6 : vector<1x4xf32> to vector<256x4xf32>
    %62 = arith.addf %60, %61 : vector<256x4xf32>
    %63 = vector.shape_cast %62 : vector<256x4xf32> to vector<16x16x4xf32>
    %c0_97 = arith.constant 0 : index
    %c1_98 = arith.constant 1 : index
    %c1_99 = arith.constant 1 : index
    %c0_100 = arith.constant 0 : index
    %c0_101 = arith.constant 0 : index
    %c0_102 = arith.constant 0 : index
    %64 = vector.load %arg6[%c0_97, %c1_98, %c1_99, %c0_100, %c0_101, %c0_102] : memref<1x2x2x16x16x4xf32, #tpu.memory_space<vmem>>, vector<1x1x1x16x16x4xf32>
    %65 = vector.shape_cast %64 : vector<1x1x1x16x16x4xf32> to vector<16x16x4xf32>
    %66 = vector.shape_cast %63 : vector<16x16x4xf32> to vector<1x1x1x16x16x4xf32>
    tpu.vector_store %arg6[%c0_97, %c1_98, %c1_99, %c0_100, %c0_101, %c0_102], %66 {strides = array<i32>} : memref<1x2x2x16x16x4xf32, #tpu.memory_space<vmem>>, vector<1x1x1x16x16x4xf32>,
    return
  }
  func.func @transform_0(%arg0: i32, %arg1: i32) -> (i32, i32, i32, i32) {
    %c0_i32 = arith.constant 0 : i32
    %c0_i32_0 = arith.constant 0 : i32
    %c0_i32_1 = arith.constant 0 : i32
    return %arg0, %arg1, %c0_i32, %c0_i32_0 : i32, i32, i32, i32
  }
  func.func @transform_1(%arg0: i32, %arg1: i32) -> (i32, i32, i32, i32) {
    %c8_i32 = arith.constant 8 : i32
    %0 = arith.muli %arg1, %c8_i32 : i32
    %c8_i32_0 = arith.constant 8 : i32
    %1 = arith.addi %0, %c8_i32_0 : i32
    %c0_i32 = arith.constant 0 : i32
    %c0_i32_1 = arith.constant 0 : i32
    %c0_i32_2 = arith.constant 0 : i32
    return %arg0, %1, %c0_i32, %c0_i32_1 : i32, i32, i32, i32
  }
  func.func @transform_2(%arg0: i32, %arg1: i32) -> (i32, i32, i32, i32) {
    %c0_i32 = arith.constant 0 : i32
    %c0_i32_0 = arith.constant 0 : i32
    %c0_i32_1 = arith.constant 0 : i32
    %c0_i32_2 = arith.constant 0 : i32
    %c0_i32_3 = arith.constant 0 : i32
    return %c0_i32, %c0_i32_0, %c0_i32_1, %c0_i32_2 : i32, i32, i32, i32
  }
  func.func @transform_3(%arg0: i32, %arg1: i32) -> (i32, i32) {
    %c0_i32 = arith.constant 0 : i32
    %c0_i32_0 = arith.constant 0 : i32
    %c0_i32_1 = arith.constant 0 : i32
    return %c0_i32, %c0_i32_0 : i32, i32
  }
  func.func @transform_4(%arg0: i32, %arg1: i32) -> (i32, i32, i32, i32, i32, i32) {
    %c0_i32 = arith.constant 0 : i32
    %c0_i32_0 = arith.constant 0 : i32
    %c0_i32_1 = arith.constant 0 : i32
    %c0_i32_2 = arith.constant 0 : i32
    %c0_i32_3 = arith.constant 0 : i32
    return %arg0, %c0_i32, %c0_i32_0, %arg1, %c0_i32_1, %c0_i32_2 : i32, i32, i32, i32, i32, i32
  }
}

</mosaic_0001>

<llo_original>
// kernel: upsample.1
$region0: #{upsample.1}
  #allocation0 [shape = 'u32[]', space=smem, size = 0x4, offset = 0x4, fixed_abs, tag = 'smem constant byte address 0x4 - core index']
  #allocation1 [shape = 'u32[144,128]{1,0:T(1,128)}', space=vmem, size = 0x12000, scoped, tag = 'internal scratch']
  #allocation2 [shape = 'f32[18,18,4]{2,1,0:T(8,128)}', space=vmem, size = 0x36000, scoped, tag = 'scratch operand']
  %s0 = inlined_call_operand.vmem [shape: f32[2,18,18,4], index: 0, kind: input, shape index: {}, may-alias: {0,1}]
  %s1 = inlined_call_operand.vmem [shape: f32[2,18,18,4], index: 1, kind: input, shape index: {}, may-alias: {0,1}]
  %s2 = inlined_call_operand.vmem [shape: f32[2,2,16,4], index: 2, kind: input, shape index: {}]
  %s3 = inlined_call_operand.vmem [shape: f32[1,4], index: 3, kind: input, shape index: {}]
  %s4 = inlined_call_operand.vmem [shape: f32[2,2,2,16,16,4], index: 4, kind: output, shape index: {}]
  %s5 = sld [smem:[#allocation0]]
  $region49: #{upsample.1} parent=0
    _
  %s7 = ssub.s32 1, %s5
  %s8 = scalar_select 0, %s7, %s5
  loop: start=0, step=1, limit=4
  $region2: #{upsample.1} parent=0 // loop_pre_header
    _
  $region3: #{upsample.1} parent=0 // loop_header
    %s10 = sphi 0, %s14
    %p11 = scmp.ge.s32.totalorder %s10, 4
    %s17 = sphi 0, %s29
    %s18 = sphi 0, %s25
    %s19 = sphi 0, %s17
    %s20 = sphi 0, %s18
    %s21 = sphi 0, %s19
    %s22 = sphi 0, %s20
    %s34 = sphi 0, %s36
    %s37 = sphi 0, %s34
    %s38 = sphi 0, %s37
    %s54 = sphi 0, %s38
    %s66 = sphi 0, %s68
    %s69 = sphi 0, %s66
    %s70 = sphi 0, %s69
    %s86 = sphi 0, %s70
    %s90 = sphi 0, %s90
    %s92 = sphi 0, %s90
    %s93 = sphi 0, %s92
    %s107 = sphi 0, %s93
    %s111 = sphi 0, %s111
    %s113 = sphi 0, %s111
    %s114 = sphi 0, %s113
    %s128 = sphi 0, %s114
    %s136 = sphi 0, %s138
    %s139 = sphi 0, %s136
    %s140 = sphi 0, %s139
    %s156 = sphi 0, %s140
  $region4: #{upsample.1} parent=0 // loop_header_branch
    %13 = sbr.rel (%p11) target = $region8
  $region5: #{upsample.1} parent=0 // loop_body
    %s15 = ssub.s32 %s10, 1
    %s16 = ssub.s32 %s10, 2
    %s23 = sadd.s32 1, %s18
    %p24 = scmp.ge.s32.totalorder %s23, 1
    %s25 = scalar_select %p24, 0, %s23
    %s26 = sadd.s32 1, %s17
    %s27 = scalar_select %p24, %s26, %s17
    %p28 = scmp.ge.s32.totalorder %s27, 2
    %s29 = scalar_select %p28, 0, %s27
    %s30 = ssub.s32 %s17, %s29
    %s31 = ssub.s32 %s18, %s25
    %s32 = sor.u32 %s30, %s31
    %p33 = scmp.eq.s32.totalorder %s32, 0
    %s35 = sadd.s32 %s34, 1
    %s36 = scalar_select %p33, %s34, %s35
    %p39 = pneg %p33
    %p40 = scmp.eq.s32.totalorder %s10, 1
    %p41 = por %p39, %p40
    %p42 = scmp.ne.s32.totalorder %s34, %s37
    %p43 = scmp.eq.s32.totalorder %s10, 0
    %p44 = por %p42, %p43
    %p45 = scmp.ne.s32.totalorder %s34, %s37
    %p46 = scmp.eq.s32.totalorder %s15, 1
    %p47 = por %p45, %p46
    %p48 = scmp.ne.s32.totalorder %s37, %s38
    %p49 = scmp.eq.s32.totalorder %s15, 0
    %p50 = por %p48, %p49
    %p51 = scmp.ne.s32.totalorder %s37, %s38
    %p52 = scmp.eq.s32.totalorder %s16, 1
    %p53 = por %p51, %p52
    %p55 = scmp.ne.s32.totalorder %s38, %s54
    %p56 = scmp.eq.s32.totalorder %s16, 0
    %p57 = por %p55, %p56
    %s58 = smul.u32 %s18, 8
    %s59 = sadd.s32 %s58, 8
    %s60 = smul.u32 %s25, 8
    %s61 = sadd.s32 %s60, 8
    %s62 = ssub.s32 %s17, %s29
    %s63 = ssub.s32 %s59, %s61
    %s64 = sor.u32 %s62, %s63
    %p65 = scmp.eq.s32.totalorder %s64, 0
    %s67 = sadd.s32 %s66, 1
    %s68 = scalar_select %p65, %s66, %s67
    %p71 = pneg %p65
    %p72 = scmp.eq.s32.totalorder %s10, 1
    %p73 = por %p71, %p72
    %p74 = scmp.ne.s32.totalorder %s66, %s69
    %p75 = scmp.eq.s32.totalorder %s10, 0
    %p76 = por %p74, %p75
    %p77 = scmp.ne.s32.totalorder %s66, %s69
    %p78 = scmp.eq.s32.totalorder %s15, 1
    %p79 = por %p77, %p78
    %p80 = scmp.ne.s32.totalorder %s69, %s70
    %p81 = scmp.eq.s32.totalorder %s15, 0
    %p82 = por %p80, %p81
    %p83 = scmp.ne.s32.totalorder %s69, %s70
    %p84 = scmp.eq.s32.totalorder %s16, 1
    %p85 = por %p83, %p84
    %p87 = scmp.ne.s32.totalorder %s70, %s86
    %p88 = scmp.eq.s32.totalorder %s16, 0
    %p89 = por %p87, %p88
    %s91 = sadd.s32 %s90, 1
    %p94 = scmp.eq.s32.totalorder %s10, 1
    %p95 = scmp.ne.s32.totalorder %s90, %s92
    %p96 = scmp.eq.s32.totalorder %s10, 0
    %p97 = por %p95, %p96
    %p98 = scmp.ne.s32.totalorder %s90, %s92
    %p99 = scmp.eq.s32.totalorder %s15, 1
    %p100 = por %p98, %p99
    %p101 = scmp.ne.s32.totalorder %s92, %s93
    %p102 = scmp.eq.s32.totalorder %s15, 0
    %p103 = por %p101, %p102
    %p104 = scmp.ne.s32.totalorder %s92, %s93
    %p105 = scmp.eq.s32.totalorder %s16, 1
    %p106 = por %p104, %p105
    %p108 = scmp.ne.s32.totalorder %s93, %s107
    %p109 = scmp.eq.s32.totalorder %s16, 0
    %p110 = por %p108, %p109
    %s112 = sadd.s32 %s111, 1
    %p115 = scmp.eq.s32.totalorder %s10, 1
    %p116 = scmp.ne.s32.totalorder %s111, %s113
    %p117 = scmp.eq.s32.totalorder %s10, 0
    %p118 = por %p116, %p117
    %p119 = scmp.ne.s32.totalorder %s111, %s113
    %p120 = scmp.eq.s32.totalorder %s15, 1
    %p121 = por %p119, %p120
    %p122 = scmp.ne.s32.totalorder %s113, %s114
    %p123 = scmp.eq.s32.totalorder %s15, 0
    %p124 = por %p122, %p123
    %p125 = scmp.ne.s32.totalorder %s113, %s114
    %p126 = scmp.eq.s32.totalorder %s16, 1
    %p127 = por %p125, %p126
    %p129 = scmp.ne.s32.totalorder %s114, %s128
    %p130 = scmp.eq.s32.totalorder %s16, 0
    %p131 = por %p129, %p130
    %s132 = ssub.s32 %s17, %s29
    %s133 = ssub.s32 %s18, %s25
    %s134 = sor.u32 %s132, %s133
    %p135 = scmp.eq.s32.totalorder %s134, 0
    %s137 = sadd.s32 %s136, 1
    %s138 = scalar_select %p135, %s136, %s137
    %p141 = pneg %p135
    %p142 = scmp.eq.s32.totalorder %s10, 1
    %p143 = por %p141, %p142
    %p144 = scmp.ne.s32.totalorder %s136, %s139
    %p145 = scmp.eq.s32.totalorder %s10, 0
    %p146 = por %p144, %p145
    %p147 = scmp.ne.s32.totalorder %s136, %s139
    %p148 = scmp.eq.s32.totalorder %s15, 1
    %p149 = por %p147, %p148
    %p150 = scmp.ne.s32.totalorder %s139, %s140
    %p151 = scmp.eq.s32.totalorder %s15, 0
    %p152 = por %p150, %p151
    %p153 = scmp.ne.s32.totalorder %s139, %s140
    %p154 = scmp.eq.s32.totalorder %s16, 1
    %p155 = por %p153, %p154
    %p157 = scmp.ne.s32.totalorder %s140, %s156
    %p158 = scmp.eq.s32.totalorder %s16, 0
    %p159 = por %p157, %p158
    %p160 = scmp.le.s32.totalorder 1, %s10
    %p161 = scmp.lt.s32.totalorder %s10, 3
    %p162 = pnand %p160, %p161
    %p163 = pneg %p162
    // Predicated region
    $region9: #{upsample.1} parent=5 // pred_check
      _
    $region10: #{upsample.1} parent=5 // pred_check_branch
      %165 = sbr.rel (%p162) target = $region12
    $region11: #{upsample.1} parent=5 // pred_region
      %s166 = ssub.s32 %s10, 1
      // Predicated region
      $region13: #{upsample.1} parent=11 // pred_check
        %p167 = pneg %p103
      $region14: #{upsample.1} parent=11 // pred_check_branch
        %169 = sbr.rel (%p167) target = $region16
      $region15: #{upsample.1} parent=11 // pred_region
        _
      $region16: #{upsample.1} parent=11 // pred_fallthru
        _
      // Predicated region
      $region17: #{upsample.1} parent=11 // pred_check
        %p170 = pneg %p124
      $region18: #{upsample.1} parent=11 // pred_check_branch
        %172 = sbr.rel (%p170) target = $region20
      $region19: #{upsample.1} parent=11 // pred_region
        _
      $region20: #{upsample.1} parent=11 // pred_fallthru
        _
    $region12: #{upsample.1} parent=5 // pred_fallthru
      _
    %p173 = scmp.lt.s32.totalorder %s10, 2
    // Predicated region
    $region21: #{upsample.1} parent=5 // pred_check
      %p174 = pneg %p173
    $region22: #{upsample.1} parent=5 // pred_check_branch
      %176 = sbr.rel (%p174) target = $region24
    $region23: #{upsample.1} parent=5 // pred_region
      // Predicated region
      $region25: #{upsample.1} parent=23 // pred_check
        %p177 = pneg %p44
      $region26: #{upsample.1} parent=23 // pred_check_branch
        %179 = sbr.rel (%p177) target = $region28
      $region27: #{upsample.1} parent=23 // pred_region
        %s180 = smul.u32 16, %s18
        %s181 = ssub.s32 18, %s180
        %p182 = scmp.lt.s32.totalorder %s181, 16
        %s183 = scalar_select %p182, %s181, 16
        %s184 = smul.u32 128, %s183
        %s185 = smul.u32 %s184, 3
        %p186 = scmp.lt.s32.totalorder %s17, 1
        %s187 = scalar_select %p186, %s17, 1
        %p188 = scmp.lt.s32.totalorder %s180, 17
        %s189 = scalar_select %p188, %s180, 17
        %s190 = smul.addr %s189, 3
        %s191 = smul.addr %s187, 54
        %s192 = sadd.s32 %s190, %s191
        %s193 = smul.addr %s192, 8
        %s194 = scalar_lea.vmem %s0, %s193
        %s195 = smul.u32 16, %s18
        %s196 = ssub.s32 18, %s195
        %p197 = scmp.lt.s32.totalorder %s196, 16
        %s198 = scalar_select %p197, %s196, 16
        %s199 = smul.u32 128, %s198
        %s200 = smul.u32 %s199, 3
      $region28: #{upsample.1} parent=23 // pred_fallthru
        _
      // Predicated region
      $region29: #{upsample.1} parent=23 // pred_check
        %p201 = pneg %p76
      $region30: #{upsample.1} parent=23 // pred_check_branch
        %203 = sbr.rel (%p201) target = $region32
      $region31: #{upsample.1} parent=23 // pred_region
        %s204 = smul.u32 %s18, 8
        %s205 = sadd.s32 %s204, 8
        %s206 = smul.u32 2, %s205
        %p207 = scmp.lt.s32.totalorder %s17, 1
        %s208 = scalar_select %p207, %s17, 1
        %p209 = scmp.lt.s32.totalorder %s206, 17
        %s210 = scalar_select %p209, %s206, 17
        %s211 = smul.addr %s210, 3
        %s212 = smul.addr %s208, 54
        %s213 = sadd.s32 %s211, %s212
        %s214 = smul.addr %s213, 8
        %s215 = scalar_lea.vmem %s1, %s214
        %s216 = smul.u32 %s18, 8
        %s217 = sadd.s32 %s216, 8
        %s218 = smul.u32 2, %s217
      $region32: #{upsample.1} parent=23 // pred_fallthru
        _
    $region24: #{upsample.1} parent=5 // pred_fallthru
      _
    %p219 = scmp.le.s32.totalorder 1, %s10
    %p220 = scmp.lt.s32.totalorder %s10, 3
    %p221 = pnand %p219, %p220
    %p222 = pneg %p221
    // Predicated region
    $region33: #{upsample.1} parent=5 // pred_check
      _
    $region34: #{upsample.1} parent=5 // pred_check_branch
      %224 = sbr.rel (%p221) target = $region36
    $region35: #{upsample.1} parent=5 // pred_region
      %s225 = ssub.s32 %s10, 1
      %s226 = smul.u32 16, %s20
      %s227 = ssub.s32 18, %s226
      %p228 = scmp.lt.s32.totalorder %s227, 16
      %s229 = scalar_select %p228, %s227, 16
      %s230 = smul.u32 128, %s229
      %s231 = smul.u32 %s230, 3
      %p232 = scmp.lt.s32.totalorder %s19, 1
      %s233 = scalar_select %p232, %s19, 1
      %p234 = scmp.lt.s32.totalorder %s226, 17
      %s235 = scalar_select %p234, %s226, 17
      %s236 = smul.addr %s235, 3
      %s237 = smul.addr %s233, 54
      %s238 = sadd.s32 %s236, %s237
      %s239 = smul.addr %s238, 8
      %s240 = scalar_lea.vmem %s0, %s239
      %p241 = pneg %p50
      %p242 = pneg %p47
      %s243 = smul.u32 %s20, 8
      %s244 = sadd.s32 %s243, 8
      %s245 = smul.u32 2, %s244
      %p246 = scmp.lt.s32.totalorder %s19, 1
      %s247 = scalar_select %p246, %s19, 1
      %p248 = scmp.lt.s32.totalorder %s245, 17
      %s249 = scalar_select %p248, %s245, 17
      %s250 = smul.addr %s249, 3
      %s251 = smul.addr %s247, 54
      %s252 = sadd.s32 %s250, %s251
      %s253 = smul.addr %s252, 8
      %s254 = scalar_lea.vmem %s1, %s253
      %p255 = pneg %p82
      %p256 = pneg %p79
      %p257 = pneg %p103
      %p258 = pneg %p100
      %p259 = pneg %p124
      %p260 = pneg %p121
      %p261 = pneg %p152
      %p262 = pneg %p149
      %s263 = smul.u32 16, %s20
      %p264 = scmp.lt.s32.totalorder %s19, 1
      %s265 = scalar_select %p264, %s19, 1
      %p266 = scmp.lt.s32.totalorder %s263, 15
      %s267 = scalar_select %p266, %s263, 15
      %s268 = smul.addr %s267, 2
      %s269 = smul.addr %s265, 128
      %s270 = sadd.s32 %s268, %s269
      %s271 = smul.addr %s270, 8
      %s272 = scalar_lea.vmem %s4, %s271
      %s273 = smul.u32 16, %s20
      %s274 = ssub.s32 18, %s273
      %p275 = scmp.lt.s32.totalorder %s274, 16
      %s276 = scalar_select %p275, %s274, 16
      %s277 = smul.u32 128, %s276
      %s278 = smul.u32 %s277, 3
      %p279 = scmp.lt.s32.totalorder %s19, 1
      %s280 = scalar_select %p279, %s19, 1
      %p281 = scmp.lt.s32.totalorder %s273, 17
      %s282 = scalar_select %p281, %s273, 17
      %s283 = smul.addr %s282, 3
      %s284 = smul.addr %s280, 54
      %s285 = sadd.s32 %s283, %s284
      %s286 = smul.addr %s285, 8
      %s287 = scalar_lea.vmem %s0, %s286
      %s288 = smul.u32 16, %s20
      %s289 = ssub.s32 18, %s288
      %p290 = scmp.lt.s32.totalorder %s289, 16
      %s291 = scalar_select %p290, %s289, 16
      %s292 = smul.u32 128, %s291
      %s293 = smul.u32 %s292, 3
      %s294 = smul.u32 %s20, 8
      %s295 = sadd.s32 %s294, 8
      %s296 = smul.u32 2, %s295
      %p297 = scmp.lt.s32.totalorder %s19, 1
      %s298 = scalar_select %p297, %s19, 1
      %p299 = scmp.lt.s32.totalorder %s296, 17
      %s300 = scalar_select %p299, %s296, 17
      %s301 = smul.addr %s300, 3
      %s302 = smul.addr %s298, 54
      %s303 = sadd.s32 %s301, %s302
      %s304 = smul.addr %s303, 8
      %s305 = scalar_lea.vmem %s1, %s304
      %s306 = smul.u32 %s20, 8
      %s307 = sadd.s32 %s306, 8
      %s308 = smul.u32 2, %s307
      %s309 = smul.u32 16, %s20
      %p310 = scmp.lt.s32.totalorder %s19, 1
      %s311 = scalar_select %p310, %s19, 1
      %p312 = scmp.lt.s32.totalorder %s309, 15
      %s313 = scalar_select %p312, %s309, 15
      %s314 = smul.addr %s313, 2
      %s315 = smul.addr %s311, 128
      %s316 = sadd.s32 %s314, %s315
      %s317 = smul.addr %s316, 8
      %s318 = scalar_lea.vmem %s4, %s317
      %s319 = smul.u32 16, %s20
      %v320 = vld [vmem:[%s287] sm:$0xff]
      %v321 = vld [vmem:[%s287 + $0x8] sm:$0xff]
      %v322 = vld [vmem:[%s287 + $0x10] sm:$0x3]
      %v323 = vld [vmem:[%s287 + $0x18] sm:$0xff]
      %v324 = vld [vmem:[%s287 + $0x20] sm:$0xff]
      %v325 = vld [vmem:[%s287 + $0x28] sm:$0x3]
      %v326 = vld [vmem:[%s287 + $0x30] sm:$0xff]
      %v327 = vld [vmem:[%s287 + $0x38] sm:$0xff]
      %v328 = vld [vmem:[%s287 + $0x40] sm:$0x3]
      %v329 = vld [vmem:[%s287 + $0x48] sm:$0xff]
      %v330 = vld [vmem:[%s287 + $0x50] sm:$0xff]
      %v331 = vld [vmem:[%s287 + $0x58] sm:$0x3]
      %v332 = vld [vmem:[%s287 + $0x60] sm:$0xff]
      %v333 = vld [vmem:[%s287 + $0x68] sm:$0xff]
      %v334 = vld [vmem:[%s287 + $0x70] sm:$0x3]
      %v335 = vld [vmem:[%s287 + $0x78] sm:$0xff]
      %v336 = vld [vmem:[%s287 + $0x80] sm:$0xff]
      %v337 = vld [vmem:[%s287 + $0x88] sm:$0x3]
      %v338 = vld [vmem:[%s287 + $0x90] sm:$0xff]
      %v339 = vld [vmem:[%s287 + $0x98] sm:$0xff]
      %v340 = vld [vmem:[%s287 + $0xa0] sm:$0x3]
      %v341 = vld [vmem:[%s287 + $0xa8] sm:$0xff]
      %v342 = vld [vmem:[%s287 + $0xb0] sm:$0xff]
      %v343 = vld [vmem:[%s287 + $0xb8] sm:$0x3]
      %v344 = vld [vmem:[%s287 + $0xc0] sm:$0xff]
      %v345 = vld [vmem:[%s287 + $0xc8] sm:$0xff]
      %v346 = vld [vmem:[%s287 + $0xd0] sm:$0x3]
      %v347 = vld [vmem:[%s287 + $0xd8] sm:$0xff]
      %v348 = vld [vmem:[%s287 + $0xe0] sm:$0xff]
      %v349 = vld [vmem:[%s287 + $0xe8] sm:$0x3]
      %v350 = vld [vmem:[%s287 + $0xf0] sm:$0xff]
      %v351 = vld [vmem:[%s287 + $0xf8] sm:$0xff]
      %v352 = vld [vmem:[%s287 + $0x100] sm:$0x3]
      %v353 = vld [vmem:[%s287 + $0x108] sm:$0xff]
      %v354 = vld [vmem:[%s287 + $0x110] sm:$0xff]
      %v355 = vld [vmem:[%s287 + $0x118] sm:$0x3]
      %v356 = vld [vmem:[%s287 + $0x120] sm:$0xff]
      %v357 = vld [vmem:[%s287 + $0x128] sm:$0xff]
      %v358 = vld [vmem:[%s287 + $0x130] sm:$0x3]
      %v359 = vld [vmem:[%s287 + $0x138] sm:$0xff]
      %v360 = vld [vmem:[%s287 + $0x140] sm:$0xff]
      %v361 = vld [vmem:[%s287 + $0x148] sm:$0x3]
      %v362 = vld [vmem:[%s287 + $0x150] sm:$0xff]
      %v363 = vld [vmem:[%s287 + $0x158] sm:$0xff]
      %v364 = vld [vmem:[%s287 + $0x160] sm:$0x3]
      %v365 = vld [vmem:[%s287 + $0x168] sm:$0xff]
      %v366 = vld [vmem:[%s287 + $0x170] sm:$0xff]
      %v367 = vld [vmem:[%s287 + $0x178] sm:$0x3]
      %vm368 = vcmask 31744
      %369 = vst.msk [vmem:[#allocation2] sm:$0xff] %vm368, %v320
      %370 = vst.msk [vmem:[#allocation2 + $0x8] sm:$0xff] %vm368, %v321
      %vm371 = vcmask 25600
      %372 = vst.msk [vmem:[#allocation2 + $0x10] sm:$0x3] %vm371, %v322
      %373 = vst.msk [vmem:[#allocation2 + $0x18] sm:$0xff] %vm368, %v323
      %374 = vst.msk [vmem:[#allocation2 + $0x20] sm:$0xff] %vm368, %v324
      %375 = vst.msk [vmem:[#allocation2 + $0x28] sm:$0x3] %vm371, %v325
      %376 = vst.msk [vmem:[#allocation2 + $0x30] sm:$0xff] %vm368, %v326
      %377 = vst.msk [vmem:[#allocation2 + $0x38] sm:$0xff] %vm368, %v327
      %378 = vst.msk [vmem:[#allocation2 + $0x40] sm:$0x3] %vm371, %v328
      %379 = vst.msk [vmem:[#allocation2 + $0x48] sm:$0xff] %vm368, %v329
      %380 = vst.msk [vmem:[#allocation2 + $0x50] sm:$0xff] %vm368, %v330
      %381 = vst.msk [vmem:[#allocation2 + $0x58] sm:$0x3] %vm371, %v331
      %382 = vst.msk [vmem:[#allocation2 + $0x60] sm:$0xff] %vm368, %v332
      %383 = vst.msk [vmem:[#allocation2 + $0x68] sm:$0xff] %vm368, %v333
      %384 = vst.msk [vmem:[#allocation2 + $0x70] sm:$0x3] %vm371, %v334
      %385 = vst.msk [vmem:[#allocation2 + $0x78] sm:$0xff] %vm368, %v335
      %386 = vst.msk [vmem:[#allocation2 + $0x80] sm:$0xff] %vm368, %v336
      %387 = vst.msk [vmem:[#allocation2 + $0x88] sm:$0x3] %vm371, %v337
      %388 = vst.msk [vmem:[#allocation2 + $0x90] sm:$0xff] %vm368, %v338
      %389 = vst.msk [vmem:[#allocation2 + $0x98] sm:$0xff] %vm368, %v339
      %390 = vst.msk [vmem:[#allocation2 + $0xa0] sm:$0x3] %vm371, %v340
      %391 = vst.msk [vmem:[#allocation2 + $0xa8] sm:$0xff] %vm368, %v341
      %392 = vst.msk [vmem:[#allocation2 + $0xb0] sm:$0xff] %vm368, %v342
      %393 = vst.msk [vmem:[#allocation2 + $0xb8] sm:$0x3] %vm371, %v343
      %394 = vst.msk [vmem:[#allocation2 + $0xc0] sm:$0xff] %vm368, %v344
      %395 = vst.msk [vmem:[#allocation2 + $0xc8] sm:$0xff] %vm368, %v345
      %396 = vst.msk [vmem:[#allocation2 + $0xd0] sm:$0x3] %vm371, %v346
      %397 = vst.msk [vmem:[#allocation2 + $0xd8] sm:$0xff] %vm368, %v347
      %398 = vst.msk [vmem:[#allocation2 + $0xe0] sm:$0xff] %vm368, %v348
      %399 = vst.msk [vmem:[#allocation2 + $0xe8] sm:$0x3] %vm371, %v349
      %400 = vst.msk [vmem:[#allocation2 + $0xf0] sm:$0xff] %vm368, %v350
      %401 = vst.msk [vmem:[#allocation2 + $0xf8] sm:$0xff] %vm368, %v351
      %402 = vst.msk [vmem:[#allocation2 + $0x100] sm:$0x3] %vm371, %v352
      %403 = vst.msk [vmem:[#allocation2 + $0x108] sm:$0xff] %vm368, %v353
      %404 = vst.msk [vmem:[#allocation2 + $0x110] sm:$0xff] %vm368, %v354
      %405 = vst.msk [vmem:[#allocation2 + $0x118] sm:$0x3] %vm371, %v355
      %406 = vst.msk [vmem:[#allocation2 + $0x120] sm:$0xff] %vm368, %v356
      %407 = vst.msk [vmem:[#allocation2 + $0x128] sm:$0xff] %vm368, %v357
      %408 = vst.msk [vmem:[#allocation2 + $0x130] sm:$0x3] %vm371, %v358
      %409 = vst.msk [vmem:[#allocation2 + $0x138] sm:$0xff] %vm368, %v359
      %410 = vst.msk [vmem:[#allocation2 + $0x140] sm:$0xff] %vm368, %v360
      %411 = vst.msk [vmem:[#allocation2 + $0x148] sm:$0x3] %vm371, %v361
      %412 = vst.msk [vmem:[#allocation2 + $0x150] sm:$0xff] %vm368, %v362
      %413 = vst.msk [vmem:[#allocation2 + $0x158] sm:$0xff] %vm368, %v363
      %414 = vst.msk [vmem:[#allocation2 + $0x160] sm:$0x3] %vm371, %v364
      %415 = vst.msk [vmem:[#allocation2 + $0x168] sm:$0xff] %vm368, %v365
      %416 = vst.msk [vmem:[#allocation2 + $0x170] sm:$0xff] %vm368, %v366
      %417 = vst.msk [vmem:[#allocation2 + $0x178] sm:$0x3] %vm371, %v367
      %v418 = vld [vmem:[%s305] sm:$0xff]
      %v419 = vld [vmem:[%s305 + $0x8] sm:$0xff]
      %v420 = vld [vmem:[%s305 + $0x10] sm:$0x3]
      %v421 = vld [vmem:[%s305 + $0x18] sm:$0xff]
      %v422 = vld [vmem:[%s305 + $0x20] sm:$0xff]
      %v423 = vld [vmem:[%s305 + $0x28] sm:$0x3]
      %s424 = scalar_lea.vmem [#allocation2], 384
      %425 = vst.msk [vmem:[%s424] sm:$0xff] %vm368, %v418
      %426 = vst.msk [vmem:[%s424 + $0x8] sm:$0xff] %vm368, %v419
      %427 = vst.msk [vmem:[%s424 + $0x10] sm:$0x3] %vm371, %v420
      %428 = vst.msk [vmem:[%s424 + $0x18] sm:$0xff] %vm368, %v421
      %429 = vst.msk [vmem:[%s424 + $0x20] sm:$0xff] %vm368, %v422
      %430 = vst.msk [vmem:[%s424 + $0x28] sm:$0x3] %vm371, %v423
      %v431 = vld [vmem:[%s3] sm:$0x1]
      %v432 = vld [vmem:[#allocation2] sm:$0xff]
      %v433 = vld [vmem:[#allocation2 + $0x8] sm:$0xff]
      %v434 = vld [vmem:[#allocation2 + $0x18] sm:$0xff]
      %v435 = vld [vmem:[#allocation2 + $0x20] sm:$0xff]
      %v436 = vld [vmem:[#allocation2 + $0x30] sm:$0xff]
      %v437 = vld [vmem:[#allocation2 + $0x38] sm:$0xff]
      %v438 = vld [vmem:[#allocation2 + $0x48] sm:$0xff]
      %v439 = vld [vmem:[#allocation2 + $0x50] sm:$0xff]
      %v440 = vld [vmem:[#allocation2 + $0x60] sm:$0xff]
      %v441 = vld [vmem:[#allocation2 + $0x68] sm:$0xff]
      %v442 = vld [vmem:[#allocation2 + $0x78] sm:$0xff]
      %v443 = vld [vmem:[#allocation2 + $0x80] sm:$0xff]
      %v444 = vld [vmem:[#allocation2 + $0x90] sm:$0xff]
      %v445 = vld [vmem:[#allocation2 + $0x98] sm:$0xff]
      %v446 = vld [vmem:[#allocation2 + $0xa8] sm:$0xff]
      %v447 = vld [vmem:[#allocation2 + $0xb0] sm:$0xff]
      %v448 = vld [vmem:[#allocation2 + $0xc0] sm:$0xff]
      %v449 = vld [vmem:[#allocation2 + $0xc8] sm:$0xff]
      %v450 = vld [vmem:[#allocation2 + $0xd8] sm:$0xff]
      %v451 = vld [vmem:[#allocation2 + $0xe0] sm:$0xff]
      %v452 = vld [vmem:[#allocation2 + $0xf0] sm:$0xff]
      %v453 = vld [vmem:[#allocation2 + $0xf8] sm:$0xff]
      %v454 = vld [vmem:[#allocation2 + $0x108] sm:$0xff]
      %v455 = vld [vmem:[#allocation2 + $0x110] sm:$0xff]
      %v456 = vld [vmem:[#allocation2 + $0x120] sm:$0xff]
      %v457 = vld [vmem:[#allocation2 + $0x128] sm:$0xff]
      %v458 = vld [vmem:[#allocation2 + $0x138] sm:$0xff]
      %v459 = vld [vmem:[#allocation2 + $0x140] sm:$0xff]
      %v460 = vld [vmem:[#allocation2 + $0x150] sm:$0xff]
      %v461 = vld [vmem:[#allocation2 + $0x158] sm:$0xff]
      %v462 = vld [vmem:[#allocation2 + $0x168] sm:$0xff]
      %v463 = vld [vmem:[#allocation2 + $0x170] sm:$0xff]
      %v464 = vld [vmem:[#allocation2 + $0x1] sm:$0xff]
      %v465 = vld [vmem:[#allocation2 + $0x9] sm:$0xff]
      %v466 = vld [vmem:[#allocation2 + $0x19] sm:$0xff]
      %v467 = vld [vmem:[#allocation2 + $0x21] sm:$0xff]
      %v468 = vld [vmem:[#allocation2 + $0x31] sm:$0xff]
      %v469 = vld [vmem:[#allocation2 + $0x39] sm:$0xff]
      %v470 = vld [vmem:[#allocation2 + $0x49] sm:$0xff]
      %v471 = vld [vmem:[#allocation2 + $0x51] sm:$0xff]
      %v472 = vld [vmem:[#allocation2 + $0x61] sm:$0xff]
      %v473 = vld [vmem:[#allocation2 + $0x69] sm:$0xff]
      %v474 = vld [vmem:[#allocation2 + $0x79] sm:$0xff]
      %v475 = vld [vmem:[#allocation2 + $0x81] sm:$0xff]
      %v476 = vld [vmem:[#allocation2 + $0x91] sm:$0xff]
      %v477 = vld [vmem:[#allocation2 + $0x99] sm:$0xff]
      %v478 = vld [vmem:[#allocation2 + $0xa9] sm:$0xff]
      %v479 = vld [vmem:[#allocation2 + $0xb1] sm:$0xff]
      %v480 = vld [vmem:[#allocation2 + $0xc1] sm:$0xff]
      %v481 = vld [vmem:[#allocation2 + $0xc9] sm:$0xff]
      %v482 = vld [vmem:[#allocation2 + $0xd9] sm:$0xff]
      %v483 = vld [vmem:[#allocation2 + $0xe1] sm:$0xff]
      %v484 = vld [vmem:[#allocation2 + $0xf1] sm:$0xff]
      %v485 = vld [vmem:[#allocation2 + $0xf9] sm:$0xff]
      %v486 = vld [vmem:[#allocation2 + $0x109] sm:$0xff]
      %v487 = vld [vmem:[#allocation2 + $0x111] sm:$0xff]
      %v488 = vld [vmem:[#allocation2 + $0x121] sm:$0xff]
      %v489 = vld [vmem:[#allocation2 + $0x129] sm:$0xff]
      %v490 = vld [vmem:[#allocation2 + $0x139] sm:$0xff]
      %v491 = vld [vmem:[#allocation2 + $0x141] sm:$0xff]
      %v492 = vld [vmem:[#allocation2 + $0x151] sm:$0xff]
      %v493 = vld [vmem:[#allocation2 + $0x159] sm:$0xff]
      %v494 = vld [vmem:[#allocation2 + $0x169] sm:$0xff]
      %v495 = vld [vmem:[#allocation2 + $0x171] sm:$0xff]
      %s496 = scalar_lea.vmem [#allocation2], 24
      %v497 = vld [vmem:[%s496] sm:$0xff]
      %v498 = vld [vmem:[%s496 + $0x8] sm:$0xff]
      %v499 = vld [vmem:[%s496 + $0x18] sm:$0xff]
      %v500 = vld [vmem:[%s496 + $0x20] sm:$0xff]
      %v501 = vld [vmem:[%s496 + $0x30] sm:$0xff]
      %v502 = vld [vmem:[%s496 + $0x38] sm:$0xff]
      %v503 = vld [vmem:[%s496 + $0x48] sm:$0xff]
      %v504 = vld [vmem:[%s496 + $0x50] sm:$0xff]
      %v505 = vld [vmem:[%s496 + $0x60] sm:$0xff]
      %v506 = vld [vmem:[%s496 + $0x68] sm:$0xff]
      %v507 = vld [vmem:[%s496 + $0x78] sm:$0xff]
      %v508 = vld [vmem:[%s496 + $0x80] sm:$0xff]
      %v509 = vld [vmem:[%s496 + $0x90] sm:$0xff]
      %v510 = vld [vmem:[%s496 + $0x98] sm:$0xff]
      %v511 = vld [vmem:[%s496 + $0xa8] sm:$0xff]
      %v512 = vld [vmem:[%s496 + $0xb0] sm:$0xff]
      %v513 = vld [vmem:[%s496 + $0xc0] sm:$0xff]
      %v514 = vld [vmem:[%s496 + $0xc8] sm:$0xff]
      %v515 = vld [vmem:[%s496 + $0xd8] sm:$0xff]
      %v516 = vld [vmem:[%s496 + $0xe0] sm:$0xff]
      %v517 = vld [vmem:[%s496 + $0xf0] sm:$0xff]
      %v518 = vld [vmem:[%s496 + $0xf8] sm:$0xff]
      %v519 = vld [vmem:[%s496 + $0x108] sm:$0xff]
      %v520 = vld [vmem:[%s496 + $0x110] sm:$0xff]
      %v521 = vld [vmem:[%s496 + $0x120] sm:$0xff]
      %v522 = vld [vmem:[%s496 + $0x128] sm:$0xff]
      %v523 = vld [vmem:[%s496 + $0x138] sm:$0xff]
      %v524 = vld [vmem:[%s496 + $0x140] sm:$0xff]
      %v525 = vld [vmem:[%s496 + $0x150] sm:$0xff]
      %v526 = vld [vmem:[%s496 + $0x158] sm:$0xff]
      %v527 = vld [vmem:[%s496 + $0x168] sm:$0xff]
      %v528 = vld [vmem:[%s496 + $0x170] sm:$0xff]
      %v529 = vld [vmem:[%s496 + $0x1] sm:$0xff]
      %v530 = vld [vmem:[%s496 + $0x9] sm:$0xff]
      %v531 = vld [vmem:[%s496 + $0x19] sm:$0xff]
      %v532 = vld [vmem:[%s496 + $0x21] sm:$0xff]
      %v533 = vld [vmem:[%s496 + $0x31] sm:$0xff]
      %v534 = vld [vmem:[%s496 + $0x39] sm:$0xff]
      %v535 = vld [vmem:[%s496 + $0x49] sm:$0xff]
      %v536 = vld [vmem:[%s496 + $0x51] sm:$0xff]
      %v537 = vld [vmem:[%s496 + $0x61] sm:$0xff]
      %v538 = vld [vmem:[%s496 + $0x69] sm:$0xff]
      %v539 = vld [vmem:[%s496 + $0x79] sm:$0xff]
      %v540 = vld [vmem:[%s496 + $0x81] sm:$0xff]
      %v541 = vld [vmem:[%s496 + $0x91] sm:$0xff]
      %v542 = vld [vmem:[%s496 + $0x99] sm:$0xff]
      %v543 = vld [vmem:[%s496 + $0xa9] sm:$0xff]
      %v544 = vld [vmem:[%s496 + $0xb1] sm:$0xff]
      %v545 = vld [vmem:[%s496 + $0xc1] sm:$0xff]
      %v546 = vld [vmem:[%s496 + $0xc9] sm:$0xff]
      %v547 = vld [vmem:[%s496 + $0xd9] sm:$0xff]
      %v548 = vld [vmem:[%s496 + $0xe1] sm:$0xff]
      %v549 = vld [vmem:[%s496 + $0xf1] sm:$0xff]
      %v550 = vld [vmem:[%s496 + $0xf9] sm:$0xff]
      %v551 = vld [vmem:[%s496 + $0x109] sm:$0xff]
      %v552 = vld [vmem:[%s496 + $0x111] sm:$0xff]
      %v553 = vld [vmem:[%s496 + $0x121] sm:$0xff]
      %v554 = vld [vmem:[%s496 + $0x129] sm:$0xff]
      %v555 = vld [vmem:[%s496 + $0x139] sm:$0xff]
      %v556 = vld [vmem:[%s496 + $0x141] sm:$0xff]
      %v557 = vld [vmem:[%s496 + $0x151] sm:$0xff]
      %v558 = vld [vmem:[%s496 + $0x159] sm:$0xff]
      %v559 = vld [vmem:[%s496 + $0x169] sm:$0xff]
      %v560 = vld [vmem:[%s496 + $0x171] sm:$0xff]
      %593 = vrot.lane.b32.xlu0 %v464, 4
      %v594 = vpop.permute.xlu0 %593
      %595 = vrot.lane.b32.xlu0 %v465, 4
      %v596 = vpop.permute.xlu0 %595
      %597 = vrot.lane.b32.xlu0 %v466, 4
      %v598 = vpop.permute.xlu0 %597
      %599 = vrot.lane.b32.xlu0 %v467, 4
      %v600 = vpop.permute.xlu0 %599
      %601 = vrot.lane.b32.xlu0 %v468, 4
      %v602 = vpop.permute.xlu0 %601
      %603 = vrot.lane.b32.xlu0 %v469, 4
      %v604 = vpop.permute.xlu0 %603
      %605 = vrot.lane.b32.xlu0 %v470, 4
      %v606 = vpop.permute.xlu0 %605
      %607 = vrot.lane.b32.xlu0 %v471, 4
      %v608 = vpop.permute.xlu0 %607
      %609 = vrot.lane.b32.xlu0 %v472, 4
      %v610 = vpop.permute.xlu0 %609
      %611 = vrot.lane.b32.xlu0 %v473, 4
      %v612 = vpop.permute.xlu0 %611
      %613 = vrot.lane.b32.xlu0 %v474, 4
      %v614 = vpop.permute.xlu0 %613
      %615 = vrot.lane.b32.xlu0 %v475, 4
      %v616 = vpop.permute.xlu0 %615
      %617 = vrot.lane.b32.xlu0 %v476, 4
      %v618 = vpop.permute.xlu0 %617
      %619 = vrot.lane.b32.xlu0 %v477, 4
      %v620 = vpop.permute.xlu0 %619
      %621 = vrot.lane.b32.xlu0 %v478, 4
      %v622 = vpop.permute.xlu0 %621
      %623 = vrot.lane.b32.xlu0 %v479, 4
      %v624 = vpop.permute.xlu0 %623
      %625 = vrot.lane.b32.xlu0 %v480, 4
      %v626 = vpop.permute.xlu0 %625
      %627 = vrot.lane.b32.xlu0 %v481, 4
      %v628 = vpop.permute.xlu0 %627
      %629 = vrot.lane.b32.xlu0 %v482, 4
      %v630 = vpop.permute.xlu0 %629
      %631 = vrot.lane.b32.xlu0 %v483, 4
      %v632 = vpop.permute.xlu0 %631
      %633 = vrot.lane.b32.xlu0 %v484, 4
      %v634 = vpop.permute.xlu0 %633
      %635 = vrot.lane.b32.xlu0 %v485, 4
      %v636 = vpop.permute.xlu0 %635
      %637 = vrot.lane.b32.xlu0 %v486, 4
      %v638 = vpop.permute.xlu0 %637
      %639 = vrot.lane.b32.xlu0 %v487, 4
      %v640 = vpop.permute.xlu0 %639
      %641 = vrot.lane.b32.xlu0 %v488, 4
      %v642 = vpop.permute.xlu0 %641
      %643 = vrot.lane.b32.xlu0 %v489, 4
      %v644 = vpop.permute.xlu0 %643
      %645 = vrot.lane.b32.xlu0 %v490, 4
      %v646 = vpop.permute.xlu0 %645
      %647 = vrot.lane.b32.xlu0 %v491, 4
      %v648 = vpop.permute.xlu0 %647
      %649 = vrot.lane.b32.xlu0 %v492, 4
      %v650 = vpop.permute.xlu0 %649
      %651 = vrot.lane.b32.xlu0 %v493, 4
      %v652 = vpop.permute.xlu0 %651
      %653 = vrot.lane.b32.xlu0 %v494, 4
      %v654 = vpop.permute.xlu0 %653
      %655 = vrot.lane.b32.xlu0 %v495, 4
      %v656 = vpop.permute.xlu0 %655
      %721 = vrot.lane.b32.xlu0 %v497, 8
      %v722 = vpop.permute.xlu0 %721
      %723 = vrot.lane.b32.xlu0 %v498, 8
      %v724 = vpop.permute.xlu0 %723
      %725 = vrot.lane.b32.xlu0 %v499, 8
      %v726 = vpop.permute.xlu0 %725
      %727 = vrot.lane.b32.xlu0 %v500, 8
      %v728 = vpop.permute.xlu0 %727
      %729 = vrot.lane.b32.xlu0 %v501, 8
      %v730 = vpop.permute.xlu0 %729
      %731 = vrot.lane.b32.xlu0 %v502, 8
      %v732 = vpop.permute.xlu0 %731
      %733 = vrot.lane.b32.xlu0 %v503, 8
      %v734 = vpop.permute.xlu0 %733
      %735 = vrot.lane.b32.xlu0 %v504, 8
      %v736 = vpop.permute.xlu0 %735
      %737 = vrot.lane.b32.xlu0 %v505, 8
      %v738 = vpop.permute.xlu0 %737
      %739 = vrot.lane.b32.xlu0 %v506, 8
      %v740 = vpop.permute.xlu0 %739
      %741 = vrot.lane.b32.xlu0 %v507, 8
      %v742 = vpop.permute.xlu0 %741
      %743 = vrot.lane.b32.xlu0 %v508, 8
      %v744 = vpop.permute.xlu0 %743
      %745 = vrot.lane.b32.xlu0 %v509, 8
      %v746 = vpop.permute.xlu0 %745
      %747 = vrot.lane.b32.xlu0 %v510, 8
      %v748 = vpop.permute.xlu0 %747
      %749 = vrot.lane.b32.xlu0 %v511, 8
      %v750 = vpop.permute.xlu0 %749
      %751 = vrot.lane.b32.xlu0 %v512, 8
      %v752 = vpop.permute.xlu0 %751
      %753 = vrot.lane.b32.xlu0 %v513, 8
      %v754 = vpop.permute.xlu0 %753
      %755 = vrot.lane.b32.xlu0 %v514, 8
      %v756 = vpop.permute.xlu0 %755
      %757 = vrot.lane.b32.xlu0 %v515, 8
      %v758 = vpop.permute.xlu0 %757
      %759 = vrot.lane.b32.xlu0 %v516, 8
      %v760 = vpop.permute.xlu0 %759
      %761 = vrot.lane.b32.xlu0 %v517, 8
      %v762 = vpop.permute.xlu0 %761
      %763 = vrot.lane.b32.xlu0 %v518, 8
      %v764 = vpop.permute.xlu0 %763
      %765 = vrot.lane.b32.xlu0 %v519, 8
      %v766 = vpop.permute.xlu0 %765
      %767 = vrot.lane.b32.xlu0 %v520, 8
      %v768 = vpop.permute.xlu0 %767
      %769 = vrot.lane.b32.xlu0 %v521, 8
      %v770 = vpop.permute.xlu0 %769
      %771 = vrot.lane.b32.xlu0 %v522, 8
      %v772 = vpop.permute.xlu0 %771
      %773 = vrot.lane.b32.xlu0 %v523, 8
      %v774 = vpop.permute.xlu0 %773
      %775 = vrot.lane.b32.xlu0 %v524, 8
      %v776 = vpop.permute.xlu0 %775
      %777 = vrot.lane.b32.xlu0 %v525, 8
      %v778 = vpop.permute.xlu0 %777
      %779 = vrot.lane.b32.xlu0 %v526, 8
      %v780 = vpop.permute.xlu0 %779
      %781 = vrot.lane.b32.xlu0 %v527, 8
      %v782 = vpop.permute.xlu0 %781
      %783 = vrot.lane.b32.xlu0 %v528, 8
      %v784 = vpop.permute.xlu0 %783
      %849 = vrot.lane.b32.xlu0 %v529, 12
      %v850 = vpop.permute.xlu0 %849
      %851 = vrot.lane.b32.xlu0 %v530, 12
      %v852 = vpop.permute.xlu0 %851
      %853 = vrot.lane.b32.xlu0 %v531, 12
      %v854 = vpop.permute.xlu0 %853
      %855 = vrot.lane.b32.xlu0 %v532, 12
      %v856 = vpop.permute.xlu0 %855
      %857 = vrot.lane.b32.xlu0 %v533, 12
      %v858 = vpop.permute.xlu0 %857
      %859 = vrot.lane.b32.xlu0 %v534, 12
      %v860 = vpop.permute.xlu0 %859
      %861 = vrot.lane.b32.xlu0 %v535, 12
      %v862 = vpop.permute.xlu0 %861
      %863 = vrot.lane.b32.xlu0 %v536, 12
      %v864 = vpop.permute.xlu0 %863
      %865 = vrot.lane.b32.xlu0 %v537, 12
      %v866 = vpop.permute.xlu0 %865
      %867 = vrot.lane.b32.xlu0 %v538, 12
      %v868 = vpop.permute.xlu0 %867
      %869 = vrot.lane.b32.xlu0 %v539, 12
      %v870 = vpop.permute.xlu0 %869
      %871 = vrot.lane.b32.xlu0 %v540, 12
      %v872 = vpop.permute.xlu0 %871
      %873 = vrot.lane.b32.xlu0 %v541, 12
      %v874 = vpop.permute.xlu0 %873
      %875 = vrot.lane.b32.xlu0 %v542, 12
      %v876 = vpop.permute.xlu0 %875
      %877 = vrot.lane.b32.xlu0 %v543, 12
      %v878 = vpop.permute.xlu0 %877
      %879 = vrot.lane.b32.xlu0 %v544, 12
      %v880 = vpop.permute.xlu0 %879
      %881 = vrot.lane.b32.xlu0 %v545, 12
      %v882 = vpop.permute.xlu0 %881
      %883 = vrot.lane.b32.xlu0 %v546, 12
      %v884 = vpop.permute.xlu0 %883
      %885 = vrot.lane.b32.xlu0 %v547, 12
      %v886 = vpop.permute.xlu0 %885
      %887 = vrot.lane.b32.xlu0 %v548, 12
      %v888 = vpop.permute.xlu0 %887
      %889 = vrot.lane.b32.xlu0 %v549, 12
      %v890 = vpop.permute.xlu0 %889
      %891 = vrot.lane.b32.xlu0 %v550, 12
      %v892 = vpop.permute.xlu0 %891
      %893 = vrot.lane.b32.xlu0 %v551, 12
      %v894 = vpop.permute.xlu0 %893
      %895 = vrot.lane.b32.xlu0 %v552, 12
      %v896 = vpop.permute.xlu0 %895
      %897 = vrot.lane.b32.xlu0 %v553, 12
      %v898 = vpop.permute.xlu0 %897
      %899 = vrot.lane.b32.xlu0 %v554, 12
      %v900 = vpop.permute.xlu0 %899
      %901 = vrot.lane.b32.xlu0 %v555, 12
      %v902 = vpop.permute.xlu0 %901
      %903 = vrot.lane.b32.xlu0 %v556, 12
      %v904 = vpop.permute.xlu0 %903
      %905 = vrot.lane.b32.xlu0 %v557, 12
      %v906 = vpop.permute.xlu0 %905
      %907 = vrot.lane.b32.xlu0 %v558, 12
      %v908 = vpop.permute.xlu0 %907
      %909 = vrot.lane.b32.xlu0 %v559, 12
      %v910 = vpop.permute.xlu0 %909
      %911 = vrot.lane.b32.xlu0 %v560, 12
      %v912 = vpop.permute.xlu0 %911
      %v945 = vsel %vm368, %v432, %v594
      %v946 = vsel %vm368, %v433, %v596
      %v947 = vsel %vm368, %v434, %v598
      %v948 = vsel %vm368, %v435, %v600
      %v949 = vsel %vm368, %v436, %v602
      %v950 = vsel %vm368, %v437, %v604
      %v951 = vsel %vm368, %v438, %v606
      %v952 = vsel %vm368, %v439, %v608
      %v953 = vsel %vm368, %v440, %v610
      %v954 = vsel %vm368, %v441, %v612
      %v955 = vsel %vm368, %v442, %v614
      %v956 = vsel %vm368, %v443, %v616
      %v957 = vsel %vm368, %v444, %v618
      %v958 = vsel %vm368, %v445, %v620
      %v959 = vsel %vm368, %v446, %v622
      %v960 = vsel %vm368, %v447, %v624
      %v961 = vsel %vm368, %v448, %v626
      %v962 = vsel %vm368, %v449, %v628
      %v963 = vsel %vm368, %v450, %v630
      %v964 = vsel %vm368, %v451, %v632
      %v965 = vsel %vm368, %v452, %v634
      %v966 = vsel %vm368, %v453, %v636
      %v967 = vsel %vm368, %v454, %v638
      %v968 = vsel %vm368, %v455, %v640
      %v969 = vsel %vm368, %v456, %v642
      %v970 = vsel %vm368, %v457, %v644
      %v971 = vsel %vm368, %v458, %v646
      %v972 = vsel %vm368, %v459, %v648
      %v973 = vsel %vm368, %v460, %v650
      %v974 = vsel %vm368, %v461, %v652
      %v975 = vsel %vm368, %v462, %v654
      %v976 = vsel %vm368, %v463, %v656
      %vm977 = vcmask 64512
      %v978 = vsel %vm977, %v945, %v722
      %v979 = vsel %vm977, %v946, %v724
      %v980 = vsel %vm977, %v947, %v726
      %v981 = vsel %vm977, %v948, %v728
      %v982 = vsel %vm977, %v949, %v730
      %v983 = vsel %vm977, %v950, %v732
      %v984 = vsel %vm977, %v951, %v734
      %v985 = vsel %vm977, %v952, %v736
      %v986 = vsel %vm977, %v953, %v738
      %v987 = vsel %vm977, %v954, %v740
      %v988 = vsel %vm977, %v955, %v742
      %v989 = vsel %vm977, %v956, %v744
      %v990 = vsel %vm977, %v957, %v746
      %v991 = vsel %vm977, %v958, %v748
      %v992 = vsel %vm977, %v959, %v750
      %v993 = vsel %vm977, %v960, %v752
      %v994 = vsel %vm977, %v961, %v754
      %v995 = vsel %vm977, %v962, %v756
      %v996 = vsel %vm977, %v963, %v758
      %v997 = vsel %vm977, %v964, %v760
      %v998 = vsel %vm977, %v965, %v762
      %v999 = vsel %vm977, %v966, %v764
      %v1000 = vsel %vm977, %v967, %v766
      %v1001 = vsel %vm977, %v968, %v768
      %v1002 = vsel %vm977, %v969, %v770
      %v1003 = vsel %vm977, %v970, %v772
      %v1004 = vsel %vm977, %v971, %v774
      %v1005 = vsel %vm977, %v972, %v776
      %v1006 = vsel %vm977, %v973, %v778
      %v1007 = vsel %vm977, %v974, %v780
      %v1008 = vsel %vm977, %v975, %v782
      %v1009 = vsel %vm977, %v976, %v784
      %vm1010 = vcmask 97280
      %v1011 = vsel %vm1010, %v978, %v850
      %v1012 = vsel %vm1010, %v979, %v852
      %v1013 = vsel %vm1010, %v980, %v854
      %v1014 = vsel %vm1010, %v981, %v856
      %v1015 = vsel %vm1010, %v982, %v858
      %v1016 = vsel %vm1010, %v983, %v860
      %v1017 = vsel %vm1010, %v984, %v862
      %v1018 = vsel %vm1010, %v985, %v864
      %v1019 = vsel %vm1010, %v986, %v866
      %v1020 = vsel %vm1010, %v987, %v868
      %v1021 = vsel %vm1010, %v988, %v870
      %v1022 = vsel %vm1010, %v989, %v872
      %v1023 = vsel %vm1010, %v990, %v874
      %v1024 = vsel %vm1010, %v991, %v876
      %v1025 = vsel %vm1010, %v992, %v878
      %v1026 = vsel %vm1010, %v993, %v880
      %v1027 = vsel %vm1010, %v994, %v882
      %v1028 = vsel %vm1010, %v995, %v884
      %v1029 = vsel %vm1010, %v996, %v886
      %v1030 = vsel %vm1010, %v997, %v888
      %v1031 = vsel %vm1010, %v998, %v890
      %v1032 = vsel %vm1010, %v999, %v892
      %v1033 = vsel %vm1010, %v1000, %v894
      %v1034 = vsel %vm1010, %v1001, %v896
      %v1035 = vsel %vm1010, %v1002, %v898
      %v1036 = vsel %vm1010, %v1003, %v900
      %v1037 = vsel %vm1010, %v1004, %v902
      %v1038 = vsel %vm1010, %v1005, %v904
      %v1039 = vsel %vm1010, %v1006, %v906
      %v1040 = vsel %vm1010, %v1007, %v908
      %v1041 = vsel %vm1010, %v1008, %v910
      %v1042 = vsel %vm1010, %v1009, %v912
      %v1043 = vld [vmem:[%s2] sm:$0xff]
      %v1044 = vld [vmem:[%s2 + $0x8] sm:$0xff]
      %v1046 = vlaneseq
      %v1047 = vshrl.u32 %v1046, 7
      %v1048 = vsub.s32 0, %v1047
      %v1049 = vrot.slane %v431, %v1048
      %vm1051 = vcmask 130048
      %v1053 = vsel %vm1051, %v1011, 0
      %v1056 = vsel %vm1051, %v1012, 0
      %v1059 = vsel %vm1051, %v1013, 0
      %v1062 = vsel %vm1051, %v1014, 0
      %v1065 = vsel %vm1051, %v1015, 0
      %v1068 = vsel %vm1051, %v1016, 0
      %v1071 = vsel %vm1051, %v1017, 0
      %v1074 = vsel %vm1051, %v1018, 0
      %v1077 = vsel %vm1051, %v1019, 0
      %v1080 = vsel %vm1051, %v1020, 0
      %v1083 = vsel %vm1051, %v1021, 0
      %v1086 = vsel %vm1051, %v1022, 0
      %v1089 = vsel %vm1051, %v1023, 0
      %v1092 = vsel %vm1051, %v1024, 0
      %v1095 = vsel %vm1051, %v1025, 0
      %v1098 = vsel %vm1051, %v1026, 0
      %v1101 = vsel %vm1051, %v1027, 0
      %v1104 = vsel %vm1051, %v1028, 0
      %v1107 = vsel %vm1051, %v1029, 0
      %v1110 = vsel %vm1051, %v1030, 0
      %v1113 = vsel %vm1051, %v1031, 0
      %v1116 = vsel %vm1051, %v1032, 0
      %v1119 = vsel %vm1051, %v1033, 0
      %v1122 = vsel %vm1051, %v1034, 0
      %v1125 = vsel %vm1051, %v1035, 0
      %v1128 = vsel %vm1051, %v1036, 0
      %v1131 = vsel %vm1051, %v1037, 0
      %v1134 = vsel %vm1051, %v1038, 0
      %v1137 = vsel %vm1051, %v1039, 0
      %v1140 = vsel %vm1051, %v1040, 0
      %v1143 = vsel %vm1051, %v1041, 0
      %v1146 = vsel %vm1051, %v1042, 0
      %1148 = vmatprep.subr.mxu0 0.0
      %1149 = vmatpush1.msra.mxu0 %v1043
      %1150 = vmatprep.subr.mxu0 0.0
      %1151 = vmatpush1.msra.mxu0 %v1044
      %1152 = vmatprep.subr.mxu0 0.0
      %1153 = vmatpush1.msra.mxu0 0.0
      %1154 = vmatprep.subr.mxu0 0.0
      %1155 = vmatpush1.msra.mxu0 0.0
      %1156 = vmatprep.subr.mxu0 0.0
      %1157 = vmatpush1.msra.mxu0 0.0
      %1158 = vmatprep.subr.mxu0 0.0
      %1159 = vmatpush1.msra.mxu0 0.0
      %1160 = vmatprep.subr.mxu0 0.0
      %1161 = vmatpush1.msra.mxu0 0.0
      %1162 = vmatprep.subr.mxu0 0.0
      %1163 = vmatpush1.msra.mxu0 0.0
      %1164 = vmatprep.subr.mxu0 0.0
      %1165 = vmatpush1.msra.mxu0 0.0
      %1166 = vmatprep.subr.mxu0 0.0
      %1167 = vmatpush1.msra.mxu0 0.0
      %1168 = vmatprep.subr.mxu0 0.0
      %1169 = vmatpush1.msra.mxu0 0.0
      %1170 = vmatprep.subr.mxu0 0.0
      %1171 = vmatpush1.msra.mxu0 0.0
      %1172 = vmatprep.subr.mxu0 0.0
      %1173 = vmatpush1.msra.mxu0 0.0
      %1174 = vmatprep.subr.mxu0 0.0
      %1175 = vmatpush1.msra.mxu0 0.0
      %1176 = vmatprep.subr.mxu0 0.0
      %1177 = vmatpush1.msra.mxu0 0.0
      %1178 = vmatprep.subr.mxu0 0.0
      %1179 = vmatpush1.msra.mxu0 0.0
      %1180 = vmatprep.subr.mxu0 0.0
      %1181 = vmatpush1.msra.mxu0 0.0
      %1182 = vmatprep.subr.mxu0 0.0
      %1183 = vmatpush1.msra.mxu0 0.0
      %1184 = vmatprep.subr.mxu0 0.0
      %1185 = vmatpush1.msra.mxu0 0.0
      %1186 = vmatprep.subr.mxu0 0.0
      %1187 = vmatpush1.msra.mxu0 0.0
      %1188 = vmatprep.subr.mxu0 0.0
      %1189 = vmatpush1.msra.mxu0 0.0
      %1190 = vmatprep.subr.mxu0 0.0
      %1191 = vmatpush1.msra.mxu0 0.0
      %1192 = vmatprep.subr.mxu0 0.0
      %1193 = vmatpush1.msra.mxu0 0.0
      %1194 = vmatprep.subr.mxu0 0.0
      %1195 = vmatpush1.msra.mxu0 0.0
      %1196 = vmatprep.subr.mxu0 0.0
      %1197 = vmatpush1.msra.mxu0 0.0
      %1198 = vmatprep.subr.mxu0 0.0
      %1199 = vmatpush1.msra.mxu0 0.0
      %1200 = vmatprep.subr.mxu0 0.0
      %1201 = vmatpush1.msra.mxu0 0.0
      %1202 = vmatprep.subr.mxu0 0.0
      %1203 = vmatpush1.msra.mxu0 0.0
      %1204 = vmatprep.subr.mxu0 0.0
      %1205 = vmatpush1.msra.mxu0 0.0
      %1206 = vmatprep.subr.mxu0 0.0
      %1207 = vmatpush1.msra.mxu0 0.0
      %1208 = vmatprep.subr.mxu0 0.0
      %1209 = vmatpush1.msra.mxu0 0.0
      %1210 = vmatprep.subr.mxu0 0.0
      %1211 = vmatpush1.msra.mxu0 0.0
      %1212 = vmatprep.mubr.f32.mxu0 0.0
      %1213 = vmatmul.mubr.f32.gmra.mrb[0].mxu0 %v1053
      %v1214 = vpop.f32.mrb[0].mxu0
      %v1215 = vadd.f32 %v1049, %v1214
      %v1216 = vpop.f32.mrb[0].mxu0
      %1217 = vmatprep.mubr.f32.mxu0 0.0
      %1218 = vmatmul.mubr.f32.gmra.mrb[0].mxu0 %v1056
      %v1219 = vpop.f32.mrb[0].mxu0
      %v1220 = vadd.f32 %v1049, %v1219
      %v1221 = vpop.f32.mrb[0].mxu0
      %1222 = vmatprep.mubr.f32.mxu0 0.0
      %1223 = vmatmul.mubr.f32.gmra.mrb[0].mxu0 %v1059
      %v1224 = vpop.f32.mrb[0].mxu0
      %v1225 = vadd.f32 %v1049, %v1224
      %v1226 = vpop.f32.mrb[0].mxu0
      %1227 = vmatprep.mubr.f32.mxu0 0.0
      %1228 = vmatmul.mubr.f32.gmra.mrb[0].mxu0 %v1062
      %v1229 = vpop.f32.mrb[0].mxu0
      %v1230 = vadd.f32 %v1049, %v1229
      %v1231 = vpop.f32.mrb[0].mxu0
      %1232 = vmatprep.mubr.f32.mxu0 0.0
      %1233 = vmatmul.mubr.f32.gmra.mrb[0].mxu0 %v1065
      %v1234 = vpop.f32.mrb[0].mxu0
      %v1235 = vadd.f32 %v1049, %v1234
      %v1236 = vpop.f32.mrb[0].mxu0
      %1237 = vmatprep.mubr.f32.mxu0 0.0
      %1238 = vmatmul.mubr.f32.gmra.mrb[0].mxu0 %v1068
      %v1239 = vpop.f32.mrb[0].mxu0
      %v1240 = vadd.f32 %v1049, %v1239
      %v1241 = vpop.f32.mrb[0].mxu0
      %1242 = vmatprep.mubr.f32.mxu0 0.0
      %1243 = vmatmul.mubr.f32.gmra.mrb[0].mxu0 %v1071
      %v1244 = vpop.f32.mrb[0].mxu0
      %v1245 = vadd.f32 %v1049, %v1244
      %v1246 = vpop.f32.mrb[0].mxu0
      %1247 = vmatprep.mubr.f32.mxu0 0.0
      %1248 = vmatmul.mubr.f32.gmra.mrb[0].mxu0 %v1074
      %v1249 = vpop.f32.mrb[0].mxu0
      %v1250 = vadd.f32 %v1049, %v1249
      %v1251 = vpop.f32.mrb[0].mxu0
      %1252 = vmatprep.mubr.f32.mxu0 0.0
      %1253 = vmatmul.mubr.f32.gmra.mrb[0].mxu0 %v1077
      %v1254 = vpop.f32.mrb[0].mxu0
      %v1255 = vadd.f32 %v1049, %v1254
      %v1256 = vpop.f32.mrb[0].mxu0
      %1257 = vmatprep.mubr.f32.mxu0 0.0
      %1258 = vmatmul.mubr.f32.gmra.mrb[0].mxu0 %v1080
      %v1259 = vpop.f32.mrb[0].mxu0
      %v1260 = vadd.f32 %v1049, %v1259
      %v1261 = vpop.f32.mrb[0].mxu0
      %1262 = vmatprep.mubr.f32.mxu0 0.0
      %1263 = vmatmul.mubr.f32.gmra.mrb[0].mxu0 %v1083
      %v1264 = vpop.f32.mrb[0].mxu0
      %v1265 = vadd.f32 %v1049, %v1264
      %v1266 = vpop.f32.mrb[0].mxu0
      %1267 = vmatprep.mubr.f32.mxu0 0.0
      %1268 = vmatmul.mubr.f32.gmra.mrb[0].mxu0 %v1086
      %v1269 = vpop.f32.mrb[0].mxu0
      %v1270 = vadd.f32 %v1049, %v1269
      %v1271 = vpop.f32.mrb[0].mxu0
      %1272 = vmatprep.mubr.f32.mxu0 0.0
      %1273 = vmatmul.mubr.f32.gmra.mrb[0].mxu0 %v1089
      %v1274 = vpop.f32.mrb[0].mxu0
      %v1275 = vadd.f32 %v1049, %v1274
      %v1276 = vpop.f32.mrb[0].mxu0
      %1277 = vmatprep.mubr.f32.mxu0 0.0
      %1278 = vmatmul.mubr.f32.gmra.mrb[0].mxu0 %v1092
      %v1279 = vpop.f32.mrb[0].mxu0
      %v1280 = vadd.f32 %v1049, %v1279
      %v1281 = vpop.f32.mrb[0].mxu0
      %1282 = vmatprep.mubr.f32.mxu0 0.0
      %1283 = vmatmul.mubr.f32.gmra.mrb[0].mxu0 %v1095
      %v1284 = vpop.f32.mrb[0].mxu0
      %v1285 = vadd.f32 %v1049, %v1284
      %v1286 = vpop.f32.mrb[0].mxu0
      %1287 = vmatprep.mubr.f32.mxu0 0.0
      %1288 = vmatmul.mubr.f32.gmra.mrb[0].mxu0 %v1098
      %v1289 = vpop.f32.mrb[0].mxu0
      %v1290 = vadd.f32 %v1049, %v1289
      %v1291 = vpop.f32.mrb[0].mxu0
      %1292 = vmatprep.mubr.f32.mxu0 0.0
      %1293 = vmatmul.mubr.f32.gmra.mrb[0].mxu0 %v1101
      %v1294 = vpop.f32.mrb[0].mxu0
      %v1295 = vadd.f32 %v1049, %v1294
      %v1296 = vpop.f32.mrb[0].mxu0
      %1297 = vmatprep.mubr.f32.mxu0 0.0
      %1298 = vmatmul.mubr.f32.gmra.mrb[0].mxu0 %v1104
      %v1299 = vpop.f32.mrb[0].mxu0
      %v1300 = vadd.f32 %v1049, %v1299
      %v1301 = vpop.f32.mrb[0].mxu0
      %1302 = vmatprep.mubr.f32.mxu0 0.0
      %1303 = vmatmul.mubr.f32.gmra.mrb[0].mxu0 %v1107
      %v1304 = vpop.f32.mrb[0].mxu0
      %v1305 = vadd.f32 %v1049, %v1304
      %v1306 = vpop.f32.mrb[0].mxu0
      %1307 = vmatprep.mubr.f32.mxu0 0.0
      %1308 = vmatmul.mubr.f32.gmra.mrb[0].mxu0 %v1110
      %v1309 = vpop.f32.mrb[0].mxu0
      %v1310 = vadd.f32 %v1049, %v1309
      %v1311 = vpop.f32.mrb[0].mxu0
      %1312 = vmatprep.mubr.f32.mxu0 0.0
      %1313 = vmatmul.mubr.f32.gmra.mrb[0].mxu0 %v1113
      %v1314 = vpop.f32.mrb[0].mxu0
      %v1315 = vadd.f32 %v1049, %v1314
      %v1316 = vpop.f32.mrb[0].mxu0
      %1317 = vmatprep.mubr.f32.mxu0 0.0
      %1318 = vmatmul.mubr.f32.gmra.mrb[0].mxu0 %v1116
      %v1319 = vpop.f32.mrb[0].mxu0
      %v1320 = vadd.f32 %v1049, %v1319
      %v1321 = vpop.f32.mrb[0].mxu0
      %1322 = vmatprep.mubr.f32.mxu0 0.0
      %1323 = vmatmul.mubr.f32.gmra.mrb[0].mxu0 %v1119
      %v1324 = vpop.f32.mrb[0].mxu0
      %v1325 = vadd.f32 %v1049, %v1324
      %v1326 = vpop.f32.mrb[0].mxu0
      %1327 = vmatprep.mubr.f32.mxu0 0.0
      %1328 = vmatmul.mubr.f32.gmra.mrb[0].mxu0 %v1122
      %v1329 = vpop.f32.mrb[0].mxu0
      %v1330 = vadd.f32 %v1049, %v1329
      %v1331 = vpop.f32.mrb[0].mxu0
      %1332 = vmatprep.mubr.f32.mxu0 0.0
      %1333 = vmatmul.mubr.f32.gmra.mrb[0].mxu0 %v1125
      %v1334 = vpop.f32.mrb[0].mxu0
      %v1335 = vadd.f32 %v1049, %v1334
      %v1336 = vpop.f32.mrb[0].mxu0
      %1337 = vmatprep.mubr.f32.mxu0 0.0
      %1338 = vmatmul.mubr.f32.gmra.mrb[0].mxu0 %v1128
      %v1339 = vpop.f32.mrb[0].mxu0
      %v1340 = vadd.f32 %v1049, %v1339
      %v1341 = vpop.f32.mrb[0].mxu0
      %1342 = vmatprep.mubr.f32.mxu0 0.0
      %1343 = vmatmul.mubr.f32.gmra.mrb[0].mxu0 %v1131
      %v1344 = vpop.f32.mrb[0].mxu0
      %v1345 = vadd.f32 %v1049, %v1344
      %v1346 = vpop.f32.mrb[0].mxu0
      %1347 = vmatprep.mubr.f32.mxu0 0.0
      %1348 = vmatmul.mubr.f32.gmra.mrb[0].mxu0 %v1134
      %v1349 = vpop.f32.mrb[0].mxu0
      %v1350 = vadd.f32 %v1049, %v1349
      %v1351 = vpop.f32.mrb[0].mxu0
      %1352 = vmatprep.mubr.f32.mxu0 0.0
      %1353 = vmatmul.mubr.f32.gmra.mrb[0].mxu0 %v1137
      %v1354 = vpop.f32.mrb[0].mxu0
      %v1355 = vadd.f32 %v1049, %v1354
      %v1356 = vpop.f32.mrb[0].mxu0
      %1357 = vmatprep.mubr.f32.mxu0 0.0
      %1358 = vmatmul.mubr.f32.gmra.mrb[0].mxu0 %v1140
      %v1359 = vpop.f32.mrb[0].mxu0
      %v1360 = vadd.f32 %v1049, %v1359
      %v1361 = vpop.f32.mrb[0].mxu0
      %1362 = vmatprep.mubr.f32.mxu0 0.0
      %1363 = vmatmul.mubr.f32.gmra.mrb[0].mxu0 %v1143
      %v1364 = vpop.f32.mrb[0].mxu0
      %v1365 = vadd.f32 %v1049, %v1364
      %v1366 = vpop.f32.mrb[0].mxu0
      %1367 = vmatprep.mubr.f32.mxu0 0.0
      %1368 = vmatmul.mubr.f32.gmra.mrb[0].mxu0 %v1146
      %v1369 = vpop.f32.mrb[0].mxu0
      %v1370 = vadd.f32 %v1049, %v1369
      %v1371 = vpop.f32.mrb[0].mxu0
      %1372 = vdwg.mxu0
      %1373 = vst.msk [vmem:[%s318] sm:$0xff] %vm368, %v1215
      %1374 = vst.msk [vmem:[%s318 + $0x8] sm:$0xff] %vm368, %v1220
      %1375 = vst.msk [vmem:[%s318 + $0x10] sm:$0xff] %vm368, %v1225
      %1376 = vst.msk [vmem:[%s318 + $0x18] sm:$0xff] %vm368, %v1230
      %1377 = vst.msk [vmem:[%s318 + $0x20] sm:$0xff] %vm368, %v1235
      %1378 = vst.msk [vmem:[%s318 + $0x28] sm:$0xff] %vm368, %v1240
      %1379 = vst.msk [vmem:[%s318 + $0x30] sm:$0xff] %vm368, %v1245
      %1380 = vst.msk [vmem:[%s318 + $0x38] sm:$0xff] %vm368, %v1250
      %1381 = vst.msk [vmem:[%s318 + $0x40] sm:$0xff] %vm368, %v1255
      %1382 = vst.msk [vmem:[%s318 + $0x48] sm:$0xff] %vm368, %v1260
      %1383 = vst.msk [vmem:[%s318 + $0x50] sm:$0xff] %vm368, %v1265
      %1384 = vst.msk [vmem:[%s318 + $0x58] sm:$0xff] %vm368, %v1270
      %1385 = vst.msk [vmem:[%s318 + $0x60] sm:$0xff] %vm368, %v1275
      %1386 = vst.msk [vmem:[%s318 + $0x68] sm:$0xff] %vm368, %v1280
      %1387 = vst.msk [vmem:[%s318 + $0x70] sm:$0xff] %vm368, %v1285
      %1388 = vst.msk [vmem:[%s318 + $0x78] sm:$0xff] %vm368, %v1290
      %1389 = vst.msk [vmem:[%s318 + $0x80] sm:$0xff] %vm368, %v1295
      %1390 = vst.msk [vmem:[%s318 + $0x88] sm:$0xff] %vm368, %v1300
      %1391 = vst.msk [vmem:[%s318 + $0x90] sm:$0xff] %vm368, %v1305
      %1392 = vst.msk [vmem:[%s318 + $0x98] sm:$0xff] %vm368, %v1310
      %1393 = vst.msk [vmem:[%s318 + $0xa0] sm:$0xff] %vm368, %v1315
      %1394 = vst.msk [vmem:[%s318 + $0xa8] sm:$0xff] %vm368, %v1320
      %1395 = vst.msk [vmem:[%s318 + $0xb0] sm:$0xff] %vm368, %v1325
      %1396 = vst.msk [vmem:[%s318 + $0xb8] sm:$0xff] %vm368, %v1330
      %1397 = vst.msk [vmem:[%s318 + $0xc0] sm:$0xff] %vm368, %v1335
      %1398 = vst.msk [vmem:[%s318 + $0xc8] sm:$0xff] %vm368, %v1340
      %1399 = vst.msk [vmem:[%s318 + $0xd0] sm:$0xff] %vm368, %v1345
      %1400 = vst.msk [vmem:[%s318 + $0xd8] sm:$0xff] %vm368, %v1350
      %1401 = vst.msk [vmem:[%s318 + $0xe0] sm:$0xff] %vm368, %v1355
      %1402 = vst.msk [vmem:[%s318 + $0xe8] sm:$0xff] %vm368, %v1360
      %1403 = vst.msk [vmem:[%s318 + $0xf0] sm:$0xff] %vm368, %v1365
      %1404 = vst.msk [vmem:[%s318 + $0xf8] sm:$0xff] %vm368, %v1370
      %v1405 = vld [vmem:[#allocation2 + $0x1] sm:$0xff]
      %v1406 = vld [vmem:[#allocation2 + $0x9] sm:$0xff]
      %v1407 = vld [vmem:[#allocation2 + $0x19] sm:$0xff]
      %v1408 = vld [vmem:[#allocation2 + $0x21] sm:$0xff]
      %v1409 = vld [vmem:[#allocation2 + $0x31] sm:$0xff]
      %v1410 = vld [vmem:[#allocation2 + $0x39] sm:$0xff]
      %v1411 = vld [vmem:[#allocation2 + $0x49] sm:$0xff]
      %v1412 = vld [vmem:[#allocation2 + $0x51] sm:$0xff]
      %v1413 = vld [vmem:[#allocation2 + $0x61] sm:$0xff]
      %v1414 = vld [vmem:[#allocation2 + $0x69] sm:$0xff]
      %v1415 = vld [vmem:[#allocation2 + $0x79] sm:$0xff]
      %v1416 = vld [vmem:[#allocation2 + $0x81] sm:$0xff]
      %v1417 = vld [vmem:[#allocation2 + $0x91] sm:$0xff]
      %v1418 = vld [vmem:[#allocation2 + $0x99] sm:$0xff]
      %v1419 = vld [vmem:[#allocation2 + $0xa9] sm:$0xff]
      %v1420 = vld [vmem:[#allocation2 + $0xb1] sm:$0xff]
      %v1421 = vld [vmem:[#allocation2 + $0xc1] sm:$0xff]
      %v1422 = vld [vmem:[#allocation2 + $0xc9] sm:$0xff]
      %v1423 = vld [vmem:[#allocation2 + $0xd9] sm:$0xff]
      %v1424 = vld [vmem:[#allocation2 + $0xe1] sm:$0xff]
      %v1425 = vld [vmem:[#allocation2 + $0xf1] sm:$0xff]
      %v1426 = vld [vmem:[#allocation2 + $0xf9] sm:$0xff]
      %v1427 = vld [vmem:[#allocation2 + $0x109] sm:$0xff]
      %v1428 = vld [vmem:[#allocation2 + $0x111] sm:$0xff]
      %v1429 = vld [vmem:[#allocation2 + $0x121] sm:$0xff]
      %v1430 = vld [vmem:[#allocation2 + $0x129] sm:$0xff]
      %v1431 = vld [vmem:[#allocation2 + $0x139] sm:$0xff]
      %v1432 = vld [vmem:[#allocation2 + $0x141] sm:$0xff]
      %v1433 = vld [vmem:[#allocation2 + $0x151] sm:$0xff]
      %v1434 = vld [vmem:[#allocation2 + $0x159] sm:$0xff]
      %v1435 = vld [vmem:[#allocation2 + $0x169] sm:$0xff]
      %v1436 = vld [vmem:[#allocation2 + $0x171] sm:$0xff]
      %v1437 = vld [vmem:[#allocation2 + $0x2] sm:$0xff]
      %v1438 = vld [vmem:[#allocation2 + $0xa] sm:$0xff]
      %v1439 = vld [vmem:[#allocation2 + $0x1a] sm:$0xff]
      %v1440 = vld [vmem:[#allocation2 + $0x22] sm:$0xff]
      %v1441 = vld [vmem:[#allocation2 + $0x32] sm:$0xff]
      %v1442 = vld [vmem:[#allocation2 + $0x3a] sm:$0xff]
      %v1443 = vld [vmem:[#allocation2 + $0x4a] sm:$0xff]
      %v1444 = vld [vmem:[#allocation2 + $0x52] sm:$0xff]
      %v1445 = vld [vmem:[#allocation2 + $0x62] sm:$0xff]
      %v1446 = vld [vmem:[#allocation2 + $0x6a] sm:$0xff]
      %v1447 = vld [vmem:[#allocation2 + $0x7a] sm:$0xff]
      %v1448 = vld [vmem:[#allocation2 + $0x82] sm:$0xff]
      %v1449 = vld [vmem:[#allocation2 + $0x92] sm:$0xff]
      %v1450 = vld [vmem:[#allocation2 + $0x9a] sm:$0xff]
      %v1451 = vld [vmem:[#allocation2 + $0xaa] sm:$0xff]
      %v1452 = vld [vmem:[#allocation2 + $0xb2] sm:$0xff]
      %v1453 = vld [vmem:[#allocation2 + $0xc2] sm:$0xff]
      %v1454 = vld [vmem:[#allocation2 + $0xca] sm:$0xff]
      %v1455 = vld [vmem:[#allocation2 + $0xda] sm:$0xff]
      %v1456 = vld [vmem:[#allocation2 + $0xe2] sm:$0xff]
      %v1457 = vld [vmem:[#allocation2 + $0xf2] sm:$0xff]
      %v1458 = vld [vmem:[#allocation2 + $0xfa] sm:$0xff]
      %v1459 = vld [vmem:[#allocation2 + $0x10a] sm:$0xff]
      %v1460 = vld [vmem:[#allocation2 + $0x112] sm:$0xff]
      %v1461 = vld [vmem:[#allocation2 + $0x122] sm:$0xff]
      %v1462 = vld [vmem:[#allocation2 + $0x12a] sm:$0xff]
      %v1463 = vld [vmem:[#allocation2 + $0x13a] sm:$0xff]
      %v1464 = vld [vmem:[#allocation2 + $0x142] sm:$0xff]
      %v1465 = vld [vmem:[#allocation2 + $0x152] sm:$0xff]
      %v1466 = vld [vmem:[#allocation2 + $0x15a] sm:$0xff]
      %v1467 = vld [vmem:[#allocation2 + $0x16a] sm:$0xff]
      %v1468 = vld [vmem:[#allocation2 + $0x172] sm:$0xff]
      %v1469 = vld [vmem:[%s496 + $0x1] sm:$0xff]
      %v1470 = vld [vmem:[%s496 + $0x9] sm:$0xff]
      %v1471 = vld [vmem:[%s496 + $0x19] sm:$0xff]
      %v1472 = vld [vmem:[%s496 + $0x21] sm:$0xff]
      %v1473 = vld [vmem:[%s496 + $0x31] sm:$0xff]
      %v1474 = vld [vmem:[%s496 + $0x39] sm:$0xff]
      %v1475 = vld [vmem:[%s496 + $0x49] sm:$0xff]
      %v1476 = vld [vmem:[%s496 + $0x51] sm:$0xff]
      %v1477 = vld [vmem:[%s496 + $0x61] sm:$0xff]
      %v1478 = vld [vmem:[%s496 + $0x69] sm:$0xff]
      %v1479 = vld [vmem:[%s496 + $0x79] sm:$0xff]
      %v1480 = vld [vmem:[%s496 + $0x81] sm:$0xff]
      %v1481 = vld [vmem:[%s496 + $0x91] sm:$0xff]
      %v1482 = vld [vmem:[%s496 + $0x99] sm:$0xff]
      %v1483 = vld [vmem:[%s496 + $0xa9] sm:$0xff]
      %v1484 = vld [vmem:[%s496 + $0xb1] sm:$0xff]
      %v1485 = vld [vmem:[%s496 + $0xc1] sm:$0xff]
      %v1486 = vld [vmem:[%s496 + $0xc9] sm:$0xff]
      %v1487 = vld [vmem:[%s496 + $0xd9] sm:$0xff]
      %v1488 = vld [vmem:[%s496 + $0xe1] sm:$0xff]
      %v1489 = vld [vmem:[%s496 + $0xf1] sm:$0xff]
      %v1490 = vld [vmem:[%s496 + $0xf9] sm:$0xff]
      %v1491 = vld [vmem:[%s496 + $0x109] sm:$0xff]
      %v1492 = vld [vmem:[%s496 + $0x111] sm:$0xff]
      %v1493 = vld [vmem:[%s496 + $0x121] sm:$0xff]
      %v1494 = vld [vmem:[%s496 + $0x129] sm:$0xff]
      %v1495 = vld [vmem:[%s496 + $0x139] sm:$0xff]
      %v1496 = vld [vmem:[%s496 + $0x141] sm:$0xff]
      %v1497 = vld [vmem:[%s496 + $0x151] sm:$0xff]
      %v1498 = vld [vmem:[%s496 + $0x159] sm:$0xff]
      %v1499 = vld [vmem:[%s496 + $0x169] sm:$0xff]
      %v1500 = vld [vmem:[%s496 + $0x171] sm:$0xff]
      %v1501 = vld [vmem:[%s496 + $0x2] sm:$0xff]
      %v1502 = vld [vmem:[%s496 + $0xa] sm:$0xff]
      %v1503 = vld [vmem:[%s496 + $0x1a] sm:$0xff]
      %v1504 = vld [vmem:[%s496 + $0x22] sm:$0xff]
      %v1505 = vld [vmem:[%s496 + $0x32] sm:$0xff]
      %v1506 = vld [vmem:[%s496 + $0x3a] sm:$0xff]
      %v1507 = vld [vmem:[%s496 + $0x4a] sm:$0xff]
      %v1508 = vld [vmem:[%s496 + $0x52] sm:$0xff]
      %v1509 = vld [vmem:[%s496 + $0x62] sm:$0xff]
      %v1510 = vld [vmem:[%s496 + $0x6a] sm:$0xff]
      %v1511 = vld [vmem:[%s496 + $0x7a] sm:$0xff]
      %v1512 = vld [vmem:[%s496 + $0x82] sm:$0xff]
      %v1513 = vld [vmem:[%s496 + $0x92] sm:$0xff]
      %v1514 = vld [vmem:[%s496 + $0x9a] sm:$0xff]
      %v1515 = vld [vmem:[%s496 + $0xaa] sm:$0xff]
      %v1516 = vld [vmem:[%s496 + $0xb2] sm:$0xff]
      %v1517 = vld [vmem:[%s496 + $0xc2] sm:$0xff]
      %v1518 = vld [vmem:[%s496 + $0xca] sm:$0xff]
      %v1519 = vld [vmem:[%s496 + $0xda] sm:$0xff]
      %v1520 = vld [vmem:[%s496 + $0xe2] sm:$0xff]
      %v1521 = vld [vmem:[%s496 + $0xf2] sm:$0xff]
      %v1522 = vld [vmem:[%s496 + $0xfa] sm:$0xff]
      %v1523 = vld [vmem:[%s496 + $0x10a] sm:$0xff]
      %v1524 = vld [vmem:[%s496 + $0x112] sm:$0xff]
      %v1525 = vld [vmem:[%s496 + $0x122] sm:$0xff]
      %v1526 = vld [vmem:[%s496 + $0x12a] sm:$0xff]
      %v1527 = vld [vmem:[%s496 + $0x13a] sm:$0xff]
      %v1528 = vld [vmem:[%s496 + $0x142] sm:$0xff]
      %v1529 = vld [vmem:[%s496 + $0x152] sm:$0xff]
      %v1530 = vld [vmem:[%s496 + $0x15a] sm:$0xff]
      %v1531 = vld [vmem:[%s496 + $0x16a] sm:$0xff]
      %v1532 = vld [vmem:[%s496 + $0x172] sm:$0xff]
      %1565 = vrot.lane.b32.xlu0 %v1437, 4
      %v1566 = vpop.permute.xlu0 %1565
      %1567 = vrot.lane.b32.xlu0 %v1438, 4
      %v1568 = vpop.permute.xlu0 %1567
      %1569 = vrot.lane.b32.xlu0 %v1439, 4
      %v1570 = vpop.permute.xlu0 %1569
      %1571 = vrot.lane.b32.xlu0 %v1440, 4
      %v1572 = vpop.permute.xlu0 %1571
      %1573 = vrot.lane.b32.xlu0 %v1441, 4
      %v1574 = vpop.permute.xlu0 %1573
      %1575 = vrot.lane.b32.xlu0 %v1442, 4
      %v1576 = vpop.permute.xlu0 %1575
      %1577 = vrot.lane.b32.xlu0 %v1443, 4
      %v1578 = vpop.permute.xlu0 %1577
      %1579 = vrot.lane.b32.xlu0 %v1444, 4
      %v1580 = vpop.permute.xlu0 %1579
      %1581 = vrot.lane.b32.xlu0 %v1445, 4
      %v1582 = vpop.permute.xlu0 %1581
      %1583 = vrot.lane.b32.xlu0 %v1446, 4
      %v1584 = vpop.permute.xlu0 %1583
      %1585 = vrot.lane.b32.xlu0 %v1447, 4
      %v1586 = vpop.permute.xlu0 %1585
      %1587 = vrot.lane.b32.xlu0 %v1448, 4
      %v1588 = vpop.permute.xlu0 %1587
      %1589 = vrot.lane.b32.xlu0 %v1449, 4
      %v1590 = vpop.permute.xlu0 %1589
      %1591 = vrot.lane.b32.xlu0 %v1450, 4
      %v1592 = vpop.permute.xlu0 %1591
      %1593 = vrot.lane.b32.xlu0 %v1451, 4
      %v1594 = vpop.permute.xlu0 %1593
      %1595 = vrot.lane.b32.xlu0 %v1452, 4
      %v1596 = vpop.permute.xlu0 %1595
      %1597 = vrot.lane.b32.xlu0 %v1453, 4
      %v1598 = vpop.permute.xlu0 %1597
      %1599 = vrot.lane.b32.xlu0 %v1454, 4
      %v1600 = vpop.permute.xlu0 %1599
      %1601 = vrot.lane.b32.xlu0 %v1455, 4
      %v1602 = vpop.permute.xlu0 %1601
      %1603 = vrot.lane.b32.xlu0 %v1456, 4
      %v1604 = vpop.permute.xlu0 %1603
      %1605 = vrot.lane.b32.xlu0 %v1457, 4
      %v1606 = vpop.permute.xlu0 %1605
      %1607 = vrot.lane.b32.xlu0 %v1458, 4
      %v1608 = vpop.permute.xlu0 %1607
      %1609 = vrot.lane.b32.xlu0 %v1459, 4
      %v1610 = vpop.permute.xlu0 %1609
      %1611 = vrot.lane.b32.xlu0 %v1460, 4
      %v1612 = vpop.permute.xlu0 %1611
      %1613 = vrot.lane.b32.xlu0 %v1461, 4
      %v1614 = vpop.permute.xlu0 %1613
      %1615 = vrot.lane.b32.xlu0 %v1462, 4
      %v1616 = vpop.permute.xlu0 %1615
      %1617 = vrot.lane.b32.xlu0 %v1463, 4
      %v1618 = vpop.permute.xlu0 %1617
      %1619 = vrot.lane.b32.xlu0 %v1464, 4
      %v1620 = vpop.permute.xlu0 %1619
      %1621 = vrot.lane.b32.xlu0 %v1465, 4
      %v1622 = vpop.permute.xlu0 %1621
      %1623 = vrot.lane.b32.xlu0 %v1466, 4
      %v1624 = vpop.permute.xlu0 %1623
      %1625 = vrot.lane.b32.xlu0 %v1467, 4
      %v1626 = vpop.permute.xlu0 %1625
      %1627 = vrot.lane.b32.xlu0 %v1468, 4
      %v1628 = vpop.permute.xlu0 %1627
      %1693 = vrot.lane.b32.xlu0 %v1469, 8
      %v1694 = vpop.permute.xlu0 %1693
      %1695 = vrot.lane.b32.xlu0 %v1470, 8
      %v1696 = vpop.permute.xlu0 %1695
      %1697 = vrot.lane.b32.xlu0 %v1471, 8
      %v1698 = vpop.permute.xlu0 %1697
      %1699 = vrot.lane.b32.xlu0 %v1472, 8
      %v1700 = vpop.permute.xlu0 %1699
      %1701 = vrot.lane.b32.xlu0 %v1473, 8
      %v1702 = vpop.permute.xlu0 %1701
      %1703 = vrot.lane.b32.xlu0 %v1474, 8
      %v1704 = vpop.permute.xlu0 %1703
      %1705 = vrot.lane.b32.xlu0 %v1475, 8
      %v1706 = vpop.permute.xlu0 %1705
      %1707 = vrot.lane.b32.xlu0 %v1476, 8
      %v1708 = vpop.permute.xlu0 %1707
      %1709 = vrot.lane.b32.xlu0 %v1477, 8
      %v1710 = vpop.permute.xlu0 %1709
      %1711 = vrot.lane.b32.xlu0 %v1478, 8
      %v1712 = vpop.permute.xlu0 %1711
      %1713 = vrot.lane.b32.xlu0 %v1479, 8
      %v1714 = vpop.permute.xlu0 %1713
      %1715 = vrot.lane.b32.xlu0 %v1480, 8
      %v1716 = vpop.permute.xlu0 %1715
      %1717 = vrot.lane.b32.xlu0 %v1481, 8
      %v1718 = vpop.permute.xlu0 %1717
      %1719 = vrot.lane.b32.xlu0 %v1482, 8
      %v1720 = vpop.permute.xlu0 %1719
      %1721 = vrot.lane.b32.xlu0 %v1483, 8
      %v1722 = vpop.permute.xlu0 %1721
      %1723 = vrot.lane.b32.xlu0 %v1484, 8
      %v1724 = vpop.permute.xlu0 %1723
      %1725 = vrot.lane.b32.xlu0 %v1485, 8
      %v1726 = vpop.permute.xlu0 %1725
      %1727 = vrot.lane.b32.xlu0 %v1486, 8
      %v1728 = vpop.permute.xlu0 %1727
      %1729 = vrot.lane.b32.xlu0 %v1487, 8
      %v1730 = vpop.permute.xlu0 %1729
      %1731 = vrot.lane.b32.xlu0 %v1488, 8
      %v1732 = vpop.permute.xlu0 %1731
      %1733 = vrot.lane.b32.xlu0 %v1489, 8
      %v1734 = vpop.permute.xlu0 %1733
      %1735 = vrot.lane.b32.xlu0 %v1490, 8
      %v1736 = vpop.permute.xlu0 %1735
      %1737 = vrot.lane.b32.xlu0 %v1491, 8
      %v1738 = vpop.permute.xlu0 %1737
      %1739 = vrot.lane.b32.xlu0 %v1492, 8
      %v1740 = vpop.permute.xlu0 %1739
      %1741 = vrot.lane.b32.xlu0 %v1493, 8
      %v1742 = vpop.permute.xlu0 %1741
      %1743 = vrot.lane.b32.xlu0 %v1494, 8
      %v1744 = vpop.permute.xlu0 %1743
      %1745 = vrot.lane.b32.xlu0 %v1495, 8
      %v1746 = vpop.permute.xlu0 %1745
      %1747 = vrot.lane.b32.xlu0 %v1496, 8
      %v1748 = vpop.permute.xlu0 %1747
      %1749 = vrot.lane.b32.xlu0 %v1497, 8
      %v1750 = vpop.permute.xlu0 %1749
      %1751 = vrot.lane.b32.xlu0 %v1498, 8
      %v1752 = vpop.permute.xlu0 %1751
      %1753 = vrot.lane.b32.xlu0 %v1499, 8
      %v1754 = vpop.permute.xlu0 %1753
      %1755 = vrot.lane.b32.xlu0 %v1500, 8
      %v1756 = vpop.permute.xlu0 %1755
      %1821 = vrot.lane.b32.xlu0 %v1501, 12
      %v1822 = vpop.permute.xlu0 %1821
      %1823 = vrot.lane.b32.xlu0 %v1502, 12
      %v1824 = vpop.permute.xlu0 %1823
      %1825 = vrot.lane.b32.xlu0 %v1503, 12
      %v1826 = vpop.permute.xlu0 %1825
      %1827 = vrot.lane.b32.xlu0 %v1504, 12
      %v1828 = vpop.permute.xlu0 %1827
      %1829 = vrot.lane.b32.xlu0 %v1505, 12
      %v1830 = vpop.permute.xlu0 %1829
      %1831 = vrot.lane.b32.xlu0 %v1506, 12
      %v1832 = vpop.permute.xlu0 %1831
      %1833 = vrot.lane.b32.xlu0 %v1507, 12
      %v1834 = vpop.permute.xlu0 %1833
      %1835 = vrot.lane.b32.xlu0 %v1508, 12
      %v1836 = vpop.permute.xlu0 %1835
      %1837 = vrot.lane.b32.xlu0 %v1509, 12
      %v1838 = vpop.permute.xlu0 %1837
      %1839 = vrot.lane.b32.xlu0 %v1510, 12
      %v1840 = vpop.permute.xlu0 %1839
      %1841 = vrot.lane.b32.xlu0 %v1511, 12
      %v1842 = vpop.permute.xlu0 %1841
      %1843 = vrot.lane.b32.xlu0 %v1512, 12
      %v1844 = vpop.permute.xlu0 %1843
      %1845 = vrot.lane.b32.xlu0 %v1513, 12
      %v1846 = vpop.permute.xlu0 %1845
      %1847 = vrot.lane.b32.xlu0 %v1514, 12
      %v1848 = vpop.permute.xlu0 %1847
      %1849 = vrot.lane.b32.xlu0 %v1515, 12
      %v1850 = vpop.permute.xlu0 %1849
      %1851 = vrot.lane.b32.xlu0 %v1516, 12
      %v1852 = vpop.permute.xlu0 %1851
      %1853 = vrot.lane.b32.xlu0 %v1517, 12
      %v1854 = vpop.permute.xlu0 %1853
      %1855 = vrot.lane.b32.xlu0 %v1518, 12
      %v1856 = vpop.permute.xlu0 %1855
      %1857 = vrot.lane.b32.xlu0 %v1519, 12
      %v1858 = vpop.permute.xlu0 %1857
      %1859 = vrot.lane.b32.xlu0 %v1520, 12
      %v1860 = vpop.permute.xlu0 %1859
      %1861 = vrot.lane.b32.xlu0 %v1521, 12
      %v1862 = vpop.permute.xlu0 %1861
      %1863 = vrot.lane.b32.xlu0 %v1522, 12
      %v1864 = vpop.permute.xlu0 %1863
      %1865 = vrot.lane.b32.xlu0 %v1523, 12
      %v1866 = vpop.permute.xlu0 %1865
      %1867 = vrot.lane.b32.xlu0 %v1524, 12
      %v1868 = vpop.permute.xlu0 %1867
      %1869 = vrot.lane.b32.xlu0 %v1525, 12
      %v1870 = vpop.permute.xlu0 %1869
      %1871 = vrot.lane.b32.xlu0 %v1526, 12
      %v1872 = vpop.permute.xlu0 %1871
      %1873 = vrot.lane.b32.xlu0 %v1527, 12
      %v1874 = vpop.permute.xlu0 %1873
      %1875 = vrot.lane.b32.xlu0 %v1528, 12
      %v1876 = vpop.permute.xlu0 %1875
      %1877 = vrot.lane.b32.xlu0 %v1529, 12
      %v1878 = vpop.permute.xlu0 %1877
      %1879 = vrot.lane.b32.xlu0 %v1530, 12
      %v1880 = vpop.permute.xlu0 %1879
      %1881 = vrot.lane.b32.xlu0 %v1531, 12
      %v1882 = vpop.permute.xlu0 %1881
      %1883 = vrot.lane.b32.xlu0 %v1532, 12
      %v1884 = vpop.permute.xlu0 %1883
      %v1917 = vsel %vm368, %v1405, %v1566
      %v1918 = vsel %vm368, %v1406, %v1568
      %v1919 = vsel %vm368, %v1407, %v1570
      %v1920 = vsel %vm368, %v1408, %v1572
      %v1921 = vsel %vm368, %v1409, %v1574
      %v1922 = vsel %vm368, %v1410, %v1576
      %v1923 = vsel %vm368, %v1411, %v1578
      %v1924 = vsel %vm368, %v1412, %v1580
      %v1925 = vsel %vm368, %v1413, %v1582
      %v1926 = vsel %vm368, %v1414, %v1584
      %v1927 = vsel %vm368, %v1415, %v1586
      %v1928 = vsel %vm368, %v1416, %v1588
      %v1929 = vsel %vm368, %v1417, %v1590
      %v1930 = vsel %vm368, %v1418, %v1592
      %v1931 = vsel %vm368, %v1419, %v1594
      %v1932 = vsel %vm368, %v1420, %v1596
      %v1933 = vsel %vm368, %v1421, %v1598
      %v1934 = vsel %vm368, %v1422, %v1600
      %v1935 = vsel %vm368, %v1423, %v1602
      %v1936 = vsel %vm368, %v1424, %v1604
      %v1937 = vsel %vm368, %v1425, %v1606
      %v1938 = vsel %vm368, %v1426, %v1608
      %v1939 = vsel %vm368, %v1427, %v1610
      %v1940 = vsel %vm368, %v1428, %v1612
      %v1941 = vsel %vm368, %v1429, %v1614
      %v1942 = vsel %vm368, %v1430, %v1616
      %v1943 = vsel %vm368, %v1431, %v1618
      %v1944 = vsel %vm368, %v1432, %v1620
      %v1945 = vsel %vm368, %v1433, %v1622
      %v1946 = vsel %vm368, %v1434, %v1624
      %v1947 = vsel %vm368, %v1435, %v1626
      %v1948 = vsel %vm368, %v1436, %v1628
      %v1949 = vsel %vm977, %v1917, %v1694
      %v1950 = vsel %vm977, %v1918, %v1696
      %v1951 = vsel %vm977, %v1919, %v1698
      %v1952 = vsel %vm977, %v1920, %v1700
      %v1953 = vsel %vm977, %v1921, %v1702
      %v1954 = vsel %vm977, %v1922, %v1704
      %v1955 = vsel %vm977, %v1923, %v1706
      %v1956 = vsel %vm977, %v1924, %v1708
      %v1957 = vsel %vm977, %v1925, %v1710
      %v1958 = vsel %vm977, %v1926, %v1712
      %v1959 = vsel %vm977, %v1927, %v1714
      %v1960 = vsel %vm977, %v1928, %v1716
      %v1961 = vsel %vm977, %v1929, %v1718
      %v1962 = vsel %vm977, %v1930, %v1720
      %v1963 = vsel %vm977, %v1931, %v1722
      %v1964 = vsel %vm977, %v1932, %v1724
      %v1965 = vsel %vm977, %v1933, %v1726
      %v1966 = vsel %vm977, %v1934, %v1728
      %v1967 = vsel %vm977, %v1935, %v1730
      %v1968 = vsel %vm977, %v1936, %v1732
      %v1969 = vsel %vm977, %v1937, %v1734
      %v1970 = vsel %vm977, %v1938, %v1736
      %v1971 = vsel %vm977, %v1939, %v1738
      %v1972 = vsel %vm977, %v1940, %v1740
      %v1973 = vsel %vm977, %v1941, %v1742
      %v1974 = vsel %vm977, %v1942, %v1744
      %v1975 = vsel %vm977, %v1943, %v1746
      %v1976 = vsel %vm977, %v1944, %v1748
      %v1977 = vsel %vm977, %v1945, %v1750
      %v1978 = vsel %vm977, %v1946, %v1752
      %v1979 = vsel %vm977, %v1947, %v1754
      %v1980 = vsel %vm977, %v1948, %v1756
      %v1981 = vsel %vm1010, %v1949, %v1822
      %v1982 = vsel %vm1010, %v1950, %v1824
      %v1983 = vsel %vm1010, %v1951, %v1826
      %v1984 = vsel %vm1010, %v1952, %v1828
      %v1985 = vsel %vm1010, %v1953, %v1830
      %v1986 = vsel %vm1010, %v1954, %v1832
      %v1987 = vsel %vm1010, %v1955, %v1834
      %v1988 = vsel %vm1010, %v1956, %v1836
      %v1989 = vsel %vm1010, %v1957, %v1838
      %v1990 = vsel %vm1010, %v1958, %v1840
      %v1991 = vsel %vm1010, %v1959, %v1842
      %v1992 = vsel %vm1010, %v1960, %v1844
      %v1993 = vsel %vm1010, %v1961, %v1846
      %v1994 = vsel %vm1010, %v1962, %v1848
      %v1995 = vsel %vm1010, %v1963, %v1850
      %v1996 = vsel %vm1010, %v1964, %v1852
      %v1997 = vsel %vm1010, %v1965, %v1854
      %v1998 = vsel %vm1010, %v1966, %v1856
      %v1999 = vsel %vm1010, %v1967, %v1858
      %v2000 = vsel %vm1010, %v1968, %v1860
      %v2001 = vsel %vm1010, %v1969, %v1862
      %v2002 = vsel %vm1010, %v1970, %v1864
      %v2003 = vsel %vm1010, %v1971, %v1866
      %v2004 = vsel %vm1010, %v1972, %v1868
      %v2005 = vsel %vm1010, %v1973, %v1870
      %v2006 = vsel %vm1010, %v1974, %v1872
      %v2007 = vsel %vm1010, %v1975, %v1874
      %v2008 = vsel %vm1010, %v1976, %v1876
      %v2009 = vsel %vm1010, %v1977, %v1878
      %v2010 = vsel %vm1010, %v1978, %v1880
      %v2011 = vsel %vm1010, %v1979, %v1882
      %v2012 = vsel %vm1010, %v1980, %v1884
      %s2013 = scalar_lea.vmem %s2, 16
      %v2014 = vld [vmem:[%s2013] sm:$0xff]
      %v2015 = vld [vmem:[%s2013 + $0x8] sm:$0xff]
      %v2017 = vsel %vm1051, %v1981, 0
      %v2020 = vsel %vm1051, %v1982, 0
      %v2023 = vsel %vm1051, %v1983, 0
      %v2026 = vsel %vm1051, %v1984, 0
      %v2029 = vsel %vm1051, %v1985, 0
      %v2032 = vsel %vm1051, %v1986, 0
      %v2035 = vsel %vm1051, %v1987, 0
      %v2038 = vsel %vm1051, %v1988, 0
      %v2041 = vsel %vm1051, %v1989, 0
      %v2044 = vsel %vm1051, %v1990, 0
      %v2047 = vsel %vm1051, %v1991, 0
      %v2050 = vsel %vm1051, %v1992, 0
      %v2053 = vsel %vm1051, %v1993, 0
      %v2056 = vsel %vm1051, %v1994, 0
      %v2059 = vsel %vm1051, %v1995, 0
      %v2062 = vsel %vm1051, %v1996, 0
      %v2065 = vsel %vm1051, %v1997, 0
      %v2068 = vsel %vm1051, %v1998, 0
      %v2071 = vsel %vm1051, %v1999, 0
      %v2074 = vsel %vm1051, %v2000, 0
      %v2077 = vsel %vm1051, %v2001, 0
      %v2080 = vsel %vm1051, %v2002, 0
      %v2083 = vsel %vm1051, %v2003, 0
      %v2086 = vsel %vm1051, %v2004, 0
      %v2089 = vsel %vm1051, %v2005, 0
      %v2092 = vsel %vm1051, %v2006, 0
      %v2095 = vsel %vm1051, %v2007, 0
      %v2098 = vsel %vm1051, %v2008, 0
      %v2101 = vsel %vm1051, %v2009, 0
      %v2104 = vsel %vm1051, %v2010, 0
      %v2107 = vsel %vm1051, %v2011, 0
      %v2110 = vsel %vm1051, %v2012, 0
      %2112 = vmatprep.subr.mxu0 0.0
      %2113 = vmatpush1.msra.mxu0 %v2014
      %2114 = vmatprep.subr.mxu0 0.0
      %2115 = vmatpush1.msra.mxu0 %v2015
      %2116 = vmatprep.subr.mxu0 0.0
      %2117 = vmatpush1.msra.mxu0 0.0
      %2118 = vmatprep.subr.mxu0 0.0
      %2119 = vmatpush1.msra.mxu0 0.0
      %2120 = vmatprep.subr.mxu0 0.0
      %2121 = vmatpush1.msra.mxu0 0.0
      %2122 = vmatprep.subr.mxu0 0.0
      %2123 = vmatpush1.msra.mxu0 0.0
      %2124 = vmatprep.subr.mxu0 0.0
      %2125 = vmatpush1.msra.mxu0 0.0
      %2126 = vmatprep.subr.mxu0 0.0
      %2127 = vmatpush1.msra.mxu0 0.0
      %2128 = vmatprep.subr.mxu0 0.0
      %2129 = vmatpush1.msra.mxu0 0.0
      %2130 = vmatprep.subr.mxu0 0.0
      %2131 = vmatpush1.msra.mxu0 0.0
      %2132 = vmatprep.subr.mxu0 0.0
      %2133 = vmatpush1.msra.mxu0 0.0
      %2134 = vmatprep.subr.mxu0 0.0
      %2135 = vmatpush1.msra.mxu0 0.0
      %2136 = vmatprep.subr.mxu0 0.0
      %2137 = vmatpush1.msra.mxu0 0.0
      %2138 = vmatprep.subr.mxu0 0.0
      %2139 = vmatpush1.msra.mxu0 0.0
      %2140 = vmatprep.subr.mxu0 0.0
      %2141 = vmatpush1.msra.mxu0 0.0
      %2142 = vmatprep.subr.mxu0 0.0
      %2143 = vmatpush1.msra.mxu0 0.0
      %2144 = vmatprep.subr.mxu0 0.0
      %2145 = vmatpush1.msra.mxu0 0.0
      %2146 = vmatprep.subr.mxu0 0.0
      %2147 = vmatpush1.msra.mxu0 0.0
      %2148 = vmatprep.subr.mxu0 0.0
      %2149 = vmatpush1.msra.mxu0 0.0
      %2150 = vmatprep.subr.mxu0 0.0
      %2151 = vmatpush1.msra.mxu0 0.0
      %2152 = vmatprep.subr.mxu0 0.0
      %2153 = vmatpush1.msra.mxu0 0.0
      %2154 = vmatprep.subr.mxu0 0.0
      %2155 = vmatpush1.msra.mxu0 0.0
      %2156 = vmatprep.subr.mxu0 0.0
      %2157 = vmatpush1.msra.mxu0 0.0
      %2158 = vmatprep.subr.mxu0 0.0
      %2159 = vmatpush1.msra.mxu0 0.0
      %2160 = vmatprep.subr.mxu0 0.0
      %2161 = vmatpush1.msra.mxu0 0.0
      %2162 = vmatprep.subr.mxu0 0.0
      %2163 = vmatpush1.msra.mxu0 0.0
      %2164 = vmatprep.subr.mxu0 0.0
      %2165 = vmatpush1.msra.mxu0 0.0
      %2166 = vmatprep.subr.mxu0 0.0
      %2167 = vmatpush1.msra.mxu0 0.0
      %2168 = vmatprep.subr.mxu0 0.0
      %2169 = vmatpush1.msra.mxu0 0.0
      %2170 = vmatprep.subr.mxu0 0.0
      %2171 = vmatpush1.msra.mxu0 0.0
      %2172 = vmatprep.subr.mxu0 0.0
      %2173 = vmatpush1.msra.mxu0 0.0
      %2174 = vmatprep.subr.mxu0 0.0
      %2175 = vmatpush1.msra.mxu0 0.0
      %2176 = vmatprep.mubr.f32.mxu0 0.0
      %2177 = vmatmul.mubr.f32.gmra.mrb[0].mxu0 %v2017
      %v2178 = vpop.f32.mrb[0].mxu0
      %v2179 = vadd.f32 %v1049, %v2178
      %v2180 = vpop.f32.mrb[0].mxu0
      %2181 = vmatprep.mubr.f32.mxu0 0.0
      %2182 = vmatmul.mubr.f32.gmra.mrb[0].mxu0 %v2020
      %v2183 = vpop.f32.mrb[0].mxu0
      %v2184 = vadd.f32 %v1049, %v2183
      %v2185 = vpop.f32.mrb[0].mxu0
      %2186 = vmatprep.mubr.f32.mxu0 0.0
      %2187 = vmatmul.mubr.f32.gmra.mrb[0].mxu0 %v2023
      %v2188 = vpop.f32.mrb[0].mxu0
      %v2189 = vadd.f32 %v1049, %v2188
      %v2190 = vpop.f32.mrb[0].mxu0
      %2191 = vmatprep.mubr.f32.mxu0 0.0
      %2192 = vmatmul.mubr.f32.gmra.mrb[0].mxu0 %v2026
      %v2193 = vpop.f32.mrb[0].mxu0
      %v2194 = vadd.f32 %v1049, %v2193
      %v2195 = vpop.f32.mrb[0].mxu0
      %2196 = vmatprep.mubr.f32.mxu0 0.0
      %2197 = vmatmul.mubr.f32.gmra.mrb[0].mxu0 %v2029
      %v2198 = vpop.f32.mrb[0].mxu0
      %v2199 = vadd.f32 %v1049, %v2198
      %v2200 = vpop.f32.mrb[0].mxu0
      %2201 = vmatprep.mubr.f32.mxu0 0.0
      %2202 = vmatmul.mubr.f32.gmra.mrb[0].mxu0 %v2032
      %v2203 = vpop.f32.mrb[0].mxu0
      %v2204 = vadd.f32 %v1049, %v2203
      %v2205 = vpop.f32.mrb[0].mxu0
      %2206 = vmatprep.mubr.f32.mxu0 0.0
      %2207 = vmatmul.mubr.f32.gmra.mrb[0].mxu0 %v2035
      %v2208 = vpop.f32.mrb[0].mxu0
      %v2209 = vadd.f32 %v1049, %v2208
      %v2210 = vpop.f32.mrb[0].mxu0
      %2211 = vmatprep.mubr.f32.mxu0 0.0
      %2212 = vmatmul.mubr.f32.gmra.mrb[0].mxu0 %v2038
      %v2213 = vpop.f32.mrb[0].mxu0
      %v2214 = vadd.f32 %v1049, %v2213
      %v2215 = vpop.f32.mrb[0].mxu0
      %2216 = vmatprep.mubr.f32.mxu0 0.0
      %2217 = vmatmul.mubr.f32.gmra.mrb[0].mxu0 %v2041
      %v2218 = vpop.f32.mrb[0].mxu0
      %v2219 = vadd.f32 %v1049, %v2218
      %v2220 = vpop.f32.mrb[0].mxu0
      %2221 = vmatprep.mubr.f32.mxu0 0.0
      %2222 = vmatmul.mubr.f32.gmra.mrb[0].mxu0 %v2044
      %v2223 = vpop.f32.mrb[0].mxu0
      %v2224 = vadd.f32 %v1049, %v2223
      %v2225 = vpop.f32.mrb[0].mxu0
      %2226 = vmatprep.mubr.f32.mxu0 0.0
      %2227 = vmatmul.mubr.f32.gmra.mrb[0].mxu0 %v2047
      %v2228 = vpop.f32.mrb[0].mxu0
      %v2229 = vadd.f32 %v1049, %v2228
      %v2230 = vpop.f32.mrb[0].mxu0
      %2231 = vmatprep.mubr.f32.mxu0 0.0
      %2232 = vmatmul.mubr.f32.gmra.mrb[0].mxu0 %v2050
      %v2233 = vpop.f32.mrb[0].mxu0
      %v2234 = vadd.f32 %v1049, %v2233
      %v2235 = vpop.f32.mrb[0].mxu0
      %2236 = vmatprep.mubr.f32.mxu0 0.0
      %2237 = vmatmul.mubr.f32.gmra.mrb[0].mxu0 %v2053
      %v2238 = vpop.f32.mrb[0].mxu0
      %v2239 = vadd.f32 %v1049, %v2238
      %v2240 = vpop.f32.mrb[0].mxu0
      %2241 = vmatprep.mubr.f32.mxu0 0.0
      %2242 = vmatmul.mubr.f32.gmra.mrb[0].mxu0 %v2056
      %v2243 = vpop.f32.mrb[0].mxu0
      %v2244 = vadd.f32 %v1049, %v2243
      %v2245 = vpop.f32.mrb[0].mxu0
      %2246 = vmatprep.mubr.f32.mxu0 0.0
      %2247 = vmatmul.mubr.f32.gmra.mrb[0].mxu0 %v2059
      %v2248 = vpop.f32.mrb[0].mxu0
      %v2249 = vadd.f32 %v1049, %v2248
      %v2250 = vpop.f32.mrb[0].mxu0
      %2251 = vmatprep.mubr.f32.mxu0 0.0
      %2252 = vmatmul.mubr.f32.gmra.mrb[0].mxu0 %v2062
      %v2253 = vpop.f32.mrb[0].mxu0
      %v2254 = vadd.f32 %v1049, %v2253
      %v2255 = vpop.f32.mrb[0].mxu0
      %2256 = vmatprep.mubr.f32.mxu0 0.0
      %2257 = vmatmul.mubr.f32.gmra.mrb[0].mxu0 %v2065
      %v2258 = vpop.f32.mrb[0].mxu0
      %v2259 = vadd.f32 %v1049, %v2258
      %v2260 = vpop.f32.mrb[0].mxu0
      %2261 = vmatprep.mubr.f32.mxu0 0.0
      %2262 = vmatmul.mubr.f32.gmra.mrb[0].mxu0 %v2068
      %v2263 = vpop.f32.mrb[0].mxu0
      %v2264 = vadd.f32 %v1049, %v2263
      %v2265 = vpop.f32.mrb[0].mxu0
      %2266 = vmatprep.mubr.f32.mxu0 0.0
      %2267 = vmatmul.mubr.f32.gmra.mrb[0].mxu0 %v2071
      %v2268 = vpop.f32.mrb[0].mxu0
      %v2269 = vadd.f32 %v1049, %v2268
      %v2270 = vpop.f32.mrb[0].mxu0
      %2271 = vmatprep.mubr.f32.mxu0 0.0
      %2272 = vmatmul.mubr.f32.gmra.mrb[0].mxu0 %v2074
      %v2273 = vpop.f32.mrb[0].mxu0
      %v2274 = vadd.f32 %v1049, %v2273
      %v2275 = vpop.f32.mrb[0].mxu0
      %2276 = vmatprep.mubr.f32.mxu0 0.0
      %2277 = vmatmul.mubr.f32.gmra.mrb[0].mxu0 %v2077
      %v2278 = vpop.f32.mrb[0].mxu0
      %v2279 = vadd.f32 %v1049, %v2278
      %v2280 = vpop.f32.mrb[0].mxu0
      %2281 = vmatprep.mubr.f32.mxu0 0.0
      %2282 = vmatmul.mubr.f32.gmra.mrb[0].mxu0 %v2080
      %v2283 = vpop.f32.mrb[0].mxu0
      %v2284 = vadd.f32 %v1049, %v2283
      %v2285 = vpop.f32.mrb[0].mxu0
      %2286 = vmatprep.mubr.f32.mxu0 0.0
      %2287 = vmatmul.mubr.f32.gmra.mrb[0].mxu0 %v2083
      %v2288 = vpop.f32.mrb[0].mxu0
      %v2289 = vadd.f32 %v1049, %v2288
      %v2290 = vpop.f32.mrb[0].mxu0
      %2291 = vmatprep.mubr.f32.mxu0 0.0
      %2292 = vmatmul.mubr.f32.gmra.mrb[0].mxu0 %v2086
      %v2293 = vpop.f32.mrb[0].mxu0
      %v2294 = vadd.f32 %v1049, %v2293
      %v2295 = vpop.f32.mrb[0].mxu0
      %2296 = vmatprep.mubr.f32.mxu0 0.0
      %2297 = vmatmul.mubr.f32.gmra.mrb[0].mxu0 %v2089
      %v2298 = vpop.f32.mrb[0].mxu0
      %v2299 = vadd.f32 %v1049, %v2298
      %v2300 = vpop.f32.mrb[0].mxu0
      %2301 = vmatprep.mubr.f32.mxu0 0.0
      %2302 = vmatmul.mubr.f32.gmra.mrb[0].mxu0 %v2092
      %v2303 = vpop.f32.mrb[0].mxu0
      %v2304 = vadd.f32 %v1049, %v2303
      %v2305 = vpop.f32.mrb[0].mxu0
      %2306 = vmatprep.mubr.f32.mxu0 0.0
      %2307 = vmatmul.mubr.f32.gmra.mrb[0].mxu0 %v2095
      %v2308 = vpop.f32.mrb[0].mxu0
      %v2309 = vadd.f32 %v1049, %v2308
      %v2310 = vpop.f32.mrb[0].mxu0
      %2311 = vmatprep.mubr.f32.mxu0 0.0
      %2312 = vmatmul.mubr.f32.gmra.mrb[0].mxu0 %v2098
      %v2313 = vpop.f32.mrb[0].mxu0
      %v2314 = vadd.f32 %v1049, %v2313
      %v2315 = vpop.f32.mrb[0].mxu0
      %2316 = vmatprep.mubr.f32.mxu0 0.0
      %2317 = vmatmul.mubr.f32.gmra.mrb[0].mxu0 %v2101
      %v2318 = vpop.f32.mrb[0].mxu0
      %v2319 = vadd.f32 %v1049, %v2318
      %v2320 = vpop.f32.mrb[0].mxu0
      %2321 = vmatprep.mubr.f32.mxu0 0.0
      %2322 = vmatmul.mubr.f32.gmra.mrb[0].mxu0 %v2104
      %v2323 = vpop.f32.mrb[0].mxu0
      %v2324 = vadd.f32 %v1049, %v2323
      %v2325 = vpop.f32.mrb[0].mxu0
      %2326 = vmatprep.mubr.f32.mxu0 0.0
      %2327 = vmatmul.mubr.f32.gmra.mrb[0].mxu0 %v2107
      %v2328 = vpop.f32.mrb[0].mxu0
      %v2329 = vadd.f32 %v1049, %v2328
      %v2330 = vpop.f32.mrb[0].mxu0
      %2331 = vmatprep.mubr.f32.mxu0 0.0
      %2332 = vmatmul.mubr.f32.gmra.mrb[0].mxu0 %v2110
      %v2333 = vpop.f32.mrb[0].mxu0
      %v2334 = vadd.f32 %v1049, %v2333
      %v2335 = vpop.f32.mrb[0].mxu0
      %2336 = vdwg.mxu0
      %s2337 = scalar_lea.vmem %s318, 256
      %2338 = vst.msk [vmem:[%s2337] sm:$0xff] %vm368, %v2179
      %2339 = vst.msk [vmem:[%s2337 + $0x8] sm:$0xff] %vm368, %v2184
      %2340 = vst.msk [vmem:[%s2337 + $0x10] sm:$0xff] %vm368, %v2189
      %2341 = vst.msk [vmem:[%s2337 + $0x18] sm:$0xff] %vm368, %v2194
      %2342 = vst.msk [vmem:[%s2337 + $0x20] sm:$0xff] %vm368, %v2199
      %2343 = vst.msk [vmem:[%s2337 + $0x28] sm:$0xff] %vm368, %v2204
      %2344 = vst.msk [vmem:[%s2337 + $0x30] sm:$0xff] %vm368, %v2209
      %2345 = vst.msk [vmem:[%s2337 + $0x38] sm:$0xff] %vm368, %v2214
      %2346 = vst.msk [vmem:[%s2337 + $0x40] sm:$0xff] %vm368, %v2219
      %2347 = vst.msk [vmem:[%s2337 + $0x48] sm:$0xff] %vm368, %v2224
      %2348 = vst.msk [vmem:[%s2337 + $0x50] sm:$0xff] %vm368, %v2229
      %2349 = vst.msk [vmem:[%s2337 + $0x58] sm:$0xff] %vm368, %v2234
      %2350 = vst.msk [vmem:[%s2337 + $0x60] sm:$0xff] %vm368, %v2239
      %2351 = vst.msk [vmem:[%s2337 + $0x68] sm:$0xff] %vm368, %v2244
      %2352 = vst.msk [vmem:[%s2337 + $0x70] sm:$0xff] %vm368, %v2249
      %2353 = vst.msk [vmem:[%s2337 + $0x78] sm:$0xff] %vm368, %v2254
      %2354 = vst.msk [vmem:[%s2337 + $0x80] sm:$0xff] %vm368, %v2259
      %2355 = vst.msk [vmem:[%s2337 + $0x88] sm:$0xff] %vm368, %v2264
      %2356 = vst.msk [vmem:[%s2337 + $0x90] sm:$0xff] %vm368, %v2269
      %2357 = vst.msk [vmem:[%s2337 + $0x98] sm:$0xff] %vm368, %v2274
      %2358 = vst.msk [vmem:[%s2337 + $0xa0] sm:$0xff] %vm368, %v2279
      %2359 = vst.msk [vmem:[%s2337 + $0xa8] sm:$0xff] %vm368, %v2284
      %2360 = vst.msk [vmem:[%s2337 + $0xb0] sm:$0xff] %vm368, %v2289
      %2361 = vst.msk [vmem:[%s2337 + $0xb8] sm:$0xff] %vm368, %v2294
      %2362 = vst.msk [vmem:[%s2337 + $0xc0] sm:$0xff] %vm368, %v2299
      %2363 = vst.msk [vmem:[%s2337 + $0xc8] sm:$0xff] %vm368, %v2304
      %2364 = vst.msk [vmem:[%s2337 + $0xd0] sm:$0xff] %vm368, %v2309
      %2365 = vst.msk [vmem:[%s2337 + $0xd8] sm:$0xff] %vm368, %v2314
      %2366 = vst.msk [vmem:[%s2337 + $0xe0] sm:$0xff] %vm368, %v2319
      %2367 = vst.msk [vmem:[%s2337 + $0xe8] sm:$0xff] %vm368, %v2324
      %2368 = vst.msk [vmem:[%s2337 + $0xf0] sm:$0xff] %vm368, %v2329
      %2369 = vst.msk [vmem:[%s2337 + $0xf8] sm:$0xff] %vm368, %v2334
      %v2370 = vld [vmem:[%s496] sm:$0xff]
      %v2371 = vld [vmem:[%s496 + $0x8] sm:$0xff]
      %v2372 = vld [vmem:[%s496 + $0x18] sm:$0xff]
      %v2373 = vld [vmem:[%s496 + $0x20] sm:$0xff]
      %v2374 = vld [vmem:[%s496 + $0x30] sm:$0xff]
      %v2375 = vld [vmem:[%s496 + $0x38] sm:$0xff]
      %v2376 = vld [vmem:[%s496 + $0x48] sm:$0xff]
      %v2377 = vld [vmem:[%s496 + $0x50] sm:$0xff]
      %v2378 = vld [vmem:[%s496 + $0x60] sm:$0xff]
      %v2379 = vld [vmem:[%s496 + $0x68] sm:$0xff]
      %v2380 = vld [vmem:[%s496 + $0x78] sm:$0xff]
      %v2381 = vld [vmem:[%s496 + $0x80] sm:$0xff]
      %v2382 = vld [vmem:[%s496 + $0x90] sm:$0xff]
      %v2383 = vld [vmem:[%s496 + $0x98] sm:$0xff]
      %v2384 = vld [vmem:[%s496 + $0xa8] sm:$0xff]
      %v2385 = vld [vmem:[%s496 + $0xb0] sm:$0xff]
      %v2386 = vld [vmem:[%s496 + $0xc0] sm:$0xff]
      %v2387 = vld [vmem:[%s496 + $0xc8] sm:$0xff]
      %v2388 = vld [vmem:[%s496 + $0xd8] sm:$0xff]
      %v2389 = vld [vmem:[%s496 + $0xe0] sm:$0xff]
      %v2390 = vld [vmem:[%s496 + $0xf0] sm:$0xff]
      %v2391 = vld [vmem:[%s496 + $0xf8] sm:$0xff]
      %v2392 = vld [vmem:[%s496 + $0x108] sm:$0xff]
      %v2393 = vld [vmem:[%s496 + $0x110] sm:$0xff]
      %v2394 = vld [vmem:[%s496 + $0x120] sm:$0xff]
      %v2395 = vld [vmem:[%s496 + $0x128] sm:$0xff]
      %v2396 = vld [vmem:[%s496 + $0x138] sm:$0xff]
      %v2397 = vld [vmem:[%s496 + $0x140] sm:$0xff]
      %v2398 = vld [vmem:[%s496 + $0x150] sm:$0xff]
      %v2399 = vld [vmem:[%s496 + $0x158] sm:$0xff]
      %v2400 = vld [vmem:[%s496 + $0x168] sm:$0xff]
      %v2401 = vld [vmem:[%s496 + $0x170] sm:$0xff]
      %v2402 = vld [vmem:[%s496 + $0x1] sm:$0xff]
      %v2403 = vld [vmem:[%s496 + $0x9] sm:$0xff]
      %v2404 = vld [vmem:[%s496 + $0x19] sm:$0xff]
      %v2405 = vld [vmem:[%s496 + $0x21] sm:$0xff]
      %v2406 = vld [vmem:[%s496 + $0x31] sm:$0xff]
      %v2407 = vld [vmem:[%s496 + $0x39] sm:$0xff]
      %v2408 = vld [vmem:[%s496 + $0x49] sm:$0xff]
      %v2409 = vld [vmem:[%s496 + $0x51] sm:$0xff]
      %v2410 = vld [vmem:[%s496 + $0x61] sm:$0xff]
      %v2411 = vld [vmem:[%s496 + $0x69] sm:$0xff]
      %v2412 = vld [vmem:[%s496 + $0x79] sm:$0xff]
      %v2413 = vld [vmem:[%s496 + $0x81] sm:$0xff]
      %v2414 = vld [vmem:[%s496 + $0x91] sm:$0xff]
      %v2415 = vld [vmem:[%s496 + $0x99] sm:$0xff]
      %v2416 = vld [vmem:[%s496 + $0xa9] sm:$0xff]
      %v2417 = vld [vmem:[%s496 + $0xb1] sm:$0xff]
      %v2418 = vld [vmem:[%s496 + $0xc1] sm:$0xff]
      %v2419 = vld [vmem:[%s496 + $0xc9] sm:$0xff]
      %v2420 = vld [vmem:[%s496 + $0xd9] sm:$0xff]
      %v2421 = vld [vmem:[%s496 + $0xe1] sm:$0xff]
      %v2422 = vld [vmem:[%s496 + $0xf1] sm:$0xff]
      %v2423 = vld [vmem:[%s496 + $0xf9] sm:$0xff]
      %v2424 = vld [vmem:[%s496 + $0x109] sm:$0xff]
      %v2425 = vld [vmem:[%s496 + $0x111] sm:$0xff]
      %v2426 = vld [vmem:[%s496 + $0x121] sm:$0xff]
      %v2427 = vld [vmem:[%s496 + $0x129] sm:$0xff]
      %v2428 = vld [vmem:[%s496 + $0x139] sm:$0xff]
      %v2429 = vld [vmem:[%s496 + $0x141] sm:$0xff]
      %v2430 = vld [vmem:[%s496 + $0x151] sm:$0xff]
      %v2431 = vld [vmem:[%s496 + $0x159] sm:$0xff]
      %v2432 = vld [vmem:[%s496 + $0x169] sm:$0xff]
      %v2433 = vld [vmem:[%s496 + $0x171] sm:$0xff]
      %s2434 = scalar_lea.vmem [#allocation2], 48
      %v2435 = vld [vmem:[%s2434] sm:$0xff]
      %v2436 = vld [vmem:[%s2434 + $0x8] sm:$0xff]
      %v2437 = vld [vmem:[%s2434 + $0x18] sm:$0xff]
      %v2438 = vld [vmem:[%s2434 + $0x20] sm:$0xff]
      %v2439 = vld [vmem:[%s2434 + $0x30] sm:$0xff]
      %v2440 = vld [vmem:[%s2434 + $0x38] sm:$0xff]
      %v2441 = vld [vmem:[%s2434 + $0x48] sm:$0xff]
      %v2442 = vld [vmem:[%s2434 + $0x50] sm:$0xff]
      %v2443 = vld [vmem:[%s2434 + $0x60] sm:$0xff]
      %v2444 = vld [vmem:[%s2434 + $0x68] sm:$0xff]
      %v2445 = vld [vmem:[%s2434 + $0x78] sm:$0xff]
      %v2446 = vld [vmem:[%s2434 + $0x80] sm:$0xff]
      %v2447 = vld [vmem:[%s2434 + $0x90] sm:$0xff]
      %v2448 = vld [vmem:[%s2434 + $0x98] sm:$0xff]
      %v2449 = vld [vmem:[%s2434 + $0xa8] sm:$0xff]
      %v2450 = vld [vmem:[%s2434 + $0xb0] sm:$0xff]
      %v2451 = vld [vmem:[%s2434 + $0xc0] sm:$0xff]
      %v2452 = vld [vmem:[%s2434 + $0xc8] sm:$0xff]
      %v2453 = vld [vmem:[%s2434 + $0xd8] sm:$0xff]
      %v2454 = vld [vmem:[%s2434 + $0xe0] sm:$0xff]
      %v2455 = vld [vmem:[%s2434 + $0xf0] sm:$0xff]
      %v2456 = vld [vmem:[%s2434 + $0xf8] sm:$0xff]
      %v2457 = vld [vmem:[%s2434 + $0x108] sm:$0xff]
      %v2458 = vld [vmem:[%s2434 + $0x110] sm:$0xff]
      %v2459 = vld [vmem:[%s2434 + $0x120] sm:$0xff]
      %v2460 = vld [vmem:[%s2434 + $0x128] sm:$0xff]
      %v2461 = vld [vmem:[%s2434 + $0x138] sm:$0xff]
      %v2462 = vld [vmem:[%s2434 + $0x140] sm:$0xff]
      %v2463 = vld [vmem:[%s2434 + $0x150] sm:$0xff]
      %v2464 = vld [vmem:[%s2434 + $0x158] sm:$0xff]
      %v2465 = vld [vmem:[%s2434 + $0x168] sm:$0xff]
      %v2466 = vld [vmem:[%s2434 + $0x170] sm:$0xff]
      %v2467 = vld [vmem:[%s2434 + $0x1] sm:$0xff]
      %v2468 = vld [vmem:[%s2434 + $0x9] sm:$0xff]
      %v2469 = vld [vmem:[%s2434 + $0x19] sm:$0xff]
      %v2470 = vld [vmem:[%s2434 + $0x21] sm:$0xff]
      %v2471 = vld [vmem:[%s2434 + $0x31] sm:$0xff]
      %v2472 = vld [vmem:[%s2434 + $0x39] sm:$0xff]
      %v2473 = vld [vmem:[%s2434 + $0x49] sm:$0xff]
      %v2474 = vld [vmem:[%s2434 + $0x51] sm:$0xff]
      %v2475 = vld [vmem:[%s2434 + $0x61] sm:$0xff]
      %v2476 = vld [vmem:[%s2434 + $0x69] sm:$0xff]
      %v2477 = vld [vmem:[%s2434 + $0x79] sm:$0xff]
      %v2478 = vld [vmem:[%s2434 + $0x81] sm:$0xff]
      %v2479 = vld [vmem:[%s2434 + $0x91] sm:$0xff]
      %v2480 = vld [vmem:[%s2434 + $0x99] sm:$0xff]
      %v2481 = vld [vmem:[%s2434 + $0xa9] sm:$0xff]
      %v2482 = vld [vmem:[%s2434 + $0xb1] sm:$0xff]
      %v2483 = vld [vmem:[%s2434 + $0xc1] sm:$0xff]
      %v2484 = vld [vmem:[%s2434 + $0xc9] sm:$0xff]
      %v2485 = vld [vmem:[%s2434 + $0xd9] sm:$0xff]
      %v2486 = vld [vmem:[%s2434 + $0xe1] sm:$0xff]
      %v2487 = vld [vmem:[%s2434 + $0xf1] sm:$0xff]
      %v2488 = vld [vmem:[%s2434 + $0xf9] sm:$0xff]
      %v2489 = vld [vmem:[%s2434 + $0x109] sm:$0xff]
      %v2490 = vld [vmem:[%s2434 + $0x111] sm:$0xff]
      %v2491 = vld [vmem:[%s2434 + $0x121] sm:$0xff]
      %v2492 = vld [vmem:[%s2434 + $0x129] sm:$0xff]
      %v2493 = vld [vmem:[%s2434 + $0x139] sm:$0xff]
      %v2494 = vld [vmem:[%s2434 + $0x141] sm:$0xff]
      %v2495 = vld [vmem:[%s2434 + $0x151] sm:$0xff]
      %v2496 = vld [vmem:[%s2434 + $0x159] sm:$0xff]
      %v2497 = vld [vmem:[%s2434 + $0x169] sm:$0xff]
      %v2498 = vld [vmem:[%s2434 + $0x171] sm:$0xff]
      %2531 = vrot.lane.b32.xlu0 %v2402, 4
      %v2532 = vpop.permute.xlu0 %2531
      %2533 = vrot.lane.b32.xlu0 %v2403, 4
      %v2534 = vpop.permute.xlu0 %2533
      %2535 = vrot.lane.b32.xlu0 %v2404, 4
      %v2536 = vpop.permute.xlu0 %2535
      %2537 = vrot.lane.b32.xlu0 %v2405, 4
      %v2538 = vpop.permute.xlu0 %2537
      %2539 = vrot.lane.b32.xlu0 %v2406, 4
      %v2540 = vpop.permute.xlu0 %2539
      %2541 = vrot.lane.b32.xlu0 %v2407, 4
      %v2542 = vpop.permute.xlu0 %2541
      %2543 = vrot.lane.b32.xlu0 %v2408, 4
      %v2544 = vpop.permute.xlu0 %2543
      %2545 = vrot.lane.b32.xlu0 %v2409, 4
      %v2546 = vpop.permute.xlu0 %2545
      %2547 = vrot.lane.b32.xlu0 %v2410, 4
      %v2548 = vpop.permute.xlu0 %2547
      %2549 = vrot.lane.b32.xlu0 %v2411, 4
      %v2550 = vpop.permute.xlu0 %2549
      %2551 = vrot.lane.b32.xlu0 %v2412, 4
      %v2552 = vpop.permute.xlu0 %2551
      %2553 = vrot.lane.b32.xlu0 %v2413, 4
      %v2554 = vpop.permute.xlu0 %2553
      %2555 = vrot.lane.b32.xlu0 %v2414, 4
      %v2556 = vpop.permute.xlu0 %2555
      %2557 = vrot.lane.b32.xlu0 %v2415, 4
      %v2558 = vpop.permute.xlu0 %2557
      %2559 = vrot.lane.b32.xlu0 %v2416, 4
      %v2560 = vpop.permute.xlu0 %2559
      %2561 = vrot.lane.b32.xlu0 %v2417, 4
      %v2562 = vpop.permute.xlu0 %2561
      %2563 = vrot.lane.b32.xlu0 %v2418, 4
      %v2564 = vpop.permute.xlu0 %2563
      %2565 = vrot.lane.b32.xlu0 %v2419, 4
      %v2566 = vpop.permute.xlu0 %2565
      %2567 = vrot.lane.b32.xlu0 %v2420, 4
      %v2568 = vpop.permute.xlu0 %2567
      %2569 = vrot.lane.b32.xlu0 %v2421, 4
      %v2570 = vpop.permute.xlu0 %2569
      %2571 = vrot.lane.b32.xlu0 %v2422, 4
      %v2572 = vpop.permute.xlu0 %2571
      %2573 = vrot.lane.b32.xlu0 %v2423, 4
      %v2574 = vpop.permute.xlu0 %2573
      %2575 = vrot.lane.b32.xlu0 %v2424, 4
      %v2576 = vpop.permute.xlu0 %2575
      %2577 = vrot.lane.b32.xlu0 %v2425, 4
      %v2578 = vpop.permute.xlu0 %2577
      %2579 = vrot.lane.b32.xlu0 %v2426, 4
      %v2580 = vpop.permute.xlu0 %2579
      %2581 = vrot.lane.b32.xlu0 %v2427, 4
      %v2582 = vpop.permute.xlu0 %2581
      %2583 = vrot.lane.b32.xlu0 %v2428, 4
      %v2584 = vpop.permute.xlu0 %2583
      %2585 = vrot.lane.b32.xlu0 %v2429, 4
      %v2586 = vpop.permute.xlu0 %2585
      %2587 = vrot.lane.b32.xlu0 %v2430, 4
      %v2588 = vpop.permute.xlu0 %2587
      %2589 = vrot.lane.b32.xlu0 %v2431, 4
      %v2590 = vpop.permute.xlu0 %2589
      %2591 = vrot.lane.b32.xlu0 %v2432, 4
      %v2592 = vpop.permute.xlu0 %2591
      %2593 = vrot.lane.b32.xlu0 %v2433, 4
      %v2594 = vpop.permute.xlu0 %2593
      %2659 = vrot.lane.b32.xlu0 %v2435, 8
      %v2660 = vpop.permute.xlu0 %2659
      %2661 = vrot.lane.b32.xlu0 %v2436, 8
      %v2662 = vpop.permute.xlu0 %2661
      %2663 = vrot.lane.b32.xlu0 %v2437, 8
      %v2664 = vpop.permute.xlu0 %2663
      %2665 = vrot.lane.b32.xlu0 %v2438, 8
      %v2666 = vpop.permute.xlu0 %2665
      %2667 = vrot.lane.b32.xlu0 %v2439, 8
      %v2668 = vpop.permute.xlu0 %2667
      %2669 = vrot.lane.b32.xlu0 %v2440, 8
      %v2670 = vpop.permute.xlu0 %2669
      %2671 = vrot.lane.b32.xlu0 %v2441, 8
      %v2672 = vpop.permute.xlu0 %2671
      %2673 = vrot.lane.b32.xlu0 %v2442, 8
      %v2674 = vpop.permute.xlu0 %2673
      %2675 = vrot.lane.b32.xlu0 %v2443, 8
      %v2676 = vpop.permute.xlu0 %2675
      %2677 = vrot.lane.b32.xlu0 %v2444, 8
      %v2678 = vpop.permute.xlu0 %2677
      %2679 = vrot.lane.b32.xlu0 %v2445, 8
      %v2680 = vpop.permute.xlu0 %2679
      %2681 = vrot.lane.b32.xlu0 %v2446, 8
      %v2682 = vpop.permute.xlu0 %2681
      %2683 = vrot.lane.b32.xlu0 %v2447, 8
      %v2684 = vpop.permute.xlu0 %2683
      %2685 = vrot.lane.b32.xlu0 %v2448, 8
      %v2686 = vpop.permute.xlu0 %2685
      %2687 = vrot.lane.b32.xlu0 %v2449, 8
      %v2688 = vpop.permute.xlu0 %2687
      %2689 = vrot.lane.b32.xlu0 %v2450, 8
      %v2690 = vpop.permute.xlu0 %2689
      %2691 = vrot.lane.b32.xlu0 %v2451, 8
      %v2692 = vpop.permute.xlu0 %2691
      %2693 = vrot.lane.b32.xlu0 %v2452, 8
      %v2694 = vpop.permute.xlu0 %2693
      %2695 = vrot.lane.b32.xlu0 %v2453, 8
      %v2696 = vpop.permute.xlu0 %2695
      %2697 = vrot.lane.b32.xlu0 %v2454, 8
      %v2698 = vpop.permute.xlu0 %2697
      %2699 = vrot.lane.b32.xlu0 %v2455, 8
      %v2700 = vpop.permute.xlu0 %2699
      %2701 = vrot.lane.b32.xlu0 %v2456, 8
      %v2702 = vpop.permute.xlu0 %2701
      %2703 = vrot.lane.b32.xlu0 %v2457, 8
      %v2704 = vpop.permute.xlu0 %2703
      %2705 = vrot.lane.b32.xlu0 %v2458, 8
      %v2706 = vpop.permute.xlu0 %2705
      %2707 = vrot.lane.b32.xlu0 %v2459, 8
      %v2708 = vpop.permute.xlu0 %2707
      %2709 = vrot.lane.b32.xlu0 %v2460, 8
      %v2710 = vpop.permute.xlu0 %2709
      %2711 = vrot.lane.b32.xlu0 %v2461, 8
      %v2712 = vpop.permute.xlu0 %2711
      %2713 = vrot.lane.b32.xlu0 %v2462, 8
      %v2714 = vpop.permute.xlu0 %2713
      %2715 = vrot.lane.b32.xlu0 %v2463, 8
      %v2716 = vpop.permute.xlu0 %2715
      %2717 = vrot.lane.b32.xlu0 %v2464, 8
      %v2718 = vpop.permute.xlu0 %2717
      %2719 = vrot.lane.b32.xlu0 %v2465, 8
      %v2720 = vpop.permute.xlu0 %2719
      %2721 = vrot.lane.b32.xlu0 %v2466, 8
      %v2722 = vpop.permute.xlu0 %2721
      %2787 = vrot.lane.b32.xlu0 %v2467, 12
      %v2788 = vpop.permute.xlu0 %2787
      %2789 = vrot.lane.b32.xlu0 %v2468, 12
      %v2790 = vpop.permute.xlu0 %2789
      %2791 = vrot.lane.b32.xlu0 %v2469, 12
      %v2792 = vpop.permute.xlu0 %2791
      %2793 = vrot.lane.b32.xlu0 %v2470, 12
      %v2794 = vpop.permute.xlu0 %2793
      %2795 = vrot.lane.b32.xlu0 %v2471, 12
      %v2796 = vpop.permute.xlu0 %2795
      %2797 = vrot.lane.b32.xlu0 %v2472, 12
      %v2798 = vpop.permute.xlu0 %2797
      %2799 = vrot.lane.b32.xlu0 %v2473, 12
      %v2800 = vpop.permute.xlu0 %2799
      %2801 = vrot.lane.b32.xlu0 %v2474, 12
      %v2802 = vpop.permute.xlu0 %2801
      %2803 = vrot.lane.b32.xlu0 %v2475, 12
      %v2804 = vpop.permute.xlu0 %2803
      %2805 = vrot.lane.b32.xlu0 %v2476, 12
      %v2806 = vpop.permute.xlu0 %2805
      %2807 = vrot.lane.b32.xlu0 %v2477, 12
      %v2808 = vpop.permute.xlu0 %2807
      %2809 = vrot.lane.b32.xlu0 %v2478, 12
      %v2810 = vpop.permute.xlu0 %2809
      %2811 = vrot.lane.b32.xlu0 %v2479, 12
      %v2812 = vpop.permute.xlu0 %2811
      %2813 = vrot.lane.b32.xlu0 %v2480, 12
      %v2814 = vpop.permute.xlu0 %2813
      %2815 = vrot.lane.b32.xlu0 %v2481, 12
      %v2816 = vpop.permute.xlu0 %2815
      %2817 = vrot.lane.b32.xlu0 %v2482, 12
      %v2818 = vpop.permute.xlu0 %2817
      %2819 = vrot.lane.b32.xlu0 %v2483, 12
      %v2820 = vpop.permute.xlu0 %2819
      %2821 = vrot.lane.b32.xlu0 %v2484, 12
      %v2822 = vpop.permute.xlu0 %2821
      %2823 = vrot.lane.b32.xlu0 %v2485, 12
      %v2824 = vpop.permute.xlu0 %2823
      %2825 = vrot.lane.b32.xlu0 %v2486, 12
      %v2826 = vpop.permute.xlu0 %2825
      %2827 = vrot.lane.b32.xlu0 %v2487, 12
      %v2828 = vpop.permute.xlu0 %2827
      %2829 = vrot.lane.b32.xlu0 %v2488, 12
      %v2830 = vpop.permute.xlu0 %2829
      %2831 = vrot.lane.b32.xlu0 %v2489, 12
      %v2832 = vpop.permute.xlu0 %2831
      %2833 = vrot.lane.b32.xlu0 %v2490, 12
      %v2834 = vpop.permute.xlu0 %2833
      %2835 = vrot.lane.b32.xlu0 %v2491, 12
      %v2836 = vpop.permute.xlu0 %2835
      %2837 = vrot.lane.b32.xlu0 %v2492, 12
      %v2838 = vpop.permute.xlu0 %2837
      %2839 = vrot.lane.b32.xlu0 %v2493, 12
      %v2840 = vpop.permute.xlu0 %2839
      %2841 = vrot.lane.b32.xlu0 %v2494, 12
      %v2842 = vpop.permute.xlu0 %2841
      %2843 = vrot.lane.b32.xlu0 %v2495, 12
      %v2844 = vpop.permute.xlu0 %2843
      %2845 = vrot.lane.b32.xlu0 %v2496, 12
      %v2846 = vpop.permute.xlu0 %2845
      %2847 = vrot.lane.b32.xlu0 %v2497, 12
      %v2848 = vpop.permute.xlu0 %2847
      %2849 = vrot.lane.b32.xlu0 %v2498, 12
      %v2850 = vpop.permute.xlu0 %2849
      %v2883 = vsel %vm368, %v2370, %v2532
      %v2884 = vsel %vm368, %v2371, %v2534
      %v2885 = vsel %vm368, %v2372, %v2536
      %v2886 = vsel %vm368, %v2373, %v2538
      %v2887 = vsel %vm368, %v2374, %v2540
      %v2888 = vsel %vm368, %v2375, %v2542
      %v2889 = vsel %vm368, %v2376, %v2544
      %v2890 = vsel %vm368, %v2377, %v2546
      %v2891 = vsel %vm368, %v2378, %v2548
      %v2892 = vsel %vm368, %v2379, %v2550
      %v2893 = vsel %vm368, %v2380, %v2552
      %v2894 = vsel %vm368, %v2381, %v2554
      %v2895 = vsel %vm368, %v2382, %v2556
      %v2896 = vsel %vm368, %v2383, %v2558
      %v2897 = vsel %vm368, %v2384, %v2560
      %v2898 = vsel %vm368, %v2385, %v2562
      %v2899 = vsel %vm368, %v2386, %v2564
      %v2900 = vsel %vm368, %v2387, %v2566
      %v2901 = vsel %vm368, %v2388, %v2568
      %v2902 = vsel %vm368, %v2389, %v2570
      %v2903 = vsel %vm368, %v2390, %v2572
      %v2904 = vsel %vm368, %v2391, %v2574
      %v2905 = vsel %vm368, %v2392, %v2576
      %v2906 = vsel %vm368, %v2393, %v2578
      %v2907 = vsel %vm368, %v2394, %v2580
      %v2908 = vsel %vm368, %v2395, %v2582
      %v2909 = vsel %vm368, %v2396, %v2584
      %v2910 = vsel %vm368, %v2397, %v2586
      %v2911 = vsel %vm368, %v2398, %v2588
      %v2912 = vsel %vm368, %v2399, %v2590
      %v2913 = vsel %vm368, %v2400, %v2592
      %v2914 = vsel %vm368, %v2401, %v2594
      %v2915 = vsel %vm977, %v2883, %v2660
      %v2916 = vsel %vm977, %v2884, %v2662
      %v2917 = vsel %vm977, %v2885, %v2664
      %v2918 = vsel %vm977, %v2886, %v2666
      %v2919 = vsel %vm977, %v2887, %v2668
      %v2920 = vsel %vm977, %v2888, %v2670
      %v2921 = vsel %vm977, %v2889, %v2672
      %v2922 = vsel %vm977, %v2890, %v2674
      %v2923 = vsel %vm977, %v2891, %v2676
      %v2924 = vsel %vm977, %v2892, %v2678
      %v2925 = vsel %vm977, %v2893, %v2680
      %v2926 = vsel %vm977, %v2894, %v2682
      %v2927 = vsel %vm977, %v2895, %v2684
      %v2928 = vsel %vm977, %v2896, %v2686
      %v2929 = vsel %vm977, %v2897, %v2688
      %v2930 = vsel %vm977, %v2898, %v2690
      %v2931 = vsel %vm977, %v2899, %v2692
      %v2932 = vsel %vm977, %v2900, %v2694
      %v2933 = vsel %vm977, %v2901, %v2696
      %v2934 = vsel %vm977, %v2902, %v2698
      %v2935 = vsel %vm977, %v2903, %v2700
      %v2936 = vsel %vm977, %v2904, %v2702
      %v2937 = vsel %vm977, %v2905, %v2704
      %v2938 = vsel %vm977, %v2906, %v2706
      %v2939 = vsel %vm977, %v2907, %v2708
      %v2940 = vsel %vm977, %v2908, %v2710
      %v2941 = vsel %vm977, %v2909, %v2712
      %v2942 = vsel %vm977, %v2910, %v2714
      %v2943 = vsel %vm977, %v2911, %v2716
      %v2944 = vsel %vm977, %v2912, %v2718
      %v2945 = vsel %vm977, %v2913, %v2720
      %v2946 = vsel %vm977, %v2914, %v2722
      %v2947 = vsel %vm1010, %v2915, %v2788
      %v2948 = vsel %vm1010, %v2916, %v2790
      %v2949 = vsel %vm1010, %v2917, %v2792
      %v2950 = vsel %vm1010, %v2918, %v2794
      %v2951 = vsel %vm1010, %v2919, %v2796
      %v2952 = vsel %vm1010, %v2920, %v2798
      %v2953 = vsel %vm1010, %v2921, %v2800
      %v2954 = vsel %vm1010, %v2922, %v2802
      %v2955 = vsel %vm1010, %v2923, %v2804
      %v2956 = vsel %vm1010, %v2924, %v2806
      %v2957 = vsel %vm1010, %v2925, %v2808
      %v2958 = vsel %vm1010, %v2926, %v2810
      %v2959 = vsel %vm1010, %v2927, %v2812
      %v2960 = vsel %vm1010, %v2928, %v2814
      %v2961 = vsel %vm1010, %v2929, %v2816
      %v2962 = vsel %vm1010, %v2930, %v2818
      %v2963 = vsel %vm1010, %v2931, %v2820
      %v2964 = vsel %vm1010, %v2932, %v2822
      %v2965 = vsel %vm1010, %v2933, %v2824
      %v2966 = vsel %vm1010, %v2934, %v2826
      %v2967 = vsel %vm1010, %v2935, %v2828
      %v2968 = vsel %vm1010, %v2936, %v2830
      %v2969 = vsel %vm1010, %v2937, %v2832
      %v2970 = vsel %vm1010, %v2938, %v2834
      %v2971 = vsel %vm1010, %v2939, %v2836
      %v2972 = vsel %vm1010, %v2940, %v2838
      %v2973 = vsel %vm1010, %v2941, %v2840
      %v2974 = vsel %vm1010, %v2942, %v2842
      %v2975 = vsel %vm1010, %v2943, %v2844
      %v2976 = vsel %vm1010, %v2944, %v2846
      %v2977 = vsel %vm1010, %v2945, %v2848
      %v2978 = vsel %vm1010, %v2946, %v2850
      %s2979 = scalar_lea.vmem %s2, 32
      %v2980 = vld [vmem:[%s2979] sm:$0xff]
      %v2981 = vld [vmem:[%s2979 + $0x8] sm:$0xff]
      %v2983 = vsel %vm1051, %v2947, 0
      %v2986 = vsel %vm1051, %v2948, 0
      %v2989 = vsel %vm1051, %v2949, 0
      %v2992 = vsel %vm1051, %v2950, 0
      %v2995 = vsel %vm1051, %v2951, 0
      %v2998 = vsel %vm1051, %v2952, 0
      %v3001 = vsel %vm1051, %v2953, 0
      %v3004 = vsel %vm1051, %v2954, 0
      %v3007 = vsel %vm1051, %v2955, 0
      %v3010 = vsel %vm1051, %v2956, 0
      %v3013 = vsel %vm1051, %v2957, 0
      %v3016 = vsel %vm1051, %v2958, 0
      %v3019 = vsel %vm1051, %v2959, 0
      %v3022 = vsel %vm1051, %v2960, 0
      %v3025 = vsel %vm1051, %v2961, 0
      %v3028 = vsel %vm1051, %v2962, 0
      %v3031 = vsel %vm1051, %v2963, 0
      %v3034 = vsel %vm1051, %v2964, 0
      %v3037 = vsel %vm1051, %v2965, 0
      %v3040 = vsel %vm1051, %v2966, 0
      %v3043 = vsel %vm1051, %v2967, 0
      %v3046 = vsel %vm1051, %v2968, 0
      %v3049 = vsel %vm1051, %v2969, 0
      %v3052 = vsel %vm1051, %v2970, 0
      %v3055 = vsel %vm1051, %v2971, 0
      %v3058 = vsel %vm1051, %v2972, 0
      %v3061 = vsel %vm1051, %v2973, 0
      %v3064 = vsel %vm1051, %v2974, 0
      %v3067 = vsel %vm1051, %v2975, 0
      %v3070 = vsel %vm1051, %v2976, 0
      %v3073 = vsel %vm1051, %v2977, 0
      %v3076 = vsel %vm1051, %v2978, 0
      %3078 = vmatprep.subr.mxu0 0.0
      %3079 = vmatpush1.msra.mxu0 %v2980
      %3080 = vmatprep.subr.mxu0 0.0
      %3081 = vmatpush1.msra.mxu0 %v2981
      %3082 = vmatprep.subr.mxu0 0.0
      %3083 = vmatpush1.msra.mxu0 0.0
      %3084 = vmatprep.subr.mxu0 0.0
      %3085 = vmatpush1.msra.mxu0 0.0
      %3086 = vmatprep.subr.mxu0 0.0
      %3087 = vmatpush1.msra.mxu0 0.0
      %3088 = vmatprep.subr.mxu0 0.0
      %3089 = vmatpush1.msra.mxu0 0.0
      %3090 = vmatprep.subr.mxu0 0.0
      %3091 = vmatpush1.msra.mxu0 0.0
      %3092 = vmatprep.subr.mxu0 0.0
      %3093 = vmatpush1.msra.mxu0 0.0
      %3094 = vmatprep.subr.mxu0 0.0
      %3095 = vmatpush1.msra.mxu0 0.0
      %3096 = vmatprep.subr.mxu0 0.0
      %3097 = vmatpush1.msra.mxu0 0.0
      %3098 = vmatprep.subr.mxu0 0.0
      %3099 = vmatpush1.msra.mxu0 0.0
      %3100 = vmatprep.subr.mxu0 0.0
      %3101 = vmatpush1.msra.mxu0 0.0
      %3102 = vmatprep.subr.mxu0 0.0
      %3103 = vmatpush1.msra.mxu0 0.0
      %3104 = vmatprep.subr.mxu0 0.0
      %3105 = vmatpush1.msra.mxu0 0.0
      %3106 = vmatprep.subr.mxu0 0.0
      %3107 = vmatpush1.msra.mxu0 0.0
      %3108 = vmatprep.subr.mxu0 0.0
      %3109 = vmatpush1.msra.mxu0 0.0
      %3110 = vmatprep.subr.mxu0 0.0
      %3111 = vmatpush1.msra.mxu0 0.0
      %3112 = vmatprep.subr.mxu0 0.0
      %3113 = vmatpush1.msra.mxu0 0.0
      %3114 = vmatprep.subr.mxu0 0.0
      %3115 = vmatpush1.msra.mxu0 0.0
      %3116 = vmatprep.subr.mxu0 0.0
      %3117 = vmatpush1.msra.mxu0 0.0
      %3118 = vmatprep.subr.mxu0 0.0
      %3119 = vmatpush1.msra.mxu0 0.0
      %3120 = vmatprep.subr.mxu0 0.0
      %3121 = vmatpush1.msra.mxu0 0.0
      %3122 = vmatprep.subr.mxu0 0.0
      %3123 = vmatpush1.msra.mxu0 0.0
      %3124 = vmatprep.subr.mxu0 0.0
      %3125 = vmatpush1.msra.mxu0 0.0
      %3126 = vmatprep.subr.mxu0 0.0
      %3127 = vmatpush1.msra.mxu0 0.0
      %3128 = vmatprep.subr.mxu0 0.0
      %3129 = vmatpush1.msra.mxu0 0.0
      %3130 = vmatprep.subr.mxu0 0.0
      %3131 = vmatpush1.msra.mxu0 0.0
      %3132 = vmatprep.subr.mxu0 0.0
      %3133 = vmatpush1.msra.mxu0 0.0
      %3134 = vmatprep.subr.mxu0 0.0
      %3135 = vmatpush1.msra.mxu0 0.0
      %3136 = vmatprep.subr.mxu0 0.0
      %3137 = vmatpush1.msra.mxu0 0.0
      %3138 = vmatprep.subr.mxu0 0.0
      %3139 = vmatpush1.msra.mxu0 0.0
      %3140 = vmatprep.subr.mxu0 0.0
      %3141 = vmatpush1.msra.mxu0 0.0
      %3142 = vmatprep.mubr.f32.mxu0 0.0
      %3143 = vmatmul.mubr.f32.gmra.mrb[0].mxu0 %v2983
      %v3144 = vpop.f32.mrb[0].mxu0
      %v3145 = vadd.f32 %v1049, %v3144
      %v3146 = vpop.f32.mrb[0].mxu0
      %3147 = vmatprep.mubr.f32.mxu0 0.0
      %3148 = vmatmul.mubr.f32.gmra.mrb[0].mxu0 %v2986
      %v3149 = vpop.f32.mrb[0].mxu0
      %v3150 = vadd.f32 %v1049, %v3149
      %v3151 = vpop.f32.mrb[0].mxu0
      %3152 = vmatprep.mubr.f32.mxu0 0.0
      %3153 = vmatmul.mubr.f32.gmra.mrb[0].mxu0 %v2989
      %v3154 = vpop.f32.mrb[0].mxu0
      %v3155 = vadd.f32 %v1049, %v3154
      %v3156 = vpop.f32.mrb[0].mxu0
      %3157 = vmatprep.mubr.f32.mxu0 0.0
      %3158 = vmatmul.mubr.f32.gmra.mrb[0].mxu0 %v2992
      %v3159 = vpop.f32.mrb[0].mxu0
      %v3160 = vadd.f32 %v1049, %v3159
      %v3161 = vpop.f32.mrb[0].mxu0
      %3162 = vmatprep.mubr.f32.mxu0 0.0
      %3163 = vmatmul.mubr.f32.gmra.mrb[0].mxu0 %v2995
      %v3164 = vpop.f32.mrb[0].mxu0
      %v3165 = vadd.f32 %v1049, %v3164
      %v3166 = vpop.f32.mrb[0].mxu0
      %3167 = vmatprep.mubr.f32.mxu0 0.0
      %3168 = vmatmul.mubr.f32.gmra.mrb[0].mxu0 %v2998
      %v3169 = vpop.f32.mrb[0].mxu0
      %v3170 = vadd.f32 %v1049, %v3169
      %v3171 = vpop.f32.mrb[0].mxu0
      %3172 = vmatprep.mubr.f32.mxu0 0.0
      %3173 = vmatmul.mubr.f32.gmra.mrb[0].mxu0 %v3001
      %v3174 = vpop.f32.mrb[0].mxu0
      %v3175 = vadd.f32 %v1049, %v3174
      %v3176 = vpop.f32.mrb[0].mxu0
      %3177 = vmatprep.mubr.f32.mxu0 0.0
      %3178 = vmatmul.mubr.f32.gmra.mrb[0].mxu0 %v3004
      %v3179 = vpop.f32.mrb[0].mxu0
      %v3180 = vadd.f32 %v1049, %v3179
      %v3181 = vpop.f32.mrb[0].mxu0
      %3182 = vmatprep.mubr.f32.mxu0 0.0
      %3183 = vmatmul.mubr.f32.gmra.mrb[0].mxu0 %v3007
      %v3184 = vpop.f32.mrb[0].mxu0
      %v3185 = vadd.f32 %v1049, %v3184
      %v3186 = vpop.f32.mrb[0].mxu0
      %3187 = vmatprep.mubr.f32.mxu0 0.0
      %3188 = vmatmul.mubr.f32.gmra.mrb[0].mxu0 %v3010
      %v3189 = vpop.f32.mrb[0].mxu0
      %v3190 = vadd.f32 %v1049, %v3189
      %v3191 = vpop.f32.mrb[0].mxu0
      %3192 = vmatprep.mubr.f32.mxu0 0.0
      %3193 = vmatmul.mubr.f32.gmra.mrb[0].mxu0 %v3013
      %v3194 = vpop.f32.mrb[0].mxu0
      %v3195 = vadd.f32 %v1049, %v3194
      %v3196 = vpop.f32.mrb[0].mxu0
      %3197 = vmatprep.mubr.f32.mxu0 0.0
      %3198 = vmatmul.mubr.f32.gmra.mrb[0].mxu0 %v3016
      %v3199 = vpop.f32.mrb[0].mxu0
      %v3200 = vadd.f32 %v1049, %v3199
      %v3201 = vpop.f32.mrb[0].mxu0
      %3202 = vmatprep.mubr.f32.mxu0 0.0
      %3203 = vmatmul.mubr.f32.gmra.mrb[0].mxu0 %v3019
      %v3204 = vpop.f32.mrb[0].mxu0
      %v3205 = vadd.f32 %v1049, %v3204
      %v3206 = vpop.f32.mrb[0].mxu0
      %3207 = vmatprep.mubr.f32.mxu0 0.0
      %3208 = vmatmul.mubr.f32.gmra.mrb[0].mxu0 %v3022
      %v3209 = vpop.f32.mrb[0].mxu0
      %v3210 = vadd.f32 %v1049, %v3209
      %v3211 = vpop.f32.mrb[0].mxu0
      %3212 = vmatprep.mubr.f32.mxu0 0.0
      %3213 = vmatmul.mubr.f32.gmra.mrb[0].mxu0 %v3025
      %v3214 = vpop.f32.mrb[0].mxu0
      %v3215 = vadd.f32 %v1049, %v3214
      %v3216 = vpop.f32.mrb[0].mxu0
      %3217 = vmatprep.mubr.f32.mxu0 0.0
      %3218 = vmatmul.mubr.f32.gmra.mrb[0].mxu0 %v3028
      %v3219 = vpop.f32.mrb[0].mxu0
      %v3220 = vadd.f32 %v1049, %v3219
      %v3221 = vpop.f32.mrb[0].mxu0
      %3222 = vmatprep.mubr.f32.mxu0 0.0
      %3223 = vmatmul.mubr.f32.gmra.mrb[0].mxu0 %v3031
      %v3224 = vpop.f32.mrb[0].mxu0
      %v3225 = vadd.f32 %v1049, %v3224
      %v3226 = vpop.f32.mrb[0].mxu0
      %3227 = vmatprep.mubr.f32.mxu0 0.0
      %3228 = vmatmul.mubr.f32.gmra.mrb[0].mxu0 %v3034
      %v3229 = vpop.f32.mrb[0].mxu0
      %v3230 = vadd.f32 %v1049, %v3229
      %v3231 = vpop.f32.mrb[0].mxu0
      %3232 = vmatprep.mubr.f32.mxu0 0.0
      %3233 = vmatmul.mubr.f32.gmra.mrb[0].mxu0 %v3037
      %v3234 = vpop.f32.mrb[0].mxu0
      %v3235 = vadd.f32 %v1049, %v3234
      %v3236 = vpop.f32.mrb[0].mxu0
      %3237 = vmatprep.mubr.f32.mxu0 0.0
      %3238 = vmatmul.mubr.f32.gmra.mrb[0].mxu0 %v3040
      %v3239 = vpop.f32.mrb[0].mxu0
      %v3240 = vadd.f32 %v1049, %v3239
      %v3241 = vpop.f32.mrb[0].mxu0
      %3242 = vmatprep.mubr.f32.mxu0 0.0
      %3243 = vmatmul.mubr.f32.gmra.mrb[0].mxu0 %v3043
      %v3244 = vpop.f32.mrb[0].mxu0
      %v3245 = vadd.f32 %v1049, %v3244
      %v3246 = vpop.f32.mrb[0].mxu0
      %3247 = vmatprep.mubr.f32.mxu0 0.0
      %3248 = vmatmul.mubr.f32.gmra.mrb[0].mxu0 %v3046
      %v3249 = vpop.f32.mrb[0].mxu0
      %v3250 = vadd.f32 %v1049, %v3249
      %v3251 = vpop.f32.mrb[0].mxu0
      %3252 = vmatprep.mubr.f32.mxu0 0.0
      %3253 = vmatmul.mubr.f32.gmra.mrb[0].mxu0 %v3049
      %v3254 = vpop.f32.mrb[0].mxu0
      %v3255 = vadd.f32 %v1049, %v3254
      %v3256 = vpop.f32.mrb[0].mxu0
      %3257 = vmatprep.mubr.f32.mxu0 0.0
      %3258 = vmatmul.mubr.f32.gmra.mrb[0].mxu0 %v3052
      %v3259 = vpop.f32.mrb[0].mxu0
      %v3260 = vadd.f32 %v1049, %v3259
      %v3261 = vpop.f32.mrb[0].mxu0
      %3262 = vmatprep.mubr.f32.mxu0 0.0
      %3263 = vmatmul.mubr.f32.gmra.mrb[0].mxu0 %v3055
      %v3264 = vpop.f32.mrb[0].mxu0
      %v3265 = vadd.f32 %v1049, %v3264
      %v3266 = vpop.f32.mrb[0].mxu0
      %3267 = vmatprep.mubr.f32.mxu0 0.0
      %3268 = vmatmul.mubr.f32.gmra.mrb[0].mxu0 %v3058
      %v3269 = vpop.f32.mrb[0].mxu0
      %v3270 = vadd.f32 %v1049, %v3269
      %v3271 = vpop.f32.mrb[0].mxu0
      %3272 = vmatprep.mubr.f32.mxu0 0.0
      %3273 = vmatmul.mubr.f32.gmra.mrb[0].mxu0 %v3061
      %v3274 = vpop.f32.mrb[0].mxu0
      %v3275 = vadd.f32 %v1049, %v3274
      %v3276 = vpop.f32.mrb[0].mxu0
      %3277 = vmatprep.mubr.f32.mxu0 0.0
      %3278 = vmatmul.mubr.f32.gmra.mrb[0].mxu0 %v3064
      %v3279 = vpop.f32.mrb[0].mxu0
      %v3280 = vadd.f32 %v1049, %v3279
      %v3281 = vpop.f32.mrb[0].mxu0
      %3282 = vmatprep.mubr.f32.mxu0 0.0
      %3283 = vmatmul.mubr.f32.gmra.mrb[0].mxu0 %v3067
      %v3284 = vpop.f32.mrb[0].mxu0
      %v3285 = vadd.f32 %v1049, %v3284
      %v3286 = vpop.f32.mrb[0].mxu0
      %3287 = vmatprep.mubr.f32.mxu0 0.0
      %3288 = vmatmul.mubr.f32.gmra.mrb[0].mxu0 %v3070
      %v3289 = vpop.f32.mrb[0].mxu0
      %v3290 = vadd.f32 %v1049, %v3289
      %v3291 = vpop.f32.mrb[0].mxu0
      %3292 = vmatprep.mubr.f32.mxu0 0.0
      %3293 = vmatmul.mubr.f32.gmra.mrb[0].mxu0 %v3073
      %v3294 = vpop.f32.mrb[0].mxu0
      %v3295 = vadd.f32 %v1049, %v3294
      %v3296 = vpop.f32.mrb[0].mxu0
      %3297 = vmatprep.mubr.f32.mxu0 0.0
      %3298 = vmatmul.mubr.f32.gmra.mrb[0].mxu0 %v3076
      %v3299 = vpop.f32.mrb[0].mxu0
      %v3300 = vadd.f32 %v1049, %v3299
      %v3301 = vpop.f32.mrb[0].mxu0
      %3302 = vdwg.mxu0
      %s3303 = scalar_lea.vmem %s318, 512
      %3304 = vst.msk [vmem:[%s3303] sm:$0xff] %vm368, %v3145
      %3305 = vst.msk [vmem:[%s3303 + $0x8] sm:$0xff] %vm368, %v3150
      %3306 = vst.msk [vmem:[%s3303 + $0x10] sm:$0xff] %vm368, %v3155
      %3307 = vst.msk [vmem:[%s3303 + $0x18] sm:$0xff] %vm368, %v3160
      %3308 = vst.msk [vmem:[%s3303 + $0x20] sm:$0xff] %vm368, %v3165
      %3309 = vst.msk [vmem:[%s3303 + $0x28] sm:$0xff] %vm368, %v3170
      %3310 = vst.msk [vmem:[%s3303 + $0x30] sm:$0xff] %vm368, %v3175
      %3311 = vst.msk [vmem:[%s3303 + $0x38] sm:$0xff] %vm368, %v3180
      %3312 = vst.msk [vmem:[%s3303 + $0x40] sm:$0xff] %vm368, %v3185
      %3313 = vst.msk [vmem:[%s3303 + $0x48] sm:$0xff] %vm368, %v3190
      %3314 = vst.msk [vmem:[%s3303 + $0x50] sm:$0xff] %vm368, %v3195
      %3315 = vst.msk [vmem:[%s3303 + $0x58] sm:$0xff] %vm368, %v3200
      %3316 = vst.msk [vmem:[%s3303 + $0x60] sm:$0xff] %vm368, %v3205
      %3317 = vst.msk [vmem:[%s3303 + $0x68] sm:$0xff] %vm368, %v3210
      %3318 = vst.msk [vmem:[%s3303 + $0x70] sm:$0xff] %vm368, %v3215
      %3319 = vst.msk [vmem:[%s3303 + $0x78] sm:$0xff] %vm368, %v3220
      %3320 = vst.msk [vmem:[%s3303 + $0x80] sm:$0xff] %vm368, %v3225
      %3321 = vst.msk [vmem:[%s3303 + $0x88] sm:$0xff] %vm368, %v3230
      %3322 = vst.msk [vmem:[%s3303 + $0x90] sm:$0xff] %vm368, %v3235
      %3323 = vst.msk [vmem:[%s3303 + $0x98] sm:$0xff] %vm368, %v3240
      %3324 = vst.msk [vmem:[%s3303 + $0xa0] sm:$0xff] %vm368, %v3245
      %3325 = vst.msk [vmem:[%s3303 + $0xa8] sm:$0xff] %vm368, %v3250
      %3326 = vst.msk [vmem:[%s3303 + $0xb0] sm:$0xff] %vm368, %v3255
      %3327 = vst.msk [vmem:[%s3303 + $0xb8] sm:$0xff] %vm368, %v3260
      %3328 = vst.msk [vmem:[%s3303 + $0xc0] sm:$0xff] %vm368, %v3265
      %3329 = vst.msk [vmem:[%s3303 + $0xc8] sm:$0xff] %vm368, %v3270
      %3330 = vst.msk [vmem:[%s3303 + $0xd0] sm:$0xff] %vm368, %v3275
      %3331 = vst.msk [vmem:[%s3303 + $0xd8] sm:$0xff] %vm368, %v3280
      %3332 = vst.msk [vmem:[%s3303 + $0xe0] sm:$0xff] %vm368, %v3285
      %3333 = vst.msk [vmem:[%s3303 + $0xe8] sm:$0xff] %vm368, %v3290
      %3334 = vst.msk [vmem:[%s3303 + $0xf0] sm:$0xff] %vm368, %v3295
      %3335 = vst.msk [vmem:[%s3303 + $0xf8] sm:$0xff] %vm368, %v3300
      %v3336 = vld [vmem:[%s496 + $0x1] sm:$0xff]
      %v3337 = vld [vmem:[%s496 + $0x9] sm:$0xff]
      %v3338 = vld [vmem:[%s496 + $0x19] sm:$0xff]
      %v3339 = vld [vmem:[%s496 + $0x21] sm:$0xff]
      %v3340 = vld [vmem:[%s496 + $0x31] sm:$0xff]
      %v3341 = vld [vmem:[%s496 + $0x39] sm:$0xff]
      %v3342 = vld [vmem:[%s496 + $0x49] sm:$0xff]
      %v3343 = vld [vmem:[%s496 + $0x51] sm:$0xff]
      %v3344 = vld [vmem:[%s496 + $0x61] sm:$0xff]
      %v3345 = vld [vmem:[%s496 + $0x69] sm:$0xff]
      %v3346 = vld [vmem:[%s496 + $0x79] sm:$0xff]
      %v3347 = vld [vmem:[%s496 + $0x81] sm:$0xff]
      %v3348 = vld [vmem:[%s496 + $0x91] sm:$0xff]
      %v3349 = vld [vmem:[%s496 + $0x99] sm:$0xff]
      %v3350 = vld [vmem:[%s496 + $0xa9] sm:$0xff]
      %v3351 = vld [vmem:[%s496 + $0xb1] sm:$0xff]
      %v3352 = vld [vmem:[%s496 + $0xc1] sm:$0xff]
      %v3353 = vld [vmem:[%s496 + $0xc9] sm:$0xff]
      %v3354 = vld [vmem:[%s496 + $0xd9] sm:$0xff]
      %v3355 = vld [vmem:[%s496 + $0xe1] sm:$0xff]
      %v3356 = vld [vmem:[%s496 + $0xf1] sm:$0xff]
      %v3357 = vld [vmem:[%s496 + $0xf9] sm:$0xff]
      %v3358 = vld [vmem:[%s496 + $0x109] sm:$0xff]
      %v3359 = vld [vmem:[%s496 + $0x111] sm:$0xff]
      %v3360 = vld [vmem:[%s496 + $0x121] sm:$0xff]
      %v3361 = vld [vmem:[%s496 + $0x129] sm:$0xff]
      %v3362 = vld [vmem:[%s496 + $0x139] sm:$0xff]
      %v3363 = vld [vmem:[%s496 + $0x141] sm:$0xff]
      %v3364 = vld [vmem:[%s496 + $0x151] sm:$0xff]
      %v3365 = vld [vmem:[%s496 + $0x159] sm:$0xff]
      %v3366 = vld [vmem:[%s496 + $0x169] sm:$0xff]
      %v3367 = vld [vmem:[%s496 + $0x171] sm:$0xff]
      %v3368 = vld [vmem:[%s496 + $0x2] sm:$0xff]
      %v3369 = vld [vmem:[%s496 + $0xa] sm:$0xff]
      %v3370 = vld [vmem:[%s496 + $0x1a] sm:$0xff]
      %v3371 = vld [vmem:[%s496 + $0x22] sm:$0xff]
      %v3372 = vld [vmem:[%s496 + $0x32] sm:$0xff]
      %v3373 = vld [vmem:[%s496 + $0x3a] sm:$0xff]
      %v3374 = vld [vmem:[%s496 + $0x4a] sm:$0xff]
      %v3375 = vld [vmem:[%s496 + $0x52] sm:$0xff]
      %v3376 = vld [vmem:[%s496 + $0x62] sm:$0xff]
      %v3377 = vld [vmem:[%s496 + $0x6a] sm:$0xff]
      %v3378 = vld [vmem:[%s496 + $0x7a] sm:$0xff]
      %v3379 = vld [vmem:[%s496 + $0x82] sm:$0xff]
      %v3380 = vld [vmem:[%s496 + $0x92] sm:$0xff]
      %v3381 = vld [vmem:[%s496 + $0x9a] sm:$0xff]
      %v3382 = vld [vmem:[%s496 + $0xaa] sm:$0xff]
      %v3383 = vld [vmem:[%s496 + $0xb2] sm:$0xff]
      %v3384 = vld [vmem:[%s496 + $0xc2] sm:$0xff]
      %v3385 = vld [vmem:[%s496 + $0xca] sm:$0xff]
      %v3386 = vld [vmem:[%s496 + $0xda] sm:$0xff]
      %v3387 = vld [vmem:[%s496 + $0xe2] sm:$0xff]
      %v3388 = vld [vmem:[%s496 + $0xf2] sm:$0xff]
      %v3389 = vld [vmem:[%s496 + $0xfa] sm:$0xff]
      %v3390 = vld [vmem:[%s496 + $0x10a] sm:$0xff]
      %v3391 = vld [vmem:[%s496 + $0x112] sm:$0xff]
      %v3392 = vld [vmem:[%s496 + $0x122] sm:$0xff]
      %v3393 = vld [vmem:[%s496 + $0x12a] sm:$0xff]
      %v3394 = vld [vmem:[%s496 + $0x13a] sm:$0xff]
      %v3395 = vld [vmem:[%s496 + $0x142] sm:$0xff]
      %v3396 = vld [vmem:[%s496 + $0x152] sm:$0xff]
      %v3397 = vld [vmem:[%s496 + $0x15a] sm:$0xff]
      %v3398 = vld [vmem:[%s496 + $0x16a] sm:$0xff]
      %v3399 = vld [vmem:[%s496 + $0x172] sm:$0xff]
      %v3400 = vld [vmem:[%s2434 + $0x1] sm:$0xff]
      %v3401 = vld [vmem:[%s2434 + $0x9] sm:$0xff]
      %v3402 = vld [vmem:[%s2434 + $0x19] sm:$0xff]
      %v3403 = vld [vmem:[%s2434 + $0x21] sm:$0xff]
      %v3404 = vld [vmem:[%s2434 + $0x31] sm:$0xff]
      %v3405 = vld [vmem:[%s2434 + $0x39] sm:$0xff]
      %v3406 = vld [vmem:[%s2434 + $0x49] sm:$0xff]
      %v3407 = vld [vmem:[%s2434 + $0x51] sm:$0xff]
      %v3408 = vld [vmem:[%s2434 + $0x61] sm:$0xff]
      %v3409 = vld [vmem:[%s2434 + $0x69] sm:$0xff]
      %v3410 = vld [vmem:[%s2434 + $0x79] sm:$0xff]
      %v3411 = vld [vmem:[%s2434 + $0x81] sm:$0xff]
      %v3412 = vld [vmem:[%s2434 + $0x91] sm:$0xff]
      %v3413 = vld [vmem:[%s2434 + $0x99] sm:$0xff]
      %v3414 = vld [vmem:[%s2434 + $0xa9] sm:$0xff]
      %v3415 = vld [vmem:[%s2434 + $0xb1] sm:$0xff]
      %v3416 = vld [vmem:[%s2434 + $0xc1] sm:$0xff]
      %v3417 = vld [vmem:[%s2434 + $0xc9] sm:$0xff]
      %v3418 = vld [vmem:[%s2434 + $0xd9] sm:$0xff]
      %v3419 = vld [vmem:[%s2434 + $0xe1] sm:$0xff]
      %v3420 = vld [vmem:[%s2434 + $0xf1] sm:$0xff]
      %v3421 = vld [vmem:[%s2434 + $0xf9] sm:$0xff]
      %v3422 = vld [vmem:[%s2434 + $0x109] sm:$0xff]
      %v3423 = vld [vmem:[%s2434 + $0x111] sm:$0xff]
      %v3424 = vld [vmem:[%s2434 + $0x121] sm:$0xff]
      %v3425 = vld [vmem:[%s2434 + $0x129] sm:$0xff]
      %v3426 = vld [vmem:[%s2434 + $0x139] sm:$0xff]
      %v3427 = vld [vmem:[%s2434 + $0x141] sm:$0xff]
      %v3428 = vld [vmem:[%s2434 + $0x151] sm:$0xff]
      %v3429 = vld [vmem:[%s2434 + $0x159] sm:$0xff]
      %v3430 = vld [vmem:[%s2434 + $0x169] sm:$0xff]
      %v3431 = vld [vmem:[%s2434 + $0x171] sm:$0xff]
      %v3432 = vld [vmem:[%s2434 + $0x2] sm:$0xff]
      %v3433 = vld [vmem:[%s2434 + $0xa] sm:$0xff]
      %v3434 = vld [vmem:[%s2434 + $0x1a] sm:$0xff]
      %v3435 = vld [vmem:[%s2434 + $0x22] sm:$0xff]
      %v3436 = vld [vmem:[%s2434 + $0x32] sm:$0xff]
      %v3437 = vld [vmem:[%s2434 + $0x3a] sm:$0xff]
      %v3438 = vld [vmem:[%s2434 + $0x4a] sm:$0xff]
      %v3439 = vld [vmem:[%s2434 + $0x52] sm:$0xff]
      %v3440 = vld [vmem:[%s2434 + $0x62] sm:$0xff]
      %v3441 = vld [vmem:[%s2434 + $0x6a] sm:$0xff]
      %v3442 = vld [vmem:[%s2434 + $0x7a] sm:$0xff]
      %v3443 = vld [vmem:[%s2434 + $0x82] sm:$0xff]
      %v3444 = vld [vmem:[%s2434 + $0x92] sm:$0xff]
      %v3445 = vld [vmem:[%s2434 + $0x9a] sm:$0xff]
      %v3446 = vld [vmem:[%s2434 + $0xaa] sm:$0xff]
      %v3447 = vld [vmem:[%s2434 + $0xb2] sm:$0xff]
      %v3448 = vld [vmem:[%s2434 + $0xc2] sm:$0xff]
      %v3449 = vld [vmem:[%s2434 + $0xca] sm:$0xff]
      %v3450 = vld [vmem:[%s2434 + $0xda] sm:$0xff]
      %v3451 = vld [vmem:[%s2434 + $0xe2] sm:$0xff]
      %v3452 = vld [vmem:[%s2434 + $0xf2] sm:$0xff]
      %v3453 = vld [vmem:[%s2434 + $0xfa] sm:$0xff]
      %v3454 = vld [vmem:[%s2434 + $0x10a] sm:$0xff]
      %v3455 = vld [vmem:[%s2434 + $0x112] sm:$0xff]
      %v3456 = vld [vmem:[%s2434 + $0x122] sm:$0xff]
      %v3457 = vld [vmem:[%s2434 + $0x12a] sm:$0xff]
      %v3458 = vld [vmem:[%s2434 + $0x13a] sm:$0xff]
      %v3459 = vld [vmem:[%s2434 + $0x142] sm:$0xff]
      %v3460 = vld [vmem:[%s2434 + $0x152] sm:$0xff]
      %v3461 = vld [vmem:[%s2434 + $0x15a] sm:$0xff]
      %v3462 = vld [vmem:[%s2434 + $0x16a] sm:$0xff]
      %v3463 = vld [vmem:[%s2434 + $0x172] sm:$0xff]
      %3496 = vrot.lane.b32.xlu0 %v3368, 4
      %v3497 = vpop.permute.xlu0 %3496
      %3498 = vrot.lane.b32.xlu0 %v3369, 4
      %v3499 = vpop.permute.xlu0 %3498
      %3500 = vrot.lane.b32.xlu0 %v3370, 4
      %v3501 = vpop.permute.xlu0 %3500
      %3502 = vrot.lane.b32.xlu0 %v3371, 4
      %v3503 = vpop.permute.xlu0 %3502
      %3504 = vrot.lane.b32.xlu0 %v3372, 4
      %v3505 = vpop.permute.xlu0 %3504
      %3506 = vrot.lane.b32.xlu0 %v3373, 4
      %v3507 = vpop.permute.xlu0 %3506
      %3508 = vrot.lane.b32.xlu0 %v3374, 4
      %v3509 = vpop.permute.xlu0 %3508
      %3510 = vrot.lane.b32.xlu0 %v3375, 4
      %v3511 = vpop.permute.xlu0 %3510
      %3512 = vrot.lane.b32.xlu0 %v3376, 4
      %v3513 = vpop.permute.xlu0 %3512
      %3514 = vrot.lane.b32.xlu0 %v3377, 4
      %v3515 = vpop.permute.xlu0 %3514
      %3516 = vrot.lane.b32.xlu0 %v3378, 4
      %v3517 = vpop.permute.xlu0 %3516
      %3518 = vrot.lane.b32.xlu0 %v3379, 4
      %v3519 = vpop.permute.xlu0 %3518
      %3520 = vrot.lane.b32.xlu0 %v3380, 4
      %v3521 = vpop.permute.xlu0 %3520
      %3522 = vrot.lane.b32.xlu0 %v3381, 4
      %v3523 = vpop.permute.xlu0 %3522
      %3524 = vrot.lane.b32.xlu0 %v3382, 4
      %v3525 = vpop.permute.xlu0 %3524
      %3526 = vrot.lane.b32.xlu0 %v3383, 4
      %v3527 = vpop.permute.xlu0 %3526
      %3528 = vrot.lane.b32.xlu0 %v3384, 4
      %v3529 = vpop.permute.xlu0 %3528
      %3530 = vrot.lane.b32.xlu0 %v3385, 4
      %v3531 = vpop.permute.xlu0 %3530
      %3532 = vrot.lane.b32.xlu0 %v3386, 4
      %v3533 = vpop.permute.xlu0 %3532
      %3534 = vrot.lane.b32.xlu0 %v3387, 4
      %v3535 = vpop.permute.xlu0 %3534
      %3536 = vrot.lane.b32.xlu0 %v3388, 4
      %v3537 = vpop.permute.xlu0 %3536
      %3538 = vrot.lane.b32.xlu0 %v3389, 4
      %v3539 = vpop.permute.xlu0 %3538
      %3540 = vrot.lane.b32.xlu0 %v3390, 4
      %v3541 = vpop.permute.xlu0 %3540
      %3542 = vrot.lane.b32.xlu0 %v3391, 4
      %v3543 = vpop.permute.xlu0 %3542
      %3544 = vrot.lane.b32.xlu0 %v3392, 4
      %v3545 = vpop.permute.xlu0 %3544
      %3546 = vrot.lane.b32.xlu0 %v3393, 4
      %v3547 = vpop.permute.xlu0 %3546
      %3548 = vrot.lane.b32.xlu0 %v3394, 4
      %v3549 = vpop.permute.xlu0 %3548
      %3550 = vrot.lane.b32.xlu0 %v3395, 4
      %v3551 = vpop.permute.xlu0 %3550
      %3552 = vrot.lane.b32.xlu0 %v3396, 4
      %v3553 = vpop.permute.xlu0 %3552
      %3554 = vrot.lane.b32.xlu0 %v3397, 4
      %v3555 = vpop.permute.xlu0 %3554
      %3556 = vrot.lane.b32.xlu0 %v3398, 4
      %v3557 = vpop.permute.xlu0 %3556
      %3558 = vrot.lane.b32.xlu0 %v3399, 4
      %v3559 = vpop.permute.xlu0 %3558
      %3624 = vrot.lane.b32.xlu0 %v3400, 8
      %v3625 = vpop.permute.xlu0 %3624
      %3626 = vrot.lane.b32.xlu0 %v3401, 8
      %v3627 = vpop.permute.xlu0 %3626
      %3628 = vrot.lane.b32.xlu0 %v3402, 8
      %v3629 = vpop.permute.xlu0 %3628
      %3630 = vrot.lane.b32.xlu0 %v3403, 8
      %v3631 = vpop.permute.xlu0 %3630
      %3632 = vrot.lane.b32.xlu0 %v3404, 8
      %v3633 = vpop.permute.xlu0 %3632
      %3634 = vrot.lane.b32.xlu0 %v3405, 8
      %v3635 = vpop.permute.xlu0 %3634
      %3636 = vrot.lane.b32.xlu0 %v3406, 8
      %v3637 = vpop.permute.xlu0 %3636
      %3638 = vrot.lane.b32.xlu0 %v3407, 8
      %v3639 = vpop.permute.xlu0 %3638
      %3640 = vrot.lane.b32.xlu0 %v3408, 8
      %v3641 = vpop.permute.xlu0 %3640
      %3642 = vrot.lane.b32.xlu0 %v3409, 8
      %v3643 = vpop.permute.xlu0 %3642
      %3644 = vrot.lane.b32.xlu0 %v3410, 8
      %v3645 = vpop.permute.xlu0 %3644
      %3646 = vrot.lane.b32.xlu0 %v3411, 8
      %v3647 = vpop.permute.xlu0 %3646
      %3648 = vrot.lane.b32.xlu0 %v3412, 8
      %v3649 = vpop.permute.xlu0 %3648
      %3650 = vrot.lane.b32.xlu0 %v3413, 8
      %v3651 = vpop.permute.xlu0 %3650
      %3652 = vrot.lane.b32.xlu0 %v3414, 8
      %v3653 = vpop.permute.xlu0 %3652
      %3654 = vrot.lane.b32.xlu0 %v3415, 8
      %v3655 = vpop.permute.xlu0 %3654
      %3656 = vrot.lane.b32.xlu0 %v3416, 8
      %v3657 = vpop.permute.xlu0 %3656
      %3658 = vrot.lane.b32.xlu0 %v3417, 8
      %v3659 = vpop.permute.xlu0 %3658
      %3660 = vrot.lane.b32.xlu0 %v3418, 8
      %v3661 = vpop.permute.xlu0 %3660
      %3662 = vrot.lane.b32.xlu0 %v3419, 8
      %v3663 = vpop.permute.xlu0 %3662
      %3664 = vrot.lane.b32.xlu0 %v3420, 8
      %v3665 = vpop.permute.xlu0 %3664
      %3666 = vrot.lane.b32.xlu0 %v3421, 8
      %v3667 = vpop.permute.xlu0 %3666
      %3668 = vrot.lane.b32.xlu0 %v3422, 8
      %v3669 = vpop.permute.xlu0 %3668
      %3670 = vrot.lane.b32.xlu0 %v3423, 8
      %v3671 = vpop.permute.xlu0 %3670
      %3672 = vrot.lane.b32.xlu0 %v3424, 8
      %v3673 = vpop.permute.xlu0 %3672
      %3674 = vrot.lane.b32.xlu0 %v3425, 8
      %v3675 = vpop.permute.xlu0 %3674
      %3676 = vrot.lane.b32.xlu0 %v3426, 8
      %v3677 = vpop.permute.xlu0 %3676
      %3678 = vrot.lane.b32.xlu0 %v3427, 8
      %v3679 = vpop.permute.xlu0 %3678
      %3680 = vrot.lane.b32.xlu0 %v3428, 8
      %v3681 = vpop.permute.xlu0 %3680
      %3682 = vrot.lane.b32.xlu0 %v3429, 8
      %v3683 = vpop.permute.xlu0 %3682
      %3684 = vrot.lane.b32.xlu0 %v3430, 8
      %v3685 = vpop.permute.xlu0 %3684
      %3686 = vrot.lane.b32.xlu0 %v3431, 8
      %v3687 = vpop.permute.xlu0 %3686
      %3752 = vrot.lane.b32.xlu0 %v3432, 12
      %v3753 = vpop.permute.xlu0 %3752
      %3754 = vrot.lane.b32.xlu0 %v3433, 12
      %v3755 = vpop.permute.xlu0 %3754
      %3756 = vrot.lane.b32.xlu0 %v3434, 12
      %v3757 = vpop.permute.xlu0 %3756
      %3758 = vrot.lane.b32.xlu0 %v3435, 12
      %v3759 = vpop.permute.xlu0 %3758
      %3760 = vrot.lane.b32.xlu0 %v3436, 12
      %v3761 = vpop.permute.xlu0 %3760
      %3762 = vrot.lane.b32.xlu0 %v3437, 12
      %v3763 = vpop.permute.xlu0 %3762
      %3764 = vrot.lane.b32.xlu0 %v3438, 12
      %v3765 = vpop.permute.xlu0 %3764
      %3766 = vrot.lane.b32.xlu0 %v3439, 12
      %v3767 = vpop.permute.xlu0 %3766
      %3768 = vrot.lane.b32.xlu0 %v3440, 12
      %v3769 = vpop.permute.xlu0 %3768
      %3770 = vrot.lane.b32.xlu0 %v3441, 12
      %v3771 = vpop.permute.xlu0 %3770
      %3772 = vrot.lane.b32.xlu0 %v3442, 12
      %v3773 = vpop.permute.xlu0 %3772
      %3774 = vrot.lane.b32.xlu0 %v3443, 12
      %v3775 = vpop.permute.xlu0 %3774
      %3776 = vrot.lane.b32.xlu0 %v3444, 12
      %v3777 = vpop.permute.xlu0 %3776
      %3778 = vrot.lane.b32.xlu0 %v3445, 12
      %v3779 = vpop.permute.xlu0 %3778
      %3780 = vrot.lane.b32.xlu0 %v3446, 12
      %v3781 = vpop.permute.xlu0 %3780
      %3782 = vrot.lane.b32.xlu0 %v3447, 12
      %v3783 = vpop.permute.xlu0 %3782
      %3784 = vrot.lane.b32.xlu0 %v3448, 12
      %v3785 = vpop.permute.xlu0 %3784
      %3786 = vrot.lane.b32.xlu0 %v3449, 12
      %v3787 = vpop.permute.xlu0 %3786
      %3788 = vrot.lane.b32.xlu0 %v3450, 12
      %v3789 = vpop.permute.xlu0 %3788
      %3790 = vrot.lane.b32.xlu0 %v3451, 12
      %v3791 = vpop.permute.xlu0 %3790
      %3792 = vrot.lane.b32.xlu0 %v3452, 12
      %v3793 = vpop.permute.xlu0 %3792
      %3794 = vrot.lane.b32.xlu0 %v3453, 12
      %v3795 = vpop.permute.xlu0 %3794
      %3796 = vrot.lane.b32.xlu0 %v3454, 12
      %v3797 = vpop.permute.xlu0 %3796
      %3798 = vrot.lane.b32.xlu0 %v3455, 12
      %v3799 = vpop.permute.xlu0 %3798
      %3800 = vrot.lane.b32.xlu0 %v3456, 12
      %v3801 = vpop.permute.xlu0 %3800
      %3802 = vrot.lane.b32.xlu0 %v3457, 12
      %v3803 = vpop.permute.xlu0 %3802
      %3804 = vrot.lane.b32.xlu0 %v3458, 12
      %v3805 = vpop.permute.xlu0 %3804
      %3806 = vrot.lane.b32.xlu0 %v3459, 12
      %v3807 = vpop.permute.xlu0 %3806
      %3808 = vrot.lane.b32.xlu0 %v3460, 12
      %v3809 = vpop.permute.xlu0 %3808
      %3810 = vrot.lane.b32.xlu0 %v3461, 12
      %v3811 = vpop.permute.xlu0 %3810
      %3812 = vrot.lane.b32.xlu0 %v3462, 12
      %v3813 = vpop.permute.xlu0 %3812
      %3814 = vrot.lane.b32.xlu0 %v3463, 12
      %v3815 = vpop.permute.xlu0 %3814
      %v3848 = vsel %vm368, %v3336, %v3497
      %v3849 = vsel %vm368, %v3337, %v3499
      %v3850 = vsel %vm368, %v3338, %v3501
      %v3851 = vsel %vm368, %v3339, %v3503
      %v3852 = vsel %vm368, %v3340, %v3505
      %v3853 = vsel %vm368, %v3341, %v3507
      %v3854 = vsel %vm368, %v3342, %v3509
      %v3855 = vsel %vm368, %v3343, %v3511
      %v3856 = vsel %vm368, %v3344, %v3513
      %v3857 = vsel %vm368, %v3345, %v3515
      %v3858 = vsel %vm368, %v3346, %v3517
      %v3859 = vsel %vm368, %v3347, %v3519
      %v3860 = vsel %vm368, %v3348, %v3521
      %v3861 = vsel %vm368, %v3349, %v3523
      %v3862 = vsel %vm368, %v3350, %v3525
      %v3863 = vsel %vm368, %v3351, %v3527
      %v3864 = vsel %vm368, %v3352, %v3529
      %v3865 = vsel %vm368, %v3353, %v3531
      %v3866 = vsel %vm368, %v3354, %v3533
      %v3867 = vsel %vm368, %v3355, %v3535
      %v3868 = vsel %vm368, %v3356, %v3537
      %v3869 = vsel %vm368, %v3357, %v3539
      %v3870 = vsel %vm368, %v3358, %v3541
      %v3871 = vsel %vm368, %v3359, %v3543
      %v3872 = vsel %vm368, %v3360, %v3545
      %v3873 = vsel %vm368, %v3361, %v3547
      %v3874 = vsel %vm368, %v3362, %v3549
      %v3875 = vsel %vm368, %v3363, %v3551
      %v3876 = vsel %vm368, %v3364, %v3553
      %v3877 = vsel %vm368, %v3365, %v3555
      %v3878 = vsel %vm368, %v3366, %v3557
      %v3879 = vsel %vm368, %v3367, %v3559
      %v3880 = vsel %vm977, %v3848, %v3625
      %v3881 = vsel %vm977, %v3849, %v3627
      %v3882 = vsel %vm977, %v3850, %v3629
      %v3883 = vsel %vm977, %v3851, %v3631
      %v3884 = vsel %vm977, %v3852, %v3633
      %v3885 = vsel %vm977, %v3853, %v3635
      %v3886 = vsel %vm977, %v3854, %v3637
      %v3887 = vsel %vm977, %v3855, %v3639
      %v3888 = vsel %vm977, %v3856, %v3641
      %v3889 = vsel %vm977, %v3857, %v3643
      %v3890 = vsel %vm977, %v3858, %v3645
      %v3891 = vsel %vm977, %v3859, %v3647
      %v3892 = vsel %vm977, %v3860, %v3649
      %v3893 = vsel %vm977, %v3861, %v3651
      %v3894 = vsel %vm977, %v3862, %v3653
      %v3895 = vsel %vm977, %v3863, %v3655
      %v3896 = vsel %vm977, %v3864, %v3657
      %v3897 = vsel %vm977, %v3865, %v3659
      %v3898 = vsel %vm977, %v3866, %v3661
      %v3899 = vsel %vm977, %v3867, %v3663
      %v3900 = vsel %vm977, %v3868, %v3665
      %v3901 = vsel %vm977, %v3869, %v3667
      %v3902 = vsel %vm977, %v3870, %v3669
      %v3903 = vsel %vm977, %v3871, %v3671
      %v3904 = vsel %vm977, %v3872, %v3673
      %v3905 = vsel %vm977, %v3873, %v3675
      %v3906 = vsel %vm977, %v3874, %v3677
      %v3907 = vsel %vm977, %v3875, %v3679
      %v3908 = vsel %vm977, %v3876, %v3681
      %v3909 = vsel %vm977, %v3877, %v3683
      %v3910 = vsel %vm977, %v3878, %v3685
      %v3911 = vsel %vm977, %v3879, %v3687
      %v3912 = vsel %vm1010, %v3880, %v3753
      %v3913 = vsel %vm1010, %v3881, %v3755
      %v3914 = vsel %vm1010, %v3882, %v3757
      %v3915 = vsel %vm1010, %v3883, %v3759
      %v3916 = vsel %vm1010, %v3884, %v3761
      %v3917 = vsel %vm1010, %v3885, %v3763
      %v3918 = vsel %vm1010, %v3886, %v3765
      %v3919 = vsel %vm1010, %v3887, %v3767
      %v3920 = vsel %vm1010, %v3888, %v3769
      %v3921 = vsel %vm1010, %v3889, %v3771
      %v3922 = vsel %vm1010, %v3890, %v3773
      %v3923 = vsel %vm1010, %v3891, %v3775
      %v3924 = vsel %vm1010, %v3892, %v3777
      %v3925 = vsel %vm1010, %v3893, %v3779
      %v3926 = vsel %vm1010, %v3894, %v3781
      %v3927 = vsel %vm1010, %v3895, %v3783
      %v3928 = vsel %vm1010, %v3896, %v3785
      %v3929 = vsel %vm1010, %v3897, %v3787
      %v3930 = vsel %vm1010, %v3898, %v3789
      %v3931 = vsel %vm1010, %v3899, %v3791
      %v3932 = vsel %vm1010, %v3900, %v3793
      %v3933 = vsel %vm1010, %v3901, %v3795
      %v3934 = vsel %vm1010, %v3902, %v3797
      %v3935 = vsel %vm1010, %v3903, %v3799
      %v3936 = vsel %vm1010, %v3904, %v3801
      %v3937 = vsel %vm1010, %v3905, %v3803
      %v3938 = vsel %vm1010, %v3906, %v3805
      %v3939 = vsel %vm1010, %v3907, %v3807
      %v3940 = vsel %vm1010, %v3908, %v3809
      %v3941 = vsel %vm1010, %v3909, %v3811
      %v3942 = vsel %vm1010, %v3910, %v3813
      %v3943 = vsel %vm1010, %v3911, %v3815
      %s3944 = scalar_lea.vmem %s2, 48
      %v3945 = vld [vmem:[%s3944] sm:$0xff]
      %v3946 = vld [vmem:[%s3944 + $0x8] sm:$0xff]
      %v3948 = vsel %vm1051, %v3912, 0
      %v3951 = vsel %vm1051, %v3913, 0
      %v3954 = vsel %vm1051, %v3914, 0
      %v3957 = vsel %vm1051, %v3915, 0
      %v3960 = vsel %vm1051, %v3916, 0
      %v3963 = vsel %vm1051, %v3917, 0
      %v3966 = vsel %vm1051, %v3918, 0
      %v3969 = vsel %vm1051, %v3919, 0
      %v3972 = vsel %vm1051, %v3920, 0
      %v3975 = vsel %vm1051, %v3921, 0
      %v3978 = vsel %vm1051, %v3922, 0
      %v3981 = vsel %vm1051, %v3923, 0
      %v3984 = vsel %vm1051, %v3924, 0
      %v3987 = vsel %vm1051, %v3925, 0
      %v3990 = vsel %vm1051, %v3926, 0
      %v3993 = vsel %vm1051, %v3927, 0
      %v3996 = vsel %vm1051, %v3928, 0
      %v3999 = vsel %vm1051, %v3929, 0
      %v4002 = vsel %vm1051, %v3930, 0
      %v4005 = vsel %vm1051, %v3931, 0
      %v4008 = vsel %vm1051, %v3932, 0
      %v4011 = vsel %vm1051, %v3933, 0
      %v4014 = vsel %vm1051, %v3934, 0
      %v4017 = vsel %vm1051, %v3935, 0
      %v4020 = vsel %vm1051, %v3936, 0
      %v4023 = vsel %vm1051, %v3937, 0
      %v4026 = vsel %vm1051, %v3938, 0
      %v4029 = vsel %vm1051, %v3939, 0
      %v4032 = vsel %vm1051, %v3940, 0
      %v4035 = vsel %vm1051, %v3941, 0
      %v4038 = vsel %vm1051, %v3942, 0
      %v4041 = vsel %vm1051, %v3943, 0
      %4043 = vmatprep.subr.mxu0 0.0
      %4044 = vmatpush1.msra.mxu0 %v3945
      %4045 = vmatprep.subr.mxu0 0.0
      %4046 = vmatpush1.msra.mxu0 %v3946
      %4047 = vmatprep.subr.mxu0 0.0
      %4048 = vmatpush1.msra.mxu0 0.0
      %4049 = vmatprep.subr.mxu0 0.0
      %4050 = vmatpush1.msra.mxu0 0.0
      %4051 = vmatprep.subr.mxu0 0.0
      %4052 = vmatpush1.msra.mxu0 0.0
      %4053 = vmatprep.subr.mxu0 0.0
      %4054 = vmatpush1.msra.mxu0 0.0
      %4055 = vmatprep.subr.mxu0 0.0
      %4056 = vmatpush1.msra.mxu0 0.0
      %4057 = vmatprep.subr.mxu0 0.0
      %4058 = vmatpush1.msra.mxu0 0.0
      %4059 = vmatprep.subr.mxu0 0.0
      %4060 = vmatpush1.msra.mxu0 0.0
      %4061 = vmatprep.subr.mxu0 0.0
      %4062 = vmatpush1.msra.mxu0 0.0
      %4063 = vmatprep.subr.mxu0 0.0
      %4064 = vmatpush1.msra.mxu0 0.0
      %4065 = vmatprep.subr.mxu0 0.0
      %4066 = vmatpush1.msra.mxu0 0.0
      %4067 = vmatprep.subr.mxu0 0.0
      %4068 = vmatpush1.msra.mxu0 0.0
      %4069 = vmatprep.subr.mxu0 0.0
      %4070 = vmatpush1.msra.mxu0 0.0
      %4071 = vmatprep.subr.mxu0 0.0
      %4072 = vmatpush1.msra.mxu0 0.0
      %4073 = vmatprep.subr.mxu0 0.0
      %4074 = vmatpush1.msra.mxu0 0.0
      %4075 = vmatprep.subr.mxu0 0.0
      %4076 = vmatpush1.msra.mxu0 0.0
      %4077 = vmatprep.subr.mxu0 0.0
      %4078 = vmatpush1.msra.mxu0 0.0
      %4079 = vmatprep.subr.mxu0 0.0
      %4080 = vmatpush1.msra.mxu0 0.0
      %4081 = vmatprep.subr.mxu0 0.0
      %4082 = vmatpush1.msra.mxu0 0.0
      %4083 = vmatprep.subr.mxu0 0.0
      %4084 = vmatpush1.msra.mxu0 0.0
      %4085 = vmatprep.subr.mxu0 0.0
      %4086 = vmatpush1.msra.mxu0 0.0
      %4087 = vmatprep.subr.mxu0 0.0
      %4088 = vmatpush1.msra.mxu0 0.0
      %4089 = vmatprep.subr.mxu0 0.0
      %4090 = vmatpush1.msra.mxu0 0.0
      %4091 = vmatprep.subr.mxu0 0.0
      %4092 = vmatpush1.msra.mxu0 0.0
      %4093 = vmatprep.subr.mxu0 0.0
      %4094 = vmatpush1.msra.mxu0 0.0
      %4095 = vmatprep.subr.mxu0 0.0
      %4096 = vmatpush1.msra.mxu0 0.0
      %4097 = vmatprep.subr.mxu0 0.0
      %4098 = vmatpush1.msra.mxu0 0.0
      %4099 = vmatprep.subr.mxu0 0.0
      %4100 = vmatpush1.msra.mxu0 0.0
      %4101 = vmatprep.subr.mxu0 0.0
      %4102 = vmatpush1.msra.mxu0 0.0
      %4103 = vmatprep.subr.mxu0 0.0
      %4104 = vmatpush1.msra.mxu0 0.0
      %4105 = vmatprep.subr.mxu0 0.0
      %4106 = vmatpush1.msra.mxu0 0.0
      %4107 = vmatprep.mubr.f32.mxu0 0.0
      %4108 = vmatmul.mubr.f32.gmra.mrb[0].mxu0 %v3948
      %v4109 = vpop.f32.mrb[0].mxu0
      %v4110 = vadd.f32 %v1049, %v4109
      %v4111 = vpop.f32.mrb[0].mxu0
      %4112 = vmatprep.mubr.f32.mxu0 0.0
      %4113 = vmatmul.mubr.f32.gmra.mrb[0].mxu0 %v3951
      %v4114 = vpop.f32.mrb[0].mxu0
      %v4115 = vadd.f32 %v1049, %v4114
      %v4116 = vpop.f32.mrb[0].mxu0
      %4117 = vmatprep.mubr.f32.mxu0 0.0
      %4118 = vmatmul.mubr.f32.gmra.mrb[0].mxu0 %v3954
      %v4119 = vpop.f32.mrb[0].mxu0
      %v4120 = vadd.f32 %v1049, %v4119
      %v4121 = vpop.f32.mrb[0].mxu0
      %4122 = vmatprep.mubr.f32.mxu0 0.0
      %4123 = vmatmul.mubr.f32.gmra.mrb[0].mxu0 %v3957
      %v4124 = vpop.f32.mrb[0].mxu0
      %v4125 = vadd.f32 %v1049, %v4124
      %v4126 = vpop.f32.mrb[0].mxu0
      %4127 = vmatprep.mubr.f32.mxu0 0.0
      %4128 = vmatmul.mubr.f32.gmra.mrb[0].mxu0 %v3960
      %v4129 = vpop.f32.mrb[0].mxu0
      %v4130 = vadd.f32 %v1049, %v4129
      %v4131 = vpop.f32.mrb[0].mxu0
      %4132 = vmatprep.mubr.f32.mxu0 0.0
      %4133 = vmatmul.mubr.f32.gmra.mrb[0].mxu0 %v3963
      %v4134 = vpop.f32.mrb[0].mxu0
      %v4135 = vadd.f32 %v1049, %v4134
      %v4136 = vpop.f32.mrb[0].mxu0
      %4137 = vmatprep.mubr.f32.mxu0 0.0
      %4138 = vmatmul.mubr.f32.gmra.mrb[0].mxu0 %v3966
      %v4139 = vpop.f32.mrb[0].mxu0
      %v4140 = vadd.f32 %v1049, %v4139
      %v4141 = vpop.f32.mrb[0].mxu0
      %4142 = vmatprep.mubr.f32.mxu0 0.0
      %4143 = vmatmul.mubr.f32.gmra.mrb[0].mxu0 %v3969
      %v4144 = vpop.f32.mrb[0].mxu0
      %v4145 = vadd.f32 %v1049, %v4144
      %v4146 = vpop.f32.mrb[0].mxu0
      %4147 = vmatprep.mubr.f32.mxu0 0.0
      %4148 = vmatmul.mubr.f32.gmra.mrb[0].mxu0 %v3972
      %v4149 = vpop.f32.mrb[0].mxu0
      %v4150 = vadd.f32 %v1049, %v4149
      %v4151 = vpop.f32.mrb[0].mxu0
      %4152 = vmatprep.mubr.f32.mxu0 0.0
      %4153 = vmatmul.mubr.f32.gmra.mrb[0].mxu0 %v3975
      %v4154 = vpop.f32.mrb[0].mxu0
      %v4155 = vadd.f32 %v1049, %v4154
      %v4156 = vpop.f32.mrb[0].mxu0
      %4157 = vmatprep.mubr.f32.mxu0 0.0
      %4158 = vmatmul.mubr.f32.gmra.mrb[0].mxu0 %v3978
      %v4159 = vpop.f32.mrb[0].mxu0
      %v4160 = vadd.f32 %v1049, %v4159
      %v4161 = vpop.f32.mrb[0].mxu0
      %4162 = vmatprep.mubr.f32.mxu0 0.0
      %4163 = vmatmul.mubr.f32.gmra.mrb[0].mxu0 %v3981
      %v4164 = vpop.f32.mrb[0].mxu0
      %v4165 = vadd.f32 %v1049, %v4164
      %v4166 = vpop.f32.mrb[0].mxu0
      %4167 = vmatprep.mubr.f32.mxu0 0.0
      %4168 = vmatmul.mubr.f32.gmra.mrb[0].mxu0 %v3984
      %v4169 = vpop.f32.mrb[0].mxu0
      %v4170 = vadd.f32 %v1049, %v4169
      %v4171 = vpop.f32.mrb[0].mxu0
      %4172 = vmatprep.mubr.f32.mxu0 0.0
      %4173 = vmatmul.mubr.f32.gmra.mrb[0].mxu0 %v3987
      %v4174 = vpop.f32.mrb[0].mxu0
      %v4175 = vadd.f32 %v1049, %v4174
      %v4176 = vpop.f32.mrb[0].mxu0
      %4177 = vmatprep.mubr.f32.mxu0 0.0
      %4178 = vmatmul.mubr.f32.gmra.mrb[0].mxu0 %v3990
      %v4179 = vpop.f32.mrb[0].mxu0
      %v4180 = vadd.f32 %v1049, %v4179
      %v4181 = vpop.f32.mrb[0].mxu0
      %4182 = vmatprep.mubr.f32.mxu0 0.0
      %4183 = vmatmul.mubr.f32.gmra.mrb[0].mxu0 %v3993
      %v4184 = vpop.f32.mrb[0].mxu0
      %v4185 = vadd.f32 %v1049, %v4184
      %v4186 = vpop.f32.mrb[0].mxu0
      %4187 = vmatprep.mubr.f32.mxu0 0.0
      %4188 = vmatmul.mubr.f32.gmra.mrb[0].mxu0 %v3996
      %v4189 = vpop.f32.mrb[0].mxu0
      %v4190 = vadd.f32 %v1049, %v4189
      %v4191 = vpop.f32.mrb[0].mxu0
      %4192 = vmatprep.mubr.f32.mxu0 0.0
      %4193 = vmatmul.mubr.f32.gmra.mrb[0].mxu0 %v3999
      %v4194 = vpop.f32.mrb[0].mxu0
      %v4195 = vadd.f32 %v1049, %v4194
      %v4196 = vpop.f32.mrb[0].mxu0
      %4197 = vmatprep.mubr.f32.mxu0 0.0
      %4198 = vmatmul.mubr.f32.gmra.mrb[0].mxu0 %v4002
      %v4199 = vpop.f32.mrb[0].mxu0
      %v4200 = vadd.f32 %v1049, %v4199
      %v4201 = vpop.f32.mrb[0].mxu0
      %4202 = vmatprep.mubr.f32.mxu0 0.0
      %4203 = vmatmul.mubr.f32.gmra.mrb[0].mxu0 %v4005
      %v4204 = vpop.f32.mrb[0].mxu0
      %v4205 = vadd.f32 %v1049, %v4204
      %v4206 = vpop.f32.mrb[0].mxu0
      %4207 = vmatprep.mubr.f32.mxu0 0.0
      %4208 = vmatmul.mubr.f32.gmra.mrb[0].mxu0 %v4008
      %v4209 = vpop.f32.mrb[0].mxu0
      %v4210 = vadd.f32 %v1049, %v4209
      %v4211 = vpop.f32.mrb[0].mxu0
      %4212 = vmatprep.mubr.f32.mxu0 0.0
      %4213 = vmatmul.mubr.f32.gmra.mrb[0].mxu0 %v4011
      %v4214 = vpop.f32.mrb[0].mxu0
      %v4215 = vadd.f32 %v1049, %v4214
      %v4216 = vpop.f32.mrb[0].mxu0
      %4217 = vmatprep.mubr.f32.mxu0 0.0
      %4218 = vmatmul.mubr.f32.gmra.mrb[0].mxu0 %v4014
      %v4219 = vpop.f32.mrb[0].mxu0
      %v4220 = vadd.f32 %v1049, %v4219
      %v4221 = vpop.f32.mrb[0].mxu0
      %4222 = vmatprep.mubr.f32.mxu0 0.0
      %4223 = vmatmul.mubr.f32.gmra.mrb[0].mxu0 %v4017
      %v4224 = vpop.f32.mrb[0].mxu0
      %v4225 = vadd.f32 %v1049, %v4224
      %v4226 = vpop.f32.mrb[0].mxu0
      %4227 = vmatprep.mubr.f32.mxu0 0.0
      %4228 = vmatmul.mubr.f32.gmra.mrb[0].mxu0 %v4020
      %v4229 = vpop.f32.mrb[0].mxu0
      %v4230 = vadd.f32 %v1049, %v4229
      %v4231 = vpop.f32.mrb[0].mxu0
      %4232 = vmatprep.mubr.f32.mxu0 0.0
      %4233 = vmatmul.mubr.f32.gmra.mrb[0].mxu0 %v4023
      %v4234 = vpop.f32.mrb[0].mxu0
      %v4235 = vadd.f32 %v1049, %v4234
      %v4236 = vpop.f32.mrb[0].mxu0
      %4237 = vmatprep.mubr.f32.mxu0 0.0
      %4238 = vmatmul.mubr.f32.gmra.mrb[0].mxu0 %v4026
      %v4239 = vpop.f32.mrb[0].mxu0
      %v4240 = vadd.f32 %v1049, %v4239
      %v4241 = vpop.f32.mrb[0].mxu0
      %4242 = vmatprep.mubr.f32.mxu0 0.0
      %4243 = vmatmul.mubr.f32.gmra.mrb[0].mxu0 %v4029
      %v4244 = vpop.f32.mrb[0].mxu0
      %v4245 = vadd.f32 %v1049, %v4244
      %v4246 = vpop.f32.mrb[0].mxu0
      %4247 = vmatprep.mubr.f32.mxu0 0.0
      %4248 = vmatmul.mubr.f32.gmra.mrb[0].mxu0 %v4032
      %v4249 = vpop.f32.mrb[0].mxu0
      %v4250 = vadd.f32 %v1049, %v4249
      %v4251 = vpop.f32.mrb[0].mxu0
      %4252 = vmatprep.mubr.f32.mxu0 0.0
      %4253 = vmatmul.mubr.f32.gmra.mrb[0].mxu0 %v4035
      %v4254 = vpop.f32.mrb[0].mxu0
      %v4255 = vadd.f32 %v1049, %v4254
      %v4256 = vpop.f32.mrb[0].mxu0
      %4257 = vmatprep.mubr.f32.mxu0 0.0
      %4258 = vmatmul.mubr.f32.gmra.mrb[0].mxu0 %v4038
      %v4259 = vpop.f32.mrb[0].mxu0
      %v4260 = vadd.f32 %v1049, %v4259
      %v4261 = vpop.f32.mrb[0].mxu0
      %4262 = vmatprep.mubr.f32.mxu0 0.0
      %4263 = vmatmul.mubr.f32.gmra.mrb[0].mxu0 %v4041
      %v4264 = vpop.f32.mrb[0].mxu0
      %v4265 = vadd.f32 %v1049, %v4264
      %v4266 = vpop.f32.mrb[0].mxu0
      %4267 = vdwg.mxu0
      %s4268 = scalar_lea.vmem %s318, 768
      %4269 = vst.msk [vmem:[%s4268] sm:$0xff] %vm368, %v4110
      %4270 = vst.msk [vmem:[%s4268 + $0x8] sm:$0xff] %vm368, %v4115
      %4271 = vst.msk [vmem:[%s4268 + $0x10] sm:$0xff] %vm368, %v4120
      %4272 = vst.msk [vmem:[%s4268 + $0x18] sm:$0xff] %vm368, %v4125
      %4273 = vst.msk [vmem:[%s4268 + $0x20] sm:$0xff] %vm368, %v4130
      %4274 = vst.msk [vmem:[%s4268 + $0x28] sm:$0xff] %vm368, %v4135
      %4275 = vst.msk [vmem:[%s4268 + $0x30] sm:$0xff] %vm368, %v4140
      %4276 = vst.msk [vmem:[%s4268 + $0x38] sm:$0xff] %vm368, %v4145
      %4277 = vst.msk [vmem:[%s4268 + $0x40] sm:$0xff] %vm368, %v4150
      %4278 = vst.msk [vmem:[%s4268 + $0x48] sm:$0xff] %vm368, %v4155
      %4279 = vst.msk [vmem:[%s4268 + $0x50] sm:$0xff] %vm368, %v4160
      %4280 = vst.msk [vmem:[%s4268 + $0x58] sm:$0xff] %vm368, %v4165
      %4281 = vst.msk [vmem:[%s4268 + $0x60] sm:$0xff] %vm368, %v4170
      %4282 = vst.msk [vmem:[%s4268 + $0x68] sm:$0xff] %vm368, %v4175
      %4283 = vst.msk [vmem:[%s4268 + $0x70] sm:$0xff] %vm368, %v4180
      %4284 = vst.msk [vmem:[%s4268 + $0x78] sm:$0xff] %vm368, %v4185
      %4285 = vst.msk [vmem:[%s4268 + $0x80] sm:$0xff] %vm368, %v4190
      %4286 = vst.msk [vmem:[%s4268 + $0x88] sm:$0xff] %vm368, %v4195
      %4287 = vst.msk [vmem:[%s4268 + $0x90] sm:$0xff] %vm368, %v4200
      %4288 = vst.msk [vmem:[%s4268 + $0x98] sm:$0xff] %vm368, %v4205
      %4289 = vst.msk [vmem:[%s4268 + $0xa0] sm:$0xff] %vm368, %v4210
      %4290 = vst.msk [vmem:[%s4268 + $0xa8] sm:$0xff] %vm368, %v4215
      %4291 = vst.msk [vmem:[%s4268 + $0xb0] sm:$0xff] %vm368, %v4220
      %4292 = vst.msk [vmem:[%s4268 + $0xb8] sm:$0xff] %vm368, %v4225
      %4293 = vst.msk [vmem:[%s4268 + $0xc0] sm:$0xff] %vm368, %v4230
      %4294 = vst.msk [vmem:[%s4268 + $0xc8] sm:$0xff] %vm368, %v4235
      %4295 = vst.msk [vmem:[%s4268 + $0xd0] sm:$0xff] %vm368, %v4240
      %4296 = vst.msk [vmem:[%s4268 + $0xd8] sm:$0xff] %vm368, %v4245
      %4297 = vst.msk [vmem:[%s4268 + $0xe0] sm:$0xff] %vm368, %v4250
      %4298 = vst.msk [vmem:[%s4268 + $0xe8] sm:$0xff] %vm368, %v4255
      %4299 = vst.msk [vmem:[%s4268 + $0xf0] sm:$0xff] %vm368, %v4260
      %4300 = vst.msk [vmem:[%s4268 + $0xf8] sm:$0xff] %vm368, %v4265
      %s4301 = smul.u32 16, %s20
      %p4302 = scmp.lt.s32.totalorder %s19, 1
      %s4303 = scalar_select %p4302, %s19, 1
      %p4304 = scmp.lt.s32.totalorder %s4301, 15
      %s4305 = scalar_select %p4304, %s4301, 15
      %s4306 = smul.addr %s4305, 2
      %s4307 = smul.addr %s4303, 128
      %s4308 = sadd.s32 %s4306, %s4307
      %s4309 = smul.addr %s4308, 8
      %s4310 = scalar_lea.vmem %s4, %s4309
      // Predicated region
      $region37: #{upsample.1} parent=35 // pred_check
        %p4311 = pneg %p149
      $region38: #{upsample.1} parent=35 // pred_check_branch
        %4313 = sbr.rel (%p4311) target = $region40
      $region39: #{upsample.1} parent=35 // pred_region
        %s4314 = smul.u32 16, %s20
      $region40: #{upsample.1} parent=35 // pred_fallthru
        _
    $region36: #{upsample.1} parent=5 // pred_fallthru
      _
    %p4315 = scmp.le.s32.totalorder 2, %s10
    // Predicated region
    $region41: #{upsample.1} parent=5 // pred_check
      %p4316 = pneg %p4315
    $region42: #{upsample.1} parent=5 // pred_check_branch
      %4318 = sbr.rel (%p4316) target = $region44
    $region43: #{upsample.1} parent=5 // pred_region
      %s4319 = ssub.s32 %s10, 2
      // Predicated region
      $region45: #{upsample.1} parent=43 // pred_check
        %p4320 = pneg %p155
      $region46: #{upsample.1} parent=43 // pred_check_branch
        %4322 = sbr.rel (%p4320) target = $region48
      $region47: #{upsample.1} parent=43 // pred_region
        %s4323 = smul.u32 16, %s22
        %p4324 = scmp.lt.s32.totalorder %s21, 1
        %s4325 = scalar_select %p4324, %s21, 1
        %p4326 = scmp.lt.s32.totalorder %s4323, 15
        %s4327 = scalar_select %p4326, %s4323, 15
        %s4328 = smul.addr %s4327, 2
        %s4329 = smul.addr %s4325, 128
        %s4330 = sadd.s32 %s4328, %s4329
        %s4331 = smul.addr %s4330, 8
        %s4332 = scalar_lea.vmem %s4, %s4331
      $region48: #{upsample.1} parent=43 // pred_fallthru
        _
    $region44: #{upsample.1} parent=5 // pred_fallthru
      _
  $region6: #{upsample.1} parent=0 // loop_footer
    %s14 = sadd.s32 1, %s10
  $region7: #{upsample.1} parent=0 // loop_footer_branch
    %9 = sbr.rel target = $region3
  $region8: #{upsample.1} parent=0 // loop_exit
    _

</llo_original>
